<compile_context>
chip_gen: v5e
topology: v5e:2x2
jax: 0.10.0
libtpu: 0.0.40
codegen_flags: <defaults>
</compile_context>

<pallas_src>
import functools

import jax
import jax.numpy as jnp
from jax.experimental import pallas as pl
from jax.experimental.pallas import tpu as pltpu


def _conv_bn_relu_pool_kernel(x_ref, w_ref, bias_ref, o_ref, xpad_ref, *,
                              K, pad, band_h, out_w, pool, pool_k, cin_split):
    """One (batch, row-band) grid step.

    x_ref:    (1, H, W, Cin)    UNPADDED bf16 image; block index constant across the
                                band axis -> fetched once per batch element.
    w_ref:    (K*K*Cin, Cpad)   bf16 im2col weights with BN scale folded in.
    bias_ref: (1, Cpad)         folded BN bias (incl. conv bias), f32.
    o_ref:    (1, band_h[/pk], out_w[/pk], Cpad)  bf16 output band.
    xpad_ref: (Hp, Wp, Cin)     VMEM scratch holding the zero-padded image.
    """
    H, W, Cin = x_ref.shape[1], x_ref.shape[2], x_ref.shape[3]
    Cpad = w_ref.shape[1]
    b = pl.program_id(1)

    # Fused zero-pad halo: build the padded image in VMEM once per batch element.
    # The band axis is "arbitrary" (sequential), so b == 0 always runs first.
    @pl.when(b == 0)
    def _():
        xpad_ref[...] = jnp.zeros_like(xpad_ref)
        xpad_ref[pl.ds(pad, H), pl.ds(pad, W), :] = x_ref[0]

    row0 = pl.multiple_of(b * band_h, band_h)

    if cin_split:
        # Cin >= 128: K*K accumulating MXU dots. Avoids materializing the
        # (rows, K*K*Cin) patches buffer and its cross-lane concatenate; each
        # partial dot still has contraction depth Cin >= 128.
        acc = jnp.zeros((band_h * out_w, Cpad), jnp.float32)
        for kh in range(K):
            for kw in range(K):
                xs = xpad_ref[pl.ds(row0 + kh, band_h), pl.ds(kw, out_w), :]
                xs = xs.reshape(band_h * out_w, Cin)
                kk = kh * K + kw
                acc += jnp.dot(xs, w_ref[pl.ds(kk * Cin, Cin), :],
                               preferred_element_type=jnp.float32)
    else:
        # Small Cin: concatenate the K*K shifted slabs along channels and do ONE
        # deep bf16 MXU matmul against the im2col weights (f32 accumulation).
        slabs = []
        for kh in range(K):
            for kw in range(K):
                xs = xpad_ref[pl.ds(row0 + kh, band_h), pl.ds(kw, out_w), :]
                slabs.append(xs.reshape(band_h * out_w, Cin))
        patches = jnp.concatenate(slabs, axis=-1)            # (rows, K*K*Cin)
        acc = jnp.dot(patches, w_ref[...],
                      preferred_element_type=jnp.float32)    # (rows, Cpad) f32

    # BN scale already folded into the weights; only bias + ReLU here (lane-dense).
    y = jnp.maximum(acc + bias_ref[0], 0.0)
    y = y.reshape(band_h, out_w, Cpad)

    if pool:
        tho = band_h // pool_k
        wo = out_w // pool_k
        # Pool in the lane-dense layout (Cpad untouched): row reduce is a pure VPU
        # max over leading slices, column reduce is a short sublane reduce.
        y = y.reshape(tho, pool_k, out_w, Cpad).max(axis=1)
        y = y.reshape(tho, wo, pool_k, Cpad).max(axis=2)

    o_ref[0, :, :, :] = y.astype(o_ref.dtype)


def _pick_band_height(Hc, Wc, Cin, Cpad, K, pooling, pool_k,
                      target_rows=1024, band_budget_bytes=8 << 20):
    """Row-band height: divides Hc, multiple of pool_k (if pooling), aims for at
    least ~`target_rows` matmul rows (fills the 256-wide MXU, amortizes the ~0.35us
    per-step overhead) while keeping the live band footprint under a VMEM budget."""
    unit = pool_k if pooling else 1
    if Hc % unit != 0:
        return Hc  # pooling with non-divisible H is asserted against in glue

    def live_bytes(th):
        rows = th * Wc
        # f32 accumulator + bf16 im2col patches + bf16 pre-store band
        return rows * (Cpad * 4 + K * K * Cin * 2 + Cpad * 2)

    cands = [th for th in range(unit, Hc + 1, unit) if Hc % th == 0]
    best = cands[0]
    for th in cands:
        if live_bytes(th) <= band_budget_bytes:
            best = th
            if th * Wc >= target_rows:
                break
    return best


def conv_block(x_nchw, weight_oihw, conv_bias, bn_gamma, bn_beta, bn_mean, bn_var,
               *, stride=1, padding=1, pooling=False, pooling_kernel=4, eps=1e-5,
               out_dtype=jnp.bfloat16):
    assert stride == 1, "kernel implements the default stride=1 path"
    N, Cin, H, W = x_nchw.shape
    Cout, _, K, _ = weight_oihw.shape

    Hc = H + 2 * padding - K + 1
    Wc = W + 2 * padding - K + 1
    Hp, Wp = H + 2 * padding, W + 2 * padding

    LANE = 128
    Cpad = ((Cout + LANE - 1) // LANE) * LANE      # lane-dense output channels

    # ---- glue (plain JAX): layout + bf16 cast + BN folding + weight im2col ----
    x_nhwc = jnp.transpose(x_nchw, (0, 2, 3, 1)).astype(jnp.bfloat16)   # unpadded

    scale = bn_gamma / jnp.sqrt(bn_var + eps)                           # (Cout,)
    bias = (bn_beta + scale * (conv_bias - bn_mean)).astype(jnp.float32)
    # Fold the BN scale into the weights BEFORE the bf16 cast.
    w_hwio = jnp.transpose(weight_oihw, (2, 3, 1, 0)) * scale           # (K,K,Cin,Cout)
    w_im2col = w_hwio.astype(jnp.bfloat16).reshape(K * K * Cin, Cout)
    w_im2col = jnp.pad(w_im2col, ((0, 0), (0, Cpad - Cout)))            # (K*K*Cin,Cpad)
    bias = jnp.pad(bias, (0, Cpad - Cout)).reshape(1, Cpad)

    band_h = _pick_band_height(Hc, Wc, Cin, Cpad, K, pooling, pooling_kernel)
    n_bands = Hc // band_h

    if pooling:
        assert Hc % pooling_kernel == 0 and Wc % pooling_kernel == 0
        assert band_h % pooling_kernel == 0
        Ho, Wo = Hc // pooling_kernel, Wc // pooling_kernel
        out_band_h = band_h // pooling_kernel
    else:
        Ho, Wo = Hc, Wc
        out_band_h = band_h

    kernel = functools.partial(
        _conv_bn_relu_pool_kernel, K=K, pad=padding, band_h=band_h, out_w=Wc,
        pool=pooling, pool_k=pooling_kernel, cin_split=(Cin >= 128))

    # VMEM footprint estimate -> explicit limit (above v5e/v6e scoped defaults, capped
    # under v7x's 64 MiB physical VMEM with headroom).
    est = (2 * H * W * Cin * 2                     # x block (double-buffered)
           + Hp * Wp * Cin * 2                     # padded-image scratch
           + 2 * K * K * Cin * Cpad * 2            # im2col weights (double-buffered)
           + 2 * Cpad * 4                          # bias
           + 2 * out_band_h * Wo * Cpad * 2        # output band (double-buffered)
           + band_h * Wc * (Cpad * 4 + K * K * Cin * 2 + Cpad * 2))  # live compute
    vmem_limit = int(min(max(2 * est, 32 << 20), 48 << 20))

    out_nhwc = pl.pallas_call(
        kernel,
        out_shape=jax.ShapeDtypeStruct((N, Ho, Wo, Cpad), out_dtype),
        grid_spec=pltpu.PrefetchScalarGridSpec(
            num_scalar_prefetch=0,
            grid=(N, n_bands),
            in_specs=[
                # Unpadded image for batch n; block index constant across the band
                # axis -> one HBM fetch per image, next image prefetched under the
                # last bands' compute.
                pl.BlockSpec((1, H, W, Cin), lambda n, b: (n, 0, 0, 0)),
                # Grid-resident im2col weights / folded BN bias.
                pl.BlockSpec((K * K * Cin, Cpad), lambda n, b: (0, 0)),
                pl.BlockSpec((1, Cpad), lambda n, b: (0, 0)),
            ],
            out_specs=pl.BlockSpec((1, out_band_h, Wo, Cpad),
                                   lambda n, b: (n, b, 0, 0)),
            scratch_shapes=[pltpu.VMEM((Hp, Wp, Cin), jnp.bfloat16)],
        ),
        compiler_params=pltpu.CompilerParams(
            # Band axis must be sequential (halo scratch built at b==0); on v7x this
            # also forces the megacore split onto the batch axis, so each core fetches
            # each image exactly once.
            dimension_semantics=("parallel", "arbitrary"),
            vmem_limit_bytes=vmem_limit,
        ),
    )(x_nhwc, w_im2col, bias)

    # Back to the module's NCHW layout (kept bf16; see chaining TODO at top).
    return jnp.transpose(out_nhwc[..., :Cout], (0, 3, 1, 2))


def _reference(x_nchw, weight_oihw, conv_bias, bn_gamma, bn_beta, bn_mean, bn_var,
               *, padding=1, pooling=False, pooling_kernel=4, eps=1e-5):
    """Pure-JAX reference (eval-mode BN) using the same folded/bf16-quantized weights,
    f32 accumulation, so the kernel's only extra error is the bf16 output cast."""
    scale = bn_gamma / jnp.sqrt(bn_var + eps)
    bias = bn_beta + scale * (conv_bias - bn_mean)
    wq = (weight_oihw * scale[:, None, None, None]).astype(jnp.bfloat16)
    wq = wq.astype(jnp.float32)
    xq = x_nchw.astype(jnp.bfloat16).astype(jnp.float32)
    y = jax.lax.conv_general_dilated(
        xq, wq, window_strides=(1, 1),
        padding=[(padding, padding), (padding, padding)],
        dimension_numbers=("NCHW", "OIHW", "NCHW"))
    y = jnp.maximum(y + bias[None, :, None, None], 0.0)
    if pooling:
        y = jax.lax.reduce_window(
            y, -jnp.inf, jax.lax.max,
            window_dimensions=(1, 1, pooling_kernel, pooling_kernel),
            window_strides=(1, 1, pooling_kernel, pooling_kernel),
            padding="VALID")
    return y


if __name__ == "__main__":
    # Small shapes consistent with the module: batch=2, in_ch=4, out_ch=8, 16x16.
    N, Cin, Cout, H, W, K = 2, 4, 8, 16, 16, 3
    pool_k = 4

    key = jax.random.PRNGKey(0)
    kx, kw, kb, kg, kbe, km, kv = jax.random.split(key, 7)

    x = jax.random.normal(kx, (N, Cin, H, W), jnp.float32)
    weight = jax.random.normal(kw, (Cout, Cin, K, K), jnp.float32) * 0.1
    conv_bias = jax.random.normal(kb, (Cout,), jnp.float32) * 0.1
    bn_gamma = 1.0 + 0.1 * jax.random.normal(kg, (Cout,), jnp.float32)
    bn_beta = 0.1 * jax.random.normal(kbe, (Cout,), jnp.float32)
    bn_mean = 0.1 * jax.random.normal(km, (Cout,), jnp.float32)
    bn_var = jax.random.uniform(kv, (Cout,), jnp.float32, 0.5, 1.5)

    for pooling in (True, False):
        out = conv_block(x, weight, conv_bias, bn_gamma, bn_beta, bn_mean, bn_var,
                         stride=1, padding=1, pooling=pooling,
                         pooling_kernel=pool_k)
        out = jax.block_until_ready(out)

        ref = _reference(x, weight, conv_bias, bn_gamma, bn_beta, bn_mean, bn_var,
                         padding=1, pooling=pooling, pooling_kernel=pool_k)
        if pooling:
            assert out.shape == (N, Cout, H // pool_k, W // pool_k), out.shape
        else:
            assert out.shape == (N, Cout, H, W), out.shape
        err = float(jnp.max(jnp.abs(out.astype(jnp.float32) - ref)))
        assert err < 3e-2, err

    print("KERNEL_OK")
</pallas_src>

<mosaic_0001>
module attributes {stable_mosaic.version = 11 : i64} {
  func.func @_conv_bn_relu_pool_kernel(%arg0: i32, %arg1: i32, %arg2: memref<1x16x16x4xbf16, #tpu.memory_space<vmem>>, %arg3: memref<36x128xbf16, #tpu.memory_space<vmem>>, %arg4: memref<1x128xf32, #tpu.memory_space<vmem>>, %arg5: memref<1x4x4x128xbf16, #tpu.memory_space<vmem>>, %arg6: memref<18x18x4xbf16, #tpu.memory_space<vmem>>) attributes {dimension_semantics = [#tpu.dimension_semantics<parallel>, #tpu.dimension_semantics<arbitrary>], iteration_bounds = array<i64: 2, 1>, scalar_prefetch = 0 : i64, scratch_operands = 1 : i64, tpu.core_type = #tpu.core_type<tc>, window_params = [{transform_indices = @transform_0, window_bounds = array<i64: 1, 16, 16, 4>}, {pipeline_mode = #tpu.pipeline_mode<synchronous>, transform_indices = @transform_1, window_bounds = array<i64: 36, 128>}, {pipeline_mode = #tpu.pipeline_mode<synchronous>, transform_indices = @transform_2, window_bounds = array<i64: 1, 128>}, {transform_indices = @transform_3, window_bounds = array<i64: 1, 4, 4, 128>}]} {
    %c0_i32 = arith.constant 0 : i32
    %0 = arith.cmpi eq, %arg1, %c0_i32 : i32
    %1 = arith.extui %0 : i1 to i32
    %c0_i32_0 = arith.constant 0 : i32
    %2 = arith.cmpi ne, %1, %c0_i32_0 : i32
    scf.if %2 {
      %cst_34 = arith.constant 0.000000e+00 : bf16
      %60 = vector.broadcast %cst_34 : bf16 to vector<18x18x4xbf16>
      %c0_35 = arith.constant 0 : index
      %c0_36 = arith.constant 0 : index
      %c0_37 = arith.constant 0 : index
      %61 = vector.load %arg6[%c0_35, %c0_36, %c0_37] : memref<18x18x4xbf16, #tpu.memory_space<vmem>>, vector<18x18x4xbf16>
      tpu.vector_store %arg6[%c0_35, %c0_36, %c0_37], %60 {strides = array<i32>} : memref<18x18x4xbf16, #tpu.memory_space<vmem>>, vector<18x18x4xbf16>,
      %c0_38 = arith.constant 0 : index
      %c0_39 = arith.constant 0 : index
      %c0_40 = arith.constant 0 : index
      %c0_41 = arith.constant 0 : index
      %62 = vector.load %arg2[%c0_38, %c0_39, %c0_40, %c0_41] : memref<1x16x16x4xbf16, #tpu.memory_space<vmem>>, vector<1x16x16x4xbf16>
      %63 = vector.shape_cast %62 : vector<1x16x16x4xbf16> to vector<16x16x4xbf16>
      %c1_42 = arith.constant 1 : index
      %c1_43 = arith.constant 1 : index
      %c0_44 = arith.constant 0 : index
      %64 = vector.load %arg6[%c1_42, %c1_43, %c0_44] : memref<18x18x4xbf16, #tpu.memory_space<vmem>>, vector<16x16x4xbf16>
      tpu.vector_store %arg6[%c1_42, %c1_43, %c0_44], %63 {strides = array<i32>} : memref<18x18x4xbf16, #tpu.memory_space<vmem>>, vector<16x16x4xbf16>,
    } else {
    }
    %c16_i32 = arith.constant 16 : i32
    %3 = arith.muli %arg1, %c16_i32 : i32
    %4 = tpu.assume_multiple %3, 16 : i32
    %c0_i32_1 = arith.constant 0 : i32
    %5 = arith.addi %4, %c0_i32_1 : i32
    %6 = arith.index_cast %5 : i32 to index
    %c0 = arith.constant 0 : index
    %c0_2 = arith.constant 0 : index
    %7 = vector.load %arg6[%6, %c0, %c0_2] : memref<18x18x4xbf16, #tpu.memory_space<vmem>>, vector<16x16x4xbf16>
    %8 = vector.shape_cast %7 : vector<16x16x4xbf16> to vector<256x4xbf16>
    %c0_i32_3 = arith.constant 0 : i32
    %9 = arith.addi %4, %c0_i32_3 : i32
    %10 = arith.index_cast %9 : i32 to index
    %c1 = arith.constant 1 : index
    %c0_4 = arith.constant 0 : index
    %11 = vector.load %arg6[%10, %c1, %c0_4] : memref<18x18x4xbf16, #tpu.memory_space<vmem>>, vector<16x16x4xbf16>
    %12 = vector.shape_cast %11 : vector<16x16x4xbf16> to vector<256x4xbf16>
    %c0_i32_5 = arith.constant 0 : i32
    %13 = arith.addi %4, %c0_i32_5 : i32
    %14 = arith.index_cast %13 : i32 to index
    %c2 = arith.constant 2 : index
    %c0_6 = arith.constant 0 : index
    %15 = vector.load %arg6[%14, %c2, %c0_6] : memref<18x18x4xbf16, #tpu.memory_space<vmem>>, vector<16x16x4xbf16>
    %16 = vector.shape_cast %15 : vector<16x16x4xbf16> to vector<256x4xbf16>
    %c1_i32 = arith.constant 1 : i32
    %17 = arith.addi %4, %c1_i32 : i32
    %18 = arith.index_cast %17 : i32 to index
    %c0_7 = arith.constant 0 : index
    %c0_8 = arith.constant 0 : index
    %19 = vector.load %arg6[%18, %c0_7, %c0_8] : memref<18x18x4xbf16, #tpu.memory_space<vmem>>, vector<16x16x4xbf16>
    %20 = vector.shape_cast %19 : vector<16x16x4xbf16> to vector<256x4xbf16>
    %c1_i32_9 = arith.constant 1 : i32
    %21 = arith.addi %4, %c1_i32_9 : i32
    %22 = arith.index_cast %21 : i32 to index
    %c1_10 = arith.constant 1 : index
    %c0_11 = arith.constant 0 : index
    %23 = vector.load %arg6[%22, %c1_10, %c0_11] : memref<18x18x4xbf16, #tpu.memory_space<vmem>>, vector<16x16x4xbf16>
    %24 = vector.shape_cast %23 : vector<16x16x4xbf16> to vector<256x4xbf16>
    %c1_i32_12 = arith.constant 1 : i32
    %25 = arith.addi %4, %c1_i32_12 : i32
    %26 = arith.index_cast %25 : i32 to index
    %c2_13 = arith.constant 2 : index
    %c0_14 = arith.constant 0 : index
    %27 = vector.load %arg6[%26, %c2_13, %c0_14] : memref<18x18x4xbf16, #tpu.memory_space<vmem>>, vector<16x16x4xbf16>
    %28 = vector.shape_cast %27 : vector<16x16x4xbf16> to vector<256x4xbf16>
    %c2_i32 = arith.constant 2 : i32
    %29 = arith.addi %4, %c2_i32 : i32
    %30 = arith.index_cast %29 : i32 to index
    %c0_15 = arith.constant 0 : index
    %c0_16 = arith.constant 0 : index
    %31 = vector.load %arg6[%30, %c0_15, %c0_16] : memref<18x18x4xbf16, #tpu.memory_space<vmem>>, vector<16x16x4xbf16>
    %32 = vector.shape_cast %31 : vector<16x16x4xbf16> to vector<256x4xbf16>
    %c2_i32_17 = arith.constant 2 : i32
    %33 = arith.addi %4, %c2_i32_17 : i32
    %34 = arith.index_cast %33 : i32 to index
    %c1_18 = arith.constant 1 : index
    %c0_19 = arith.constant 0 : index
    %35 = vector.load %arg6[%34, %c1_18, %c0_19] : memref<18x18x4xbf16, #tpu.memory_space<vmem>>, vector<16x16x4xbf16>
    %36 = vector.shape_cast %35 : vector<16x16x4xbf16> to vector<256x4xbf16>
    %c2_i32_20 = arith.constant 2 : i32
    %37 = arith.addi %4, %c2_i32_20 : i32
    %38 = arith.index_cast %37 : i32 to index
    %c2_21 = arith.constant 2 : index
    %c0_22 = arith.constant 0 : index
    %39 = vector.load %arg6[%38, %c2_21, %c0_22] : memref<18x18x4xbf16, #tpu.memory_space<vmem>>, vector<16x16x4xbf16>
    %40 = vector.shape_cast %39 : vector<16x16x4xbf16> to vector<256x4xbf16>
    %41 = tpu.concatenate %8, %12, %16, %20, %24, %28, %32, %36, %40 in 1 : vector<256x4xbf16>, vector<256x4xbf16>, vector<256x4xbf16>, vector<256x4xbf16>, vector<256x4xbf16>, vector<256x4xbf16>, vector<256x4xbf16>, vector<256x4xbf16>, vector<256x4xbf16> -> vector<256x36xbf16>
    %c0_23 = arith.constant 0 : index
    %c0_24 = arith.constant 0 : index
    %42 = vector.load %arg3[%c0_23, %c0_24] : memref<36x128xbf16, #tpu.memory_space<vmem>>, vector<36x128xbf16>
    %cst = arith.constant dense<0.000000e+00> : vector<256x128xf32>
    %43 = tpu.matmul %41, %42, %cst {dimension_numbers = #tpu.dot_dimension_numbers<[1], [0], [0], [1], [0, 0, 1, 1], [], []>} : vector<256x36xbf16>, vector<36x128xbf16>, vector<256x128xf32> -> vector<256x128xf32>
    %c0_25 = arith.constant 0 : index
    %c0_26 = arith.constant 0 : index
    %44 = vector.load %arg4[%c0_25, %c0_26] : memref<1x128xf32, #tpu.memory_space<vmem>>, vector<1x128xf32>
    %45 = vector.shape_cast %44 : vector<1x128xf32> to vector<128xf32>
    %46 = vector.shape_cast %45 : vector<128xf32> to vector<1x128xf32>
    %47 = vector.broadcast %46 : vector<1x128xf32> to vector<256x128xf32>
    %48 = arith.addf %43, %47 : vector<256x128xf32>
    %cst_27 = arith.constant 0.000000e+00 : f32
    %49 = vector.broadcast %cst_27 : f32 to vector<256x128xf32>
    %50 = arith.maximumf %48, %49 : vector<256x128xf32>
    %51 = vector.shape_cast %50 : vector<256x128xf32> to vector<16x16x128xf32>
    %52 = vector.shape_cast %51 : vector<16x16x128xf32> to vector<4x4x16x128xf32>
    %cst_28 = arith.constant dense<0xFF800000> : vector<4x16x128xf32>
    %53 = vector.multi_reduction <maximumf>, %52, %cst_28 [1] : vector<4x4x16x128xf32> to vector<4x16x128xf32>
    %54 = vector.shape_cast %53 : vector<4x16x128xf32> to vector<4x4x4x128xf32>
    %cst_29 = arith.constant dense<0xFF800000> : vector<4x4x128xf32>
    %55 = vector.multi_reduction <maximumf>, %54, %cst_29 [2] : vector<4x4x4x128xf32> to vector<4x4x128xf32>
    %56 = arith.truncf %55 : vector<4x4x128xf32> to vector<4x4x128xbf16>
    %c0_30 = arith.constant 0 : index
    %c0_31 = arith.constant 0 : index
    %c0_32 = arith.constant 0 : index
    %c0_33 = arith.constant 0 : index
    %57 = vector.load %arg5[%c0_30, %c0_31, %c0_32, %c0_33] : memref<1x4x4x128xbf16, #tpu.memory_space<vmem>>, vector<1x4x4x128xbf16>
    %58 = vector.shape_cast %57 : vector<1x4x4x128xbf16> to vector<4x4x128xbf16>
    %59 = vector.shape_cast %56 : vector<4x4x128xbf16> to vector<1x4x4x128xbf16>
    tpu.vector_store %arg5[%c0_30, %c0_31, %c0_32, %c0_33], %59 {strides = array<i32>} : memref<1x4x4x128xbf16, #tpu.memory_space<vmem>>, vector<1x4x4x128xbf16>,
    return
  }
  func.func @transform_0(%arg0: i32, %arg1: i32) -> (i32, i32, i32, i32) {
    %c0_i32 = arith.constant 0 : i32
    %c0_i32_0 = arith.constant 0 : i32
    %c0_i32_1 = arith.constant 0 : i32
    %c0_i32_2 = arith.constant 0 : i32
    return %arg0, %c0_i32, %c0_i32_0, %c0_i32_1 : i32, i32, i32, i32
  }
  func.func @transform_1(%arg0: i32, %arg1: i32) -> (i32, i32) {
    %c0_i32 = arith.constant 0 : i32
    %c0_i32_0 = arith.constant 0 : i32
    %c0_i32_1 = arith.constant 0 : i32
    return %c0_i32, %c0_i32_0 : i32, i32
  }
  func.func @transform_2(%arg0: i32, %arg1: i32) -> (i32, i32) {
    %c0_i32 = arith.constant 0 : i32
    %c0_i32_0 = arith.constant 0 : i32
    %c0_i32_1 = arith.constant 0 : i32
    return %c0_i32, %c0_i32_0 : i32, i32
  }
  func.func @transform_3(%arg0: i32, %arg1: i32) -> (i32, i32, i32, i32) {
    %c0_i32 = arith.constant 0 : i32
    %c0_i32_0 = arith.constant 0 : i32
    %c0_i32_1 = arith.constant 0 : i32
    return %arg0, %arg1, %c0_i32, %c0_i32_0 : i32, i32, i32, i32
  }
}

</mosaic_0001>

<llo_original>
// kernel: tpu_custom_call.1
$region0: #{tpu_custom_call.1}
  #allocation0 [shape = 'u32[]', space=smem, size = 0x4, offset = 0x4, fixed_abs, tag = 'smem constant byte address 0x4 - core index']
  #allocation1 [shape = 'u32[72,128]{1,0:T(1,128)}', space=vmem, size = 0x9000, scoped, tag = 'internal scratch']
  #allocation2 [shape = 'bf16[18,18,4]{2,1,0:T(8,128)(2,1)}', space=vmem, size = 0x1b000, scoped, tag = 'scratch operand']
  %s0 = inlined_call_operand.vmem [shape: bf16[2,16,16,4], index: 0, kind: input, shape index: {}]
  %s1 = inlined_call_operand.vmem [shape: bf16[36,128], index: 1, kind: input, shape index: {}]
  %s2 = inlined_call_operand.vmem [shape: f32[1,128], index: 2, kind: input, shape index: {}]
  %s3 = inlined_call_operand.hbm [shape: bf16[2,4,4,128], index: 3, kind: output, shape index: {}]
  %s4 = sld [smem:[#allocation0]]
  $region49: #{tpu_custom_call.1} parent=0
    _
  %s6 = ssub.s32 1, %s4
  %s7 = scalar_select 0, %s6, %s4
  $region1: #{tpu_custom_call.1} parent=0
    #allocation3 [shape = 'u8[8192]{0}', space=vmem, size = 0x2000, scoped, tag = 'output window, operand 0']
    #allocation4 [shape = 's32[2]{0}', space=sflag, size = 0x8, scoped, tag = 'scoped memory for tpu_custom_call.1']
    %8 = vsyncpa [#allocation4], 0
    %s9 = scalar_lea.sflag [#allocation4], 1
    %10 = vsyncpa %s9, 0
    loop: start=0, step=1, limit=4
    $region2: #{tpu_custom_call.1} parent=1 // loop_pre_header
      _
    $region3: #{tpu_custom_call.1} parent=1 // loop_header
      %s12 = sphi 0, %s16
      %p13 = scmp.ge.s32.totalorder %s12, 4
      %s19 = sphi 0, %s31
      %s20 = sphi 0, %s27
      %s21 = sphi 0, %s19
      %s22 = sphi 0, %s20
      %s23 = sphi 0, %s21
      %s24 = sphi 0, %s22
      %s34 = sphi 0, %s36
      %s37 = sphi 0, %s34
      %s38 = sphi 0, %s37
      %s54 = sphi 0, %s38
      %s58 = sphi 0, %s58
      %s60 = sphi 0, %s58
      %s61 = sphi 0, %s60
      %s75 = sphi 0, %s61
      %s79 = sphi 0, %s79
      %s81 = sphi 0, %s79
      %s82 = sphi 0, %s81
      %s96 = sphi 0, %s82
      %s104 = sphi 0, %s106
      %s107 = sphi 0, %s104
      %s108 = sphi 0, %s107
      %s124 = sphi 0, %s108
    $region4: #{tpu_custom_call.1} parent=1 // loop_header_branch
      %15 = sbr.rel (%p13) target = $region8
    $region5: #{tpu_custom_call.1} parent=1 // loop_body
      %s17 = ssub.s32 %s12, 1
      %s18 = ssub.s32 %s12, 2
      %s25 = sadd.s32 1, %s20
      %p26 = scmp.ge.s32.totalorder %s25, 1
      %s27 = scalar_select %p26, 0, %s25
      %s28 = sadd.s32 1, %s19
      %s29 = scalar_select %p26, %s28, %s19
      %p30 = scmp.ge.s32.totalorder %s29, 2
      %s31 = scalar_select %p30, 0, %s29
      %s32 = ssub.s32 %s19, %s31
      %p33 = scmp.eq.s32.totalorder %s32, 0
      %s35 = sadd.s32 %s34, 1
      %s36 = scalar_select %p33, %s34, %s35
      %p39 = pneg %p33
      %p40 = scmp.eq.s32.totalorder %s12, 1
      %p41 = por %p39, %p40
      %p42 = scmp.ne.s32.totalorder %s34, %s37
      %p43 = scmp.eq.s32.totalorder %s12, 0
      %p44 = por %p42, %p43
      %p45 = scmp.ne.s32.totalorder %s34, %s37
      %p46 = scmp.eq.s32.totalorder %s17, 1
      %p47 = por %p45, %p46
      %p48 = scmp.ne.s32.totalorder %s37, %s38
      %p49 = scmp.eq.s32.totalorder %s17, 0
      %p50 = por %p48, %p49
      %p51 = scmp.ne.s32.totalorder %s37, %s38
      %p52 = scmp.eq.s32.totalorder %s18, 1
      %p53 = por %p51, %p52
      %p55 = scmp.ne.s32.totalorder %s38, %s54
      %p56 = scmp.eq.s32.totalorder %s18, 0
      %p57 = por %p55, %p56
      %s59 = sadd.s32 %s58, 1
      %p62 = scmp.eq.s32.totalorder %s12, 1
      %p63 = scmp.ne.s32.totalorder %s58, %s60
      %p64 = scmp.eq.s32.totalorder %s12, 0
      %p65 = por %p63, %p64
      %p66 = scmp.ne.s32.totalorder %s58, %s60
      %p67 = scmp.eq.s32.totalorder %s17, 1
      %p68 = por %p66, %p67
      %p69 = scmp.ne.s32.totalorder %s60, %s61
      %p70 = scmp.eq.s32.totalorder %s17, 0
      %p71 = por %p69, %p70
      %p72 = scmp.ne.s32.totalorder %s60, %s61
      %p73 = scmp.eq.s32.totalorder %s18, 1
      %p74 = por %p72, %p73
      %p76 = scmp.ne.s32.totalorder %s61, %s75
      %p77 = scmp.eq.s32.totalorder %s18, 0
      %p78 = por %p76, %p77
      %s80 = sadd.s32 %s79, 1
      %p83 = scmp.eq.s32.totalorder %s12, 1
      %p84 = scmp.ne.s32.totalorder %s79, %s81
      %p85 = scmp.eq.s32.totalorder %s12, 0
      %p86 = por %p84, %p85
      %p87 = scmp.ne.s32.totalorder %s79, %s81
      %p88 = scmp.eq.s32.totalorder %s17, 1
      %p89 = por %p87, %p88
      %p90 = scmp.ne.s32.totalorder %s81, %s82
      %p91 = scmp.eq.s32.totalorder %s17, 0
      %p92 = por %p90, %p91
      %p93 = scmp.ne.s32.totalorder %s81, %s82
      %p94 = scmp.eq.s32.totalorder %s18, 1
      %p95 = por %p93, %p94
      %p97 = scmp.ne.s32.totalorder %s82, %s96
      %p98 = scmp.eq.s32.totalorder %s18, 0
      %p99 = por %p97, %p98
      %s100 = ssub.s32 %s19, %s31
      %s101 = ssub.s32 %s20, %s27
      %s102 = sor.u32 %s100, %s101
      %p103 = scmp.eq.s32.totalorder %s102, 0
      %s105 = sadd.s32 %s104, 1
      %s106 = scalar_select %p103, %s104, %s105
      %p109 = pneg %p103
      %p110 = scmp.eq.s32.totalorder %s12, 1
      %p111 = por %p109, %p110
      %p112 = scmp.ne.s32.totalorder %s104, %s107
      %p113 = scmp.eq.s32.totalorder %s12, 0
      %p114 = por %p112, %p113
      %p115 = scmp.ne.s32.totalorder %s104, %s107
      %p116 = scmp.eq.s32.totalorder %s17, 1
      %p117 = por %p115, %p116
      %p118 = scmp.ne.s32.totalorder %s107, %s108
      %p119 = scmp.eq.s32.totalorder %s17, 0
      %p120 = por %p118, %p119
      %p121 = scmp.ne.s32.totalorder %s107, %s108
      %p122 = scmp.eq.s32.totalorder %s18, 1
      %p123 = por %p121, %p122
      %p125 = scmp.ne.s32.totalorder %s108, %s124
      %p126 = scmp.eq.s32.totalorder %s18, 0
      %p127 = por %p125, %p126
      %p128 = scmp.le.s32.totalorder 1, %s12
      %p129 = scmp.lt.s32.totalorder %s12, 3
      %p130 = pnand %p128, %p129
      %p131 = pneg %p130
      // Predicated region
      $region9: #{tpu_custom_call.1} parent=5 // pred_check
        _
      $region10: #{tpu_custom_call.1} parent=5 // pred_check_branch
        %133 = sbr.rel (%p130) target = $region12
      $region11: #{tpu_custom_call.1} parent=5 // pred_region
        %s134 = ssub.s32 %s12, 1
        // Predicated region
        $region13: #{tpu_custom_call.1} parent=11 // pred_check
          %p135 = pneg %p71
        $region14: #{tpu_custom_call.1} parent=11 // pred_check_branch
          %137 = sbr.rel (%p135) target = $region16
        $region15: #{tpu_custom_call.1} parent=11 // pred_region
          _
        $region16: #{tpu_custom_call.1} parent=11 // pred_fallthru
          _
        // Predicated region
        $region17: #{tpu_custom_call.1} parent=11 // pred_check
          %p138 = pneg %p92
        $region18: #{tpu_custom_call.1} parent=11 // pred_check_branch
          %140 = sbr.rel (%p138) target = $region20
        $region19: #{tpu_custom_call.1} parent=11 // pred_region
          _
        $region20: #{tpu_custom_call.1} parent=11 // pred_fallthru
          _
      $region12: #{tpu_custom_call.1} parent=5 // pred_fallthru
        _
      %p141 = scmp.lt.s32.totalorder %s12, 2
      // Predicated region
      $region21: #{tpu_custom_call.1} parent=5 // pred_check
        %p142 = pneg %p141
      $region22: #{tpu_custom_call.1} parent=5 // pred_check_branch
        %144 = sbr.rel (%p142) target = $region24
      $region23: #{tpu_custom_call.1} parent=5 // pred_region
        // Predicated region
        $region25: #{tpu_custom_call.1} parent=23 // pred_check
          %p145 = pneg %p44
        $region26: #{tpu_custom_call.1} parent=23 // pred_check_branch
          %147 = sbr.rel (%p145) target = $region28
        $region27: #{tpu_custom_call.1} parent=23 // pred_region
          %p148 = scmp.lt.s32.totalorder %s19, 1
          %s149 = scalar_select %p148, %s19, 1
          %s150 = smul.addr %s149, 32
          %s151 = smul.addr %s150, 4
          %s152 = scalar_lea.vmem %s0, %s151
        $region28: #{tpu_custom_call.1} parent=23 // pred_fallthru
          _
      $region24: #{tpu_custom_call.1} parent=5 // pred_fallthru
        _
      %p153 = scmp.le.s32.totalorder 1, %s12
      %p154 = scmp.lt.s32.totalorder %s12, 3
      %p155 = pnand %p153, %p154
      %p156 = pneg %p155
      // Predicated region
      $region29: #{tpu_custom_call.1} parent=5 // pred_check
        _
      $region30: #{tpu_custom_call.1} parent=5 // pred_check_branch
        %158 = sbr.rel (%p155) target = $region32
      $region31: #{tpu_custom_call.1} parent=5 // pred_region
        %s159 = ssub.s32 %s12, 1
        %p160 = scmp.lt.s32.totalorder %s21, 1
        %s161 = scalar_select %p160, %s21, 1
        %s162 = smul.addr %s161, 32
        %s163 = smul.addr %s162, 4
        %s164 = scalar_lea.vmem %s0, %s163
        %p165 = pneg %p50
        %p166 = pneg %p47
        %p167 = pneg %p71
        %p168 = pneg %p68
        %p169 = pneg %p92
        %p170 = pneg %p89
        %p171 = pneg %p120
        %p172 = pneg %p117
        %s173 = sand.u32 %s107, 1
        %s174 = scalar_lea.sflag [#allocation4], %s173
        %s175 = sand.u32 %s107, 1
        %s176 = smul.addr %s175, 8
        %s177 = scalar_lea.vmem [#allocation3], %s176
        %p178 = scmp.lt.s32.totalorder %s21, 1
        %s179 = scalar_select %p178, %s21, 1
        %s180 = smul.addr %s179, 32
        %s181 = smul.addr %s180, 4
        %s182 = scalar_lea.vmem %s0, %s181
        %s183 = smul.u32 4, %s22
        %p185 = scmp.eq.s32.totalorder %s22, 0
        // Predicated region
        $region33: #{tpu_custom_call.1} parent=31 // pred_check
          %p186 = pneg %p185
        $region34: #{tpu_custom_call.1} parent=31 // pred_check_branch
          %188 = sbr.rel (%p186) target = $region36
        $region35: #{tpu_custom_call.1} parent=31 // pred_region
          %vm189 = vcmask 27648
          %190 = vst.msk [vmem:[#allocation2] sm:$0xf] %vm189, 0
          %191 = vst.msk [vmem:[#allocation2 + $0x4] sm:$0xf] %vm189, 0
          %vm192 = vcmask 24576
          %193 = vst.msk [vmem:[#allocation2 + $0x8] sm:$0x1] %vm192, 0
          %194 = vst.msk [vmem:[#allocation2 + $0xc] sm:$0xf] %vm189, 0
          %195 = vst.msk [vmem:[#allocation2 + $0x10] sm:$0xf] %vm189, 0
          %196 = vst.msk [vmem:[#allocation2 + $0x14] sm:$0x1] %vm192, 0
          %197 = vst.msk [vmem:[#allocation2 + $0x18] sm:$0xf] %vm189, 0
          %198 = vst.msk [vmem:[#allocation2 + $0x1c] sm:$0xf] %vm189, 0
          %199 = vst.msk [vmem:[#allocation2 + $0x20] sm:$0x1] %vm192, 0
          %200 = vst.msk [vmem:[#allocation2 + $0x24] sm:$0xf] %vm189, 0
          %201 = vst.msk [vmem:[#allocation2 + $0x28] sm:$0xf] %vm189, 0
          %202 = vst.msk [vmem:[#allocation2 + $0x2c] sm:$0x1] %vm192, 0
          %203 = vst.msk [vmem:[#allocation2 + $0x30] sm:$0xf] %vm189, 0
          %204 = vst.msk [vmem:[#allocation2 + $0x34] sm:$0xf] %vm189, 0
          %205 = vst.msk [vmem:[#allocation2 + $0x38] sm:$0x1] %vm192, 0
          %206 = vst.msk [vmem:[#allocation2 + $0x3c] sm:$0xf] %vm189, 0
          %207 = vst.msk [vmem:[#allocation2 + $0x40] sm:$0xf] %vm189, 0
          %208 = vst.msk [vmem:[#allocation2 + $0x44] sm:$0x1] %vm192, 0
          %209 = vst.msk [vmem:[#allocation2 + $0x48] sm:$0xf] %vm189, 0
          %210 = vst.msk [vmem:[#allocation2 + $0x4c] sm:$0xf] %vm189, 0
          %211 = vst.msk [vmem:[#allocation2 + $0x50] sm:$0x1] %vm192, 0
          %212 = vst.msk [vmem:[#allocation2 + $0x54] sm:$0xf] %vm189, 0
          %213 = vst.msk [vmem:[#allocation2 + $0x58] sm:$0xf] %vm189, 0
          %214 = vst.msk [vmem:[#allocation2 + $0x5c] sm:$0x1] %vm192, 0
          %215 = vst.msk [vmem:[#allocation2 + $0x60] sm:$0xf] %vm189, 0
          %216 = vst.msk [vmem:[#allocation2 + $0x64] sm:$0xf] %vm189, 0
          %217 = vst.msk [vmem:[#allocation2 + $0x68] sm:$0x1] %vm192, 0
          %218 = vst.msk [vmem:[#allocation2 + $0x6c] sm:$0xf] %vm189, 0
          %219 = vst.msk [vmem:[#allocation2 + $0x70] sm:$0xf] %vm189, 0
          %220 = vst.msk [vmem:[#allocation2 + $0x74] sm:$0x1] %vm192, 0
          %221 = vst.msk [vmem:[#allocation2 + $0x78] sm:$0xf] %vm189, 0
          %222 = vst.msk [vmem:[#allocation2 + $0x7c] sm:$0xf] %vm189, 0
          %223 = vst.msk [vmem:[#allocation2 + $0x80] sm:$0x1] %vm192, 0
          %224 = vst.msk [vmem:[#allocation2 + $0x84] sm:$0xf] %vm189, 0
          %225 = vst.msk [vmem:[#allocation2 + $0x88] sm:$0xf] %vm189, 0
          %226 = vst.msk [vmem:[#allocation2 + $0x8c] sm:$0x1] %vm192, 0
          %227 = vst.msk [vmem:[#allocation2 + $0x90] sm:$0xf] %vm189, 0
          %228 = vst.msk [vmem:[#allocation2 + $0x94] sm:$0xf] %vm189, 0
          %229 = vst.msk [vmem:[#allocation2 + $0x98] sm:$0x1] %vm192, 0
          %230 = vst.msk [vmem:[#allocation2 + $0x9c] sm:$0xf] %vm189, 0
          %231 = vst.msk [vmem:[#allocation2 + $0xa0] sm:$0xf] %vm189, 0
          %232 = vst.msk [vmem:[#allocation2 + $0xa4] sm:$0x1] %vm192, 0
          %233 = vst.msk [vmem:[#allocation2 + $0xa8] sm:$0xf] %vm189, 0
          %234 = vst.msk [vmem:[#allocation2 + $0xac] sm:$0xf] %vm189, 0
          %235 = vst.msk [vmem:[#allocation2 + $0xb0] sm:$0x1] %vm192, 0
          %236 = vst.msk [vmem:[#allocation2 + $0xb4] sm:$0xf] %vm189, 0
          %237 = vst.msk [vmem:[#allocation2 + $0xb8] sm:$0xf] %vm189, 0
          %238 = vst.msk [vmem:[#allocation2 + $0xbc] sm:$0x1] %vm192, 0
          %239 = vst.msk [vmem:[#allocation2 + $0xc0] sm:$0xf] %vm189, 0
          %240 = vst.msk [vmem:[#allocation2 + $0xc4] sm:$0xf] %vm189, 0
          %241 = vst.msk [vmem:[#allocation2 + $0xc8] sm:$0x1] %vm192, 0
          %242 = vst.msk [vmem:[#allocation2 + $0xcc] sm:$0xf] %vm189, 0
          %243 = vst.msk [vmem:[#allocation2 + $0xd0] sm:$0xf] %vm189, 0
          %244 = vst.msk [vmem:[#allocation2 + $0xd4] sm:$0x1] %vm192, 0
          %v245 = vld [vmem:[%s182] sm:$0xf]
          %v246 = vld [vmem:[%s182 + $0x4] sm:$0xf]
          %v247 = vld [vmem:[%s182 + $0x8] sm:$0xf]
          %v248 = vld [vmem:[%s182 + $0xc] sm:$0xf]
          %v249 = vld [vmem:[%s182 + $0x10] sm:$0xf]
          %v250 = vld [vmem:[%s182 + $0x14] sm:$0xf]
          %v251 = vld [vmem:[%s182 + $0x18] sm:$0xf]
          %v252 = vld [vmem:[%s182 + $0x1c] sm:$0xf]
          %v253 = vld [vmem:[%s182 + $0x20] sm:$0xf]
          %v254 = vld [vmem:[%s182 + $0x24] sm:$0xf]
          %v255 = vld [vmem:[%s182 + $0x28] sm:$0xf]
          %v256 = vld [vmem:[%s182 + $0x2c] sm:$0xf]
          %v257 = vld [vmem:[%s182 + $0x30] sm:$0xf]
          %v258 = vld [vmem:[%s182 + $0x34] sm:$0xf]
          %v259 = vld [vmem:[%s182 + $0x38] sm:$0xf]
          %v260 = vld [vmem:[%s182 + $0x3c] sm:$0xf]
          %v261 = vld [vmem:[%s182 + $0x40] sm:$0xf]
          %v262 = vld [vmem:[%s182 + $0x44] sm:$0xf]
          %v263 = vld [vmem:[%s182 + $0x48] sm:$0xf]
          %v264 = vld [vmem:[%s182 + $0x4c] sm:$0xf]
          %v265 = vld [vmem:[%s182 + $0x50] sm:$0xf]
          %v266 = vld [vmem:[%s182 + $0x54] sm:$0xf]
          %v267 = vld [vmem:[%s182 + $0x58] sm:$0xf]
          %v268 = vld [vmem:[%s182 + $0x5c] sm:$0xf]
          %v269 = vld [vmem:[%s182 + $0x60] sm:$0xf]
          %v270 = vld [vmem:[%s182 + $0x64] sm:$0xf]
          %v271 = vld [vmem:[%s182 + $0x68] sm:$0xf]
          %v272 = vld [vmem:[%s182 + $0x6c] sm:$0xf]
          %v273 = vld [vmem:[%s182 + $0x70] sm:$0xf]
          %v274 = vld [vmem:[%s182 + $0x74] sm:$0xf]
          %v275 = vld [vmem:[%s182 + $0x78] sm:$0xf]
          %v276 = vld [vmem:[%s182 + $0x7c] sm:$0xf]
          %vm277 = vsmask.f32 256
          %vm278 = vsmask.f32 4368
          %vm279 = vmor %vm277, %vm278
          %v281 = vshrl.u32 %v245, 16
          %v283 = vrot.slane %v281, 7
          %v284 = vshll.u32 %v245, 16
          %v286 = vor.u32 %v283, %v284
          %v287 = vrot.slane %v283, 4
          %v289 = vshrl.u32 %v246, 16
          %v291 = vrot.slane %v289, 7
          %v292 = vshll.u32 %v246, 16
          %v294 = vor.u32 %v291, %v292
          %v295 = vsel %vm279, %v287, %v294
          %v296 = vrot.slane %v291, 4
          %v298 = vshrl.u32 %v247, 16
          %v300 = vrot.slane %v298, 7
          %v301 = vshll.u32 %v247, 16
          %v303 = vor.u32 %v300, %v301
          %v304 = vrot.slane %v300, 4
          %v306 = vshrl.u32 %v248, 16
          %v308 = vrot.slane %v306, 7
          %v309 = vshll.u32 %v248, 16
          %v311 = vor.u32 %v308, %v309
          %v312 = vsel %vm279, %v304, %v311
          %v313 = vrot.slane %v308, 4
          %v315 = vshrl.u32 %v249, 16
          %v317 = vrot.slane %v315, 7
          %v318 = vshll.u32 %v249, 16
          %v320 = vor.u32 %v317, %v318
          %v321 = vrot.slane %v317, 4
          %v323 = vshrl.u32 %v250, 16
          %v325 = vrot.slane %v323, 7
          %v326 = vshll.u32 %v250, 16
          %v328 = vor.u32 %v325, %v326
          %v329 = vsel %vm279, %v321, %v328
          %v330 = vrot.slane %v325, 4
          %v332 = vshrl.u32 %v251, 16
          %v334 = vrot.slane %v332, 7
          %v335 = vshll.u32 %v251, 16
          %v337 = vor.u32 %v334, %v335
          %v338 = vrot.slane %v334, 4
          %v340 = vshrl.u32 %v252, 16
          %v342 = vrot.slane %v340, 7
          %v343 = vshll.u32 %v252, 16
          %v345 = vor.u32 %v342, %v343
          %v346 = vsel %vm279, %v338, %v345
          %v347 = vrot.slane %v342, 4
          %v349 = vshrl.u32 %v253, 16
          %v351 = vrot.slane %v349, 7
          %v352 = vshll.u32 %v253, 16
          %v354 = vor.u32 %v351, %v352
          %v355 = vrot.slane %v351, 4
          %v357 = vshrl.u32 %v254, 16
          %v359 = vrot.slane %v357, 7
          %v360 = vshll.u32 %v254, 16
          %v362 = vor.u32 %v359, %v360
          %v363 = vsel %vm279, %v355, %v362
          %v364 = vrot.slane %v359, 4
          %v366 = vshrl.u32 %v255, 16
          %v368 = vrot.slane %v366, 7
          %v369 = vshll.u32 %v255, 16
          %v371 = vor.u32 %v368, %v369
          %v372 = vrot.slane %v368, 4
          %v374 = vshrl.u32 %v256, 16
          %v376 = vrot.slane %v374, 7
          %v377 = vshll.u32 %v256, 16
          %v379 = vor.u32 %v376, %v377
          %v380 = vsel %vm279, %v372, %v379
          %v381 = vrot.slane %v376, 4
          %v383 = vshrl.u32 %v257, 16
          %v385 = vrot.slane %v383, 7
          %v386 = vshll.u32 %v257, 16
          %v388 = vor.u32 %v385, %v386
          %v389 = vrot.slane %v385, 4
          %v391 = vshrl.u32 %v258, 16
          %v393 = vrot.slane %v391, 7
          %v394 = vshll.u32 %v258, 16
          %v396 = vor.u32 %v393, %v394
          %v397 = vsel %vm279, %v389, %v396
          %v398 = vrot.slane %v393, 4
          %v400 = vshrl.u32 %v259, 16
          %v402 = vrot.slane %v400, 7
          %v403 = vshll.u32 %v259, 16
          %v405 = vor.u32 %v402, %v403
          %v406 = vrot.slane %v402, 4
          %v408 = vshrl.u32 %v260, 16
          %v410 = vrot.slane %v408, 7
          %v411 = vshll.u32 %v260, 16
          %v413 = vor.u32 %v410, %v411
          %v414 = vsel %vm279, %v406, %v413
          %v415 = vrot.slane %v410, 4
          %v417 = vshrl.u32 %v261, 16
          %v419 = vrot.slane %v417, 7
          %v420 = vshll.u32 %v261, 16
          %v422 = vor.u32 %v419, %v420
          %v423 = vrot.slane %v419, 4
          %v425 = vshrl.u32 %v262, 16
          %v427 = vrot.slane %v425, 7
          %v428 = vshll.u32 %v262, 16
          %v430 = vor.u32 %v427, %v428
          %v431 = vsel %vm279, %v423, %v430
          %v432 = vrot.slane %v427, 4
          %v434 = vshrl.u32 %v263, 16
          %v436 = vrot.slane %v434, 7
          %v437 = vshll.u32 %v263, 16
          %v439 = vor.u32 %v436, %v437
          %v440 = vrot.slane %v436, 4
          %v442 = vshrl.u32 %v264, 16
          %v444 = vrot.slane %v442, 7
          %v445 = vshll.u32 %v264, 16
          %v447 = vor.u32 %v444, %v445
          %v448 = vsel %vm279, %v440, %v447
          %v449 = vrot.slane %v444, 4
          %v451 = vshrl.u32 %v265, 16
          %v453 = vrot.slane %v451, 7
          %v454 = vshll.u32 %v265, 16
          %v456 = vor.u32 %v453, %v454
          %v457 = vrot.slane %v453, 4
          %v459 = vshrl.u32 %v266, 16
          %v461 = vrot.slane %v459, 7
          %v462 = vshll.u32 %v266, 16
          %v464 = vor.u32 %v461, %v462
          %v465 = vsel %vm279, %v457, %v464
          %v466 = vrot.slane %v461, 4
          %v468 = vshrl.u32 %v267, 16
          %v470 = vrot.slane %v468, 7
          %v471 = vshll.u32 %v267, 16
          %v473 = vor.u32 %v470, %v471
          %v474 = vrot.slane %v470, 4
          %v476 = vshrl.u32 %v268, 16
          %v478 = vrot.slane %v476, 7
          %v479 = vshll.u32 %v268, 16
          %v481 = vor.u32 %v478, %v479
          %v482 = vsel %vm279, %v474, %v481
          %v483 = vrot.slane %v478, 4
          %v485 = vshrl.u32 %v269, 16
          %v487 = vrot.slane %v485, 7
          %v488 = vshll.u32 %v269, 16
          %v490 = vor.u32 %v487, %v488
          %v491 = vrot.slane %v487, 4
          %v493 = vshrl.u32 %v270, 16
          %v495 = vrot.slane %v493, 7
          %v496 = vshll.u32 %v270, 16
          %v498 = vor.u32 %v495, %v496
          %v499 = vsel %vm279, %v491, %v498
          %v500 = vrot.slane %v495, 4
          %v502 = vshrl.u32 %v271, 16
          %v504 = vrot.slane %v502, 7
          %v505 = vshll.u32 %v271, 16
          %v507 = vor.u32 %v504, %v505
          %v508 = vrot.slane %v504, 4
          %v510 = vshrl.u32 %v272, 16
          %v512 = vrot.slane %v510, 7
          %v513 = vshll.u32 %v272, 16
          %v515 = vor.u32 %v512, %v513
          %v516 = vsel %vm279, %v508, %v515
          %v517 = vrot.slane %v512, 4
          %v519 = vshrl.u32 %v273, 16
          %v521 = vrot.slane %v519, 7
          %v522 = vshll.u32 %v273, 16
          %v524 = vor.u32 %v521, %v522
          %v525 = vrot.slane %v521, 4
          %v527 = vshrl.u32 %v274, 16
          %v529 = vrot.slane %v527, 7
          %v530 = vshll.u32 %v274, 16
          %v532 = vor.u32 %v529, %v530
          %v533 = vsel %vm279, %v525, %v532
          %v534 = vrot.slane %v529, 4
          %v536 = vshrl.u32 %v275, 16
          %v538 = vrot.slane %v536, 7
          %v539 = vshll.u32 %v275, 16
          %v541 = vor.u32 %v538, %v539
          %v542 = vrot.slane %v538, 4
          %v544 = vshrl.u32 %v276, 16
          %v546 = vrot.slane %v544, 7
          %v547 = vshll.u32 %v276, 16
          %v549 = vor.u32 %v546, %v547
          %v550 = vsel %vm279, %v542, %v549
          %v551 = vrot.slane %v546, 4
          %s600 = scalar_lea.vmem [#allocation2], 12
          %vm601 = vcmask 27648
          %vm602 = vsmask.f32 7938
          %vm603 = vmand %vm601, %vm602
          %v604 = vld [vmem:[%s600] sm:$0xf]
          %v605 = vsel %vm603, %v286, %v604
          %606 = vst [vmem:[%s600] sm:$0xf] %v605
          %607 = vst.msk [vmem:[%s600 + $0x4] sm:$0xf] %vm189, %v295
          %vm608 = vcmask 24576
          %vm609 = vmand %vm608, %vm277
          %v610 = vld [vmem:[%s600 + $0x8] sm:$0x1]
          %v611 = vsel %vm609, %v296, %v610
          %612 = vst [vmem:[%s600 + $0x8] sm:$0x1] %v611
          %v613 = vld [vmem:[%s600 + $0xc] sm:$0xf]
          %v614 = vsel %vm603, %v303, %v613
          %615 = vst [vmem:[%s600 + $0xc] sm:$0xf] %v614
          %616 = vst.msk [vmem:[%s600 + $0x10] sm:$0xf] %vm189, %v312
          %v617 = vld [vmem:[%s600 + $0x14] sm:$0x1]
          %v618 = vsel %vm609, %v313, %v617
          %619 = vst [vmem:[%s600 + $0x14] sm:$0x1] %v618
          %v620 = vld [vmem:[%s600 + $0x18] sm:$0xf]
          %v621 = vsel %vm603, %v320, %v620
          %622 = vst [vmem:[%s600 + $0x18] sm:$0xf] %v621
          %623 = vst.msk [vmem:[%s600 + $0x1c] sm:$0xf] %vm189, %v329
          %v624 = vld [vmem:[%s600 + $0x20] sm:$0x1]
          %v625 = vsel %vm609, %v330, %v624
          %626 = vst [vmem:[%s600 + $0x20] sm:$0x1] %v625
          %v627 = vld [vmem:[%s600 + $0x24] sm:$0xf]
          %v628 = vsel %vm603, %v337, %v627
          %629 = vst [vmem:[%s600 + $0x24] sm:$0xf] %v628
          %630 = vst.msk [vmem:[%s600 + $0x28] sm:$0xf] %vm189, %v346
          %v631 = vld [vmem:[%s600 + $0x2c] sm:$0x1]
          %v632 = vsel %vm609, %v347, %v631
          %633 = vst [vmem:[%s600 + $0x2c] sm:$0x1] %v632
          %v634 = vld [vmem:[%s600 + $0x30] sm:$0xf]
          %v635 = vsel %vm603, %v354, %v634
          %636 = vst [vmem:[%s600 + $0x30] sm:$0xf] %v635
          %637 = vst.msk [vmem:[%s600 + $0x34] sm:$0xf] %vm189, %v363
          %v638 = vld [vmem:[%s600 + $0x38] sm:$0x1]
          %v639 = vsel %vm609, %v364, %v638
          %640 = vst [vmem:[%s600 + $0x38] sm:$0x1] %v639
          %v641 = vld [vmem:[%s600 + $0x3c] sm:$0xf]
          %v642 = vsel %vm603, %v371, %v641
          %643 = vst [vmem:[%s600 + $0x3c] sm:$0xf] %v642
          %644 = vst.msk [vmem:[%s600 + $0x40] sm:$0xf] %vm189, %v380
          %v645 = vld [vmem:[%s600 + $0x44] sm:$0x1]
          %v646 = vsel %vm609, %v381, %v645
          %647 = vst [vmem:[%s600 + $0x44] sm:$0x1] %v646
          %v648 = vld [vmem:[%s600 + $0x48] sm:$0xf]
          %v649 = vsel %vm603, %v388, %v648
          %650 = vst [vmem:[%s600 + $0x48] sm:$0xf] %v649
          %651 = vst.msk [vmem:[%s600 + $0x4c] sm:$0xf] %vm189, %v397
          %v652 = vld [vmem:[%s600 + $0x50] sm:$0x1]
          %v653 = vsel %vm609, %v398, %v652
          %654 = vst [vmem:[%s600 + $0x50] sm:$0x1] %v653
          %v655 = vld [vmem:[%s600 + $0x54] sm:$0xf]
          %v656 = vsel %vm603, %v405, %v655
          %657 = vst [vmem:[%s600 + $0x54] sm:$0xf] %v656
          %658 = vst.msk [vmem:[%s600 + $0x58] sm:$0xf] %vm189, %v414
          %v659 = vld [vmem:[%s600 + $0x5c] sm:$0x1]
          %v660 = vsel %vm609, %v415, %v659
          %661 = vst [vmem:[%s600 + $0x5c] sm:$0x1] %v660
          %v662 = vld [vmem:[%s600 + $0x60] sm:$0xf]
          %v663 = vsel %vm603, %v422, %v662
          %664 = vst [vmem:[%s600 + $0x60] sm:$0xf] %v663
          %665 = vst.msk [vmem:[%s600 + $0x64] sm:$0xf] %vm189, %v431
          %v666 = vld [vmem:[%s600 + $0x68] sm:$0x1]
          %v667 = vsel %vm609, %v432, %v666
          %668 = vst [vmem:[%s600 + $0x68] sm:$0x1] %v667
          %v669 = vld [vmem:[%s600 + $0x6c] sm:$0xf]
          %v670 = vsel %vm603, %v439, %v669
          %671 = vst [vmem:[%s600 + $0x6c] sm:$0xf] %v670
          %672 = vst.msk [vmem:[%s600 + $0x70] sm:$0xf] %vm189, %v448
          %v673 = vld [vmem:[%s600 + $0x74] sm:$0x1]
          %v674 = vsel %vm609, %v449, %v673
          %675 = vst [vmem:[%s600 + $0x74] sm:$0x1] %v674
          %v676 = vld [vmem:[%s600 + $0x78] sm:$0xf]
          %v677 = vsel %vm603, %v456, %v676
          %678 = vst [vmem:[%s600 + $0x78] sm:$0xf] %v677
          %679 = vst.msk [vmem:[%s600 + $0x7c] sm:$0xf] %vm189, %v465
          %v680 = vld [vmem:[%s600 + $0x80] sm:$0x1]
          %v681 = vsel %vm609, %v466, %v680
          %682 = vst [vmem:[%s600 + $0x80] sm:$0x1] %v681
          %v683 = vld [vmem:[%s600 + $0x84] sm:$0xf]
          %v684 = vsel %vm603, %v473, %v683
          %685 = vst [vmem:[%s600 + $0x84] sm:$0xf] %v684
          %686 = vst.msk [vmem:[%s600 + $0x88] sm:$0xf] %vm189, %v482
          %v687 = vld [vmem:[%s600 + $0x8c] sm:$0x1]
          %v688 = vsel %vm609, %v483, %v687
          %689 = vst [vmem:[%s600 + $0x8c] sm:$0x1] %v688
          %v690 = vld [vmem:[%s600 + $0x90] sm:$0xf]
          %v691 = vsel %vm603, %v490, %v690
          %692 = vst [vmem:[%s600 + $0x90] sm:$0xf] %v691
          %693 = vst.msk [vmem:[%s600 + $0x94] sm:$0xf] %vm189, %v499
          %v694 = vld [vmem:[%s600 + $0x98] sm:$0x1]
          %v695 = vsel %vm609, %v500, %v694
          %696 = vst [vmem:[%s600 + $0x98] sm:$0x1] %v695
          %v697 = vld [vmem:[%s600 + $0x9c] sm:$0xf]
          %v698 = vsel %vm603, %v507, %v697
          %699 = vst [vmem:[%s600 + $0x9c] sm:$0xf] %v698
          %700 = vst.msk [vmem:[%s600 + $0xa0] sm:$0xf] %vm189, %v516
          %v701 = vld [vmem:[%s600 + $0xa4] sm:$0x1]
          %v702 = vsel %vm609, %v517, %v701
          %703 = vst [vmem:[%s600 + $0xa4] sm:$0x1] %v702
          %v704 = vld [vmem:[%s600 + $0xa8] sm:$0xf]
          %v705 = vsel %vm603, %v524, %v704
          %706 = vst [vmem:[%s600 + $0xa8] sm:$0xf] %v705
          %707 = vst.msk [vmem:[%s600 + $0xac] sm:$0xf] %vm189, %v533
          %v708 = vld [vmem:[%s600 + $0xb0] sm:$0x1]
          %v709 = vsel %vm609, %v534, %v708
          %710 = vst [vmem:[%s600 + $0xb0] sm:$0x1] %v709
          %v711 = vld [vmem:[%s600 + $0xb4] sm:$0xf]
          %v712 = vsel %vm603, %v541, %v711
          %713 = vst [vmem:[%s600 + $0xb4] sm:$0xf] %v712
          %714 = vst.msk [vmem:[%s600 + $0xb8] sm:$0xf] %vm189, %v550
          %v715 = vld [vmem:[%s600 + $0xbc] sm:$0x1]
          %v716 = vsel %vm609, %v551, %v715
          %717 = vst [vmem:[%s600 + $0xbc] sm:$0x1] %v716
        $region36: #{tpu_custom_call.1} parent=31 // pred_fallthru
          _
        %s718 = smul.u32 %s22, 16
        %s719 = smul.u32 %s718, 3
        %s720 = smul.addr %s719, 4
        %s721 = scalar_lea.vmem [#allocation2], %s720
        %v722 = vld [vmem:[%s721] sm:$0xf]
        %v723 = vld [vmem:[%s721 + $0x4] sm:$0xf]
        %v724 = vld [vmem:[%s721 + $0xc] sm:$0xf]
        %v725 = vld [vmem:[%s721 + $0x10] sm:$0xf]
        %v726 = vld [vmem:[%s721 + $0x18] sm:$0xf]
        %v727 = vld [vmem:[%s721 + $0x1c] sm:$0xf]
        %v728 = vld [vmem:[%s721 + $0x24] sm:$0xf]
        %v729 = vld [vmem:[%s721 + $0x28] sm:$0xf]
        %v730 = vld [vmem:[%s721 + $0x30] sm:$0xf]
        %v731 = vld [vmem:[%s721 + $0x34] sm:$0xf]
        %v732 = vld [vmem:[%s721 + $0x3c] sm:$0xf]
        %v733 = vld [vmem:[%s721 + $0x40] sm:$0xf]
        %v734 = vld [vmem:[%s721 + $0x48] sm:$0xf]
        %v735 = vld [vmem:[%s721 + $0x4c] sm:$0xf]
        %v736 = vld [vmem:[%s721 + $0x54] sm:$0xf]
        %v737 = vld [vmem:[%s721 + $0x58] sm:$0xf]
        %v738 = vld [vmem:[%s721 + $0x60] sm:$0xf]
        %v739 = vld [vmem:[%s721 + $0x64] sm:$0xf]
        %v740 = vld [vmem:[%s721 + $0x6c] sm:$0xf]
        %v741 = vld [vmem:[%s721 + $0x70] sm:$0xf]
        %v742 = vld [vmem:[%s721 + $0x78] sm:$0xf]
        %v743 = vld [vmem:[%s721 + $0x7c] sm:$0xf]
        %v744 = vld [vmem:[%s721 + $0x84] sm:$0xf]
        %v745 = vld [vmem:[%s721 + $0x88] sm:$0xf]
        %v746 = vld [vmem:[%s721 + $0x90] sm:$0xf]
        %v747 = vld [vmem:[%s721 + $0x94] sm:$0xf]
        %v748 = vld [vmem:[%s721 + $0x9c] sm:$0xf]
        %v749 = vld [vmem:[%s721 + $0xa0] sm:$0xf]
        %v750 = vld [vmem:[%s721 + $0xa8] sm:$0xf]
        %v751 = vld [vmem:[%s721 + $0xac] sm:$0xf]
        %v752 = vld [vmem:[%s721 + $0xb4] sm:$0xf]
        %v753 = vld [vmem:[%s721 + $0xb8] sm:$0xf]
        %v754 = vld [vmem:[%s721 + $0x8] sm:$0x1]
        %v755 = vld [vmem:[%s721 + $0x14] sm:$0x1]
        %v756 = vld [vmem:[%s721 + $0x20] sm:$0x1]
        %v757 = vld [vmem:[%s721 + $0x2c] sm:$0x1]
        %v758 = vld [vmem:[%s721 + $0x38] sm:$0x1]
        %v759 = vld [vmem:[%s721 + $0x44] sm:$0x1]
        %v760 = vld [vmem:[%s721 + $0x50] sm:$0x1]
        %v761 = vld [vmem:[%s721 + $0x5c] sm:$0x1]
        %v762 = vld [vmem:[%s721 + $0x68] sm:$0x1]
        %v763 = vld [vmem:[%s721 + $0x74] sm:$0x1]
        %v764 = vld [vmem:[%s721 + $0x80] sm:$0x1]
        %v765 = vld [vmem:[%s721 + $0x8c] sm:$0x1]
        %v766 = vld [vmem:[%s721 + $0x98] sm:$0x1]
        %v767 = vld [vmem:[%s721 + $0xa4] sm:$0x1]
        %v768 = vld [vmem:[%s721 + $0xb0] sm:$0x1]
        %v769 = vld [vmem:[%s721 + $0xbc] sm:$0x1]
        %vm770 = vsmask.f32 3328
        %vm771 = vsmask.f32 7440
        %vm772 = vmor %vm770, %vm771
        %v774 = vshrl.u32 %v722, 16
        %v776 = vrot.slane %v774, 4
        %v777 = vshll.u32 %v722, 16
        %v779 = vrot.slane %v777, 5
        %v780 = vor.u32 %v776, %v779
        %v781 = vrot.slane %v780, 4
        %v783 = vshll.u32 %v723, 16
        %v785 = vrot.slane %v783, 5
        %v786 = vsel %vm772, %v781, %v785
        %v787 = vshrl.u32 %v723, 16
        %v789 = vrot.slane %v787, 4
        %v790 = vor.u32 %v789, %v785
        %v791 = vrot.slane %v790, 4
        %v793 = vshll.u32 %v754, 16
        %v795 = vrot.slane %v793, 5
        %v796 = vsel %vm772, %v791, %v795
        %v798 = vshrl.u32 %v724, 16
        %v800 = vrot.slane %v798, 4
        %v801 = vshll.u32 %v724, 16
        %v803 = vrot.slane %v801, 5
        %v804 = vor.u32 %v800, %v803
        %v805 = vrot.slane %v804, 4
        %v807 = vshll.u32 %v725, 16
        %v809 = vrot.slane %v807, 5
        %v810 = vsel %vm772, %v805, %v809
        %v811 = vshrl.u32 %v725, 16
        %v813 = vrot.slane %v811, 4
        %v814 = vor.u32 %v813, %v809
        %v815 = vrot.slane %v814, 4
        %v817 = vshll.u32 %v755, 16
        %v819 = vrot.slane %v817, 5
        %v820 = vsel %vm772, %v815, %v819
        %v822 = vshrl.u32 %v726, 16
        %v824 = vrot.slane %v822, 4
        %v825 = vshll.u32 %v726, 16
        %v827 = vrot.slane %v825, 5
        %v828 = vor.u32 %v824, %v827
        %v829 = vrot.slane %v828, 4
        %v831 = vshll.u32 %v727, 16
        %v833 = vrot.slane %v831, 5
        %v834 = vsel %vm772, %v829, %v833
        %v835 = vshrl.u32 %v727, 16
        %v837 = vrot.slane %v835, 4
        %v838 = vor.u32 %v837, %v833
        %v839 = vrot.slane %v838, 4
        %v841 = vshll.u32 %v756, 16
        %v843 = vrot.slane %v841, 5
        %v844 = vsel %vm772, %v839, %v843
        %v846 = vshrl.u32 %v728, 16
        %v848 = vrot.slane %v846, 4
        %v849 = vshll.u32 %v728, 16
        %v851 = vrot.slane %v849, 5
        %v852 = vor.u32 %v848, %v851
        %v853 = vrot.slane %v852, 4
        %v855 = vshll.u32 %v729, 16
        %v857 = vrot.slane %v855, 5
        %v858 = vsel %vm772, %v853, %v857
        %v859 = vshrl.u32 %v729, 16
        %v861 = vrot.slane %v859, 4
        %v862 = vor.u32 %v861, %v857
        %v863 = vrot.slane %v862, 4
        %v865 = vshll.u32 %v757, 16
        %v867 = vrot.slane %v865, 5
        %v868 = vsel %vm772, %v863, %v867
        %v870 = vshrl.u32 %v730, 16
        %v872 = vrot.slane %v870, 4
        %v873 = vshll.u32 %v730, 16
        %v875 = vrot.slane %v873, 5
        %v876 = vor.u32 %v872, %v875
        %v877 = vrot.slane %v876, 4
        %v879 = vshll.u32 %v731, 16
        %v881 = vrot.slane %v879, 5
        %v882 = vsel %vm772, %v877, %v881
        %v883 = vshrl.u32 %v731, 16
        %v885 = vrot.slane %v883, 4
        %v886 = vor.u32 %v885, %v881
        %v887 = vrot.slane %v886, 4
        %v889 = vshll.u32 %v758, 16
        %v891 = vrot.slane %v889, 5
        %v892 = vsel %vm772, %v887, %v891
        %v894 = vshrl.u32 %v732, 16
        %v896 = vrot.slane %v894, 4
        %v897 = vshll.u32 %v732, 16
        %v899 = vrot.slane %v897, 5
        %v900 = vor.u32 %v896, %v899
        %v901 = vrot.slane %v900, 4
        %v903 = vshll.u32 %v733, 16
        %v905 = vrot.slane %v903, 5
        %v906 = vsel %vm772, %v901, %v905
        %v907 = vshrl.u32 %v733, 16
        %v909 = vrot.slane %v907, 4
        %v910 = vor.u32 %v909, %v905
        %v911 = vrot.slane %v910, 4
        %v913 = vshll.u32 %v759, 16
        %v915 = vrot.slane %v913, 5
        %v916 = vsel %vm772, %v911, %v915
        %v918 = vshrl.u32 %v734, 16
        %v920 = vrot.slane %v918, 4
        %v921 = vshll.u32 %v734, 16
        %v923 = vrot.slane %v921, 5
        %v924 = vor.u32 %v920, %v923
        %v925 = vrot.slane %v924, 4
        %v927 = vshll.u32 %v735, 16
        %v929 = vrot.slane %v927, 5
        %v930 = vsel %vm772, %v925, %v929
        %v931 = vshrl.u32 %v735, 16
        %v933 = vrot.slane %v931, 4
        %v934 = vor.u32 %v933, %v929
        %v935 = vrot.slane %v934, 4
        %v937 = vshll.u32 %v760, 16
        %v939 = vrot.slane %v937, 5
        %v940 = vsel %vm772, %v935, %v939
        %v942 = vshrl.u32 %v736, 16
        %v944 = vrot.slane %v942, 4
        %v945 = vshll.u32 %v736, 16
        %v947 = vrot.slane %v945, 5
        %v948 = vor.u32 %v944, %v947
        %v949 = vrot.slane %v948, 4
        %v951 = vshll.u32 %v737, 16
        %v953 = vrot.slane %v951, 5
        %v954 = vsel %vm772, %v949, %v953
        %v955 = vshrl.u32 %v737, 16
        %v957 = vrot.slane %v955, 4
        %v958 = vor.u32 %v957, %v953
        %v959 = vrot.slane %v958, 4
        %v961 = vshll.u32 %v761, 16
        %v963 = vrot.slane %v961, 5
        %v964 = vsel %vm772, %v959, %v963
        %v966 = vshrl.u32 %v738, 16
        %v968 = vrot.slane %v966, 4
        %v969 = vshll.u32 %v738, 16
        %v971 = vrot.slane %v969, 5
        %v972 = vor.u32 %v968, %v971
        %v973 = vrot.slane %v972, 4
        %v975 = vshll.u32 %v739, 16
        %v977 = vrot.slane %v975, 5
        %v978 = vsel %vm772, %v973, %v977
        %v979 = vshrl.u32 %v739, 16
        %v981 = vrot.slane %v979, 4
        %v982 = vor.u32 %v981, %v977
        %v983 = vrot.slane %v982, 4
        %v985 = vshll.u32 %v762, 16
        %v987 = vrot.slane %v985, 5
        %v988 = vsel %vm772, %v983, %v987
        %v990 = vshrl.u32 %v740, 16
        %v992 = vrot.slane %v990, 4
        %v993 = vshll.u32 %v740, 16
        %v995 = vrot.slane %v993, 5
        %v996 = vor.u32 %v992, %v995
        %v997 = vrot.slane %v996, 4
        %v999 = vshll.u32 %v741, 16
        %v1001 = vrot.slane %v999, 5
        %v1002 = vsel %vm772, %v997, %v1001
        %v1003 = vshrl.u32 %v741, 16
        %v1005 = vrot.slane %v1003, 4
        %v1006 = vor.u32 %v1005, %v1001
        %v1007 = vrot.slane %v1006, 4
        %v1009 = vshll.u32 %v763, 16
        %v1011 = vrot.slane %v1009, 5
        %v1012 = vsel %vm772, %v1007, %v1011
        %v1014 = vshrl.u32 %v742, 16
        %v1016 = vrot.slane %v1014, 4
        %v1017 = vshll.u32 %v742, 16
        %v1019 = vrot.slane %v1017, 5
        %v1020 = vor.u32 %v1016, %v1019
        %v1021 = vrot.slane %v1020, 4
        %v1023 = vshll.u32 %v743, 16
        %v1025 = vrot.slane %v1023, 5
        %v1026 = vsel %vm772, %v1021, %v1025
        %v1027 = vshrl.u32 %v743, 16
        %v1029 = vrot.slane %v1027, 4
        %v1030 = vor.u32 %v1029, %v1025
        %v1031 = vrot.slane %v1030, 4
        %v1033 = vshll.u32 %v764, 16
        %v1035 = vrot.slane %v1033, 5
        %v1036 = vsel %vm772, %v1031, %v1035
        %v1038 = vshrl.u32 %v744, 16
        %v1040 = vrot.slane %v1038, 4
        %v1041 = vshll.u32 %v744, 16
        %v1043 = vrot.slane %v1041, 5
        %v1044 = vor.u32 %v1040, %v1043
        %v1045 = vrot.slane %v1044, 4
        %v1047 = vshll.u32 %v745, 16
        %v1049 = vrot.slane %v1047, 5
        %v1050 = vsel %vm772, %v1045, %v1049
        %v1051 = vshrl.u32 %v745, 16
        %v1053 = vrot.slane %v1051, 4
        %v1054 = vor.u32 %v1053, %v1049
        %v1055 = vrot.slane %v1054, 4
        %v1057 = vshll.u32 %v765, 16
        %v1059 = vrot.slane %v1057, 5
        %v1060 = vsel %vm772, %v1055, %v1059
        %v1062 = vshrl.u32 %v746, 16
        %v1064 = vrot.slane %v1062, 4
        %v1065 = vshll.u32 %v746, 16
        %v1067 = vrot.slane %v1065, 5
        %v1068 = vor.u32 %v1064, %v1067
        %v1069 = vrot.slane %v1068, 4
        %v1071 = vshll.u32 %v747, 16
        %v1073 = vrot.slane %v1071, 5
        %v1074 = vsel %vm772, %v1069, %v1073
        %v1075 = vshrl.u32 %v747, 16
        %v1077 = vrot.slane %v1075, 4
        %v1078 = vor.u32 %v1077, %v1073
        %v1079 = vrot.slane %v1078, 4
        %v1081 = vshll.u32 %v766, 16
        %v1083 = vrot.slane %v1081, 5
        %v1084 = vsel %vm772, %v1079, %v1083
        %v1086 = vshrl.u32 %v748, 16
        %v1088 = vrot.slane %v1086, 4
        %v1089 = vshll.u32 %v748, 16
        %v1091 = vrot.slane %v1089, 5
        %v1092 = vor.u32 %v1088, %v1091
        %v1093 = vrot.slane %v1092, 4
        %v1095 = vshll.u32 %v749, 16
        %v1097 = vrot.slane %v1095, 5
        %v1098 = vsel %vm772, %v1093, %v1097
        %v1099 = vshrl.u32 %v749, 16
        %v1101 = vrot.slane %v1099, 4
        %v1102 = vor.u32 %v1101, %v1097
        %v1103 = vrot.slane %v1102, 4
        %v1105 = vshll.u32 %v767, 16
        %v1107 = vrot.slane %v1105, 5
        %v1108 = vsel %vm772, %v1103, %v1107
        %v1110 = vshrl.u32 %v750, 16
        %v1112 = vrot.slane %v1110, 4
        %v1113 = vshll.u32 %v750, 16
        %v1115 = vrot.slane %v1113, 5
        %v1116 = vor.u32 %v1112, %v1115
        %v1117 = vrot.slane %v1116, 4
        %v1119 = vshll.u32 %v751, 16
        %v1121 = vrot.slane %v1119, 5
        %v1122 = vsel %vm772, %v1117, %v1121
        %v1123 = vshrl.u32 %v751, 16
        %v1125 = vrot.slane %v1123, 4
        %v1126 = vor.u32 %v1125, %v1121
        %v1127 = vrot.slane %v1126, 4
        %v1129 = vshll.u32 %v768, 16
        %v1131 = vrot.slane %v1129, 5
        %v1132 = vsel %vm772, %v1127, %v1131
        %v1134 = vshrl.u32 %v752, 16
        %v1136 = vrot.slane %v1134, 4
        %v1137 = vshll.u32 %v752, 16
        %v1139 = vrot.slane %v1137, 5
        %v1140 = vor.u32 %v1136, %v1139
        %v1141 = vrot.slane %v1140, 4
        %v1143 = vshll.u32 %v753, 16
        %v1145 = vrot.slane %v1143, 5
        %v1146 = vsel %vm772, %v1141, %v1145
        %v1147 = vshrl.u32 %v753, 16
        %v1149 = vrot.slane %v1147, 4
        %v1150 = vor.u32 %v1149, %v1145
        %v1151 = vrot.slane %v1150, 4
        %v1153 = vshll.u32 %v769, 16
        %v1155 = vrot.slane %v1153, 5
        %v1156 = vsel %vm772, %v1151, %v1155
        %v1157 = vld [vmem:[%s721] sm:$0xe]
        %v1158 = vld [vmem:[%s721 + $0xc] sm:$0xe]
        %v1159 = vld [vmem:[%s721 + $0x18] sm:$0xe]
        %v1160 = vld [vmem:[%s721 + $0x24] sm:$0xe]
        %v1161 = vld [vmem:[%s721 + $0x30] sm:$0xe]
        %v1162 = vld [vmem:[%s721 + $0x3c] sm:$0xe]
        %v1163 = vld [vmem:[%s721 + $0x48] sm:$0xe]
        %v1164 = vld [vmem:[%s721 + $0x54] sm:$0xe]
        %v1165 = vld [vmem:[%s721 + $0x60] sm:$0xe]
        %v1166 = vld [vmem:[%s721 + $0x6c] sm:$0xe]
        %v1167 = vld [vmem:[%s721 + $0x78] sm:$0xe]
        %v1168 = vld [vmem:[%s721 + $0x84] sm:$0xe]
        %v1169 = vld [vmem:[%s721 + $0x90] sm:$0xe]
        %v1170 = vld [vmem:[%s721 + $0x9c] sm:$0xe]
        %v1171 = vld [vmem:[%s721 + $0xa8] sm:$0xe]
        %v1172 = vld [vmem:[%s721 + $0xb4] sm:$0xe]
        %vm1221 = vcmask 1042432
        %vm1222 = vcmask 1046532
        %vm1223 = vmor %vm1221, %vm1222
        %v1224 = vrot.slane %v1157, 5
        %v1225 = vrot.slane %v1224, 4
        %v1226 = vrot.slane %v723, 5
        %v1227 = vsel %vm1223, %v1225, %v1226
        %v1228 = vrot.slane %v1226, 4
        %v1229 = vrot.slane %v754, 5
        %v1230 = vsel %vm1223, %v1228, %v1229
        %v1231 = vrot.slane %v1158, 5
        %v1232 = vrot.slane %v1231, 4
        %v1233 = vrot.slane %v725, 5
        %v1234 = vsel %vm1223, %v1232, %v1233
        %v1235 = vrot.slane %v1233, 4
        %v1236 = vrot.slane %v755, 5
        %v1237 = vsel %vm1223, %v1235, %v1236
        %v1238 = vrot.slane %v1159, 5
        %v1239 = vrot.slane %v1238, 4
        %v1240 = vrot.slane %v727, 5
        %v1241 = vsel %vm1223, %v1239, %v1240
        %v1242 = vrot.slane %v1240, 4
        %v1243 = vrot.slane %v756, 5
        %v1244 = vsel %vm1223, %v1242, %v1243
        %v1245 = vrot.slane %v1160, 5
        %v1246 = vrot.slane %v1245, 4
        %v1247 = vrot.slane %v729, 5
        %v1248 = vsel %vm1223, %v1246, %v1247
        %v1249 = vrot.slane %v1247, 4
        %v1250 = vrot.slane %v757, 5
        %v1251 = vsel %vm1223, %v1249, %v1250
        %v1252 = vrot.slane %v1161, 5
        %v1253 = vrot.slane %v1252, 4
        %v1254 = vrot.slane %v731, 5
        %v1255 = vsel %vm1223, %v1253, %v1254
        %v1256 = vrot.slane %v1254, 4
        %v1257 = vrot.slane %v758, 5
        %v1258 = vsel %vm1223, %v1256, %v1257
        %v1259 = vrot.slane %v1162, 5
        %v1260 = vrot.slane %v1259, 4
        %v1261 = vrot.slane %v733, 5
        %v1262 = vsel %vm1223, %v1260, %v1261
        %v1263 = vrot.slane %v1261, 4
        %v1264 = vrot.slane %v759, 5
        %v1265 = vsel %vm1223, %v1263, %v1264
        %v1266 = vrot.slane %v1163, 5
        %v1267 = vrot.slane %v1266, 4
        %v1268 = vrot.slane %v735, 5
        %v1269 = vsel %vm1223, %v1267, %v1268
        %v1270 = vrot.slane %v1268, 4
        %v1271 = vrot.slane %v760, 5
        %v1272 = vsel %vm1223, %v1270, %v1271
        %v1273 = vrot.slane %v1164, 5
        %v1274 = vrot.slane %v1273, 4
        %v1275 = vrot.slane %v737, 5
        %v1276 = vsel %vm1223, %v1274, %v1275
        %v1277 = vrot.slane %v1275, 4
        %v1278 = vrot.slane %v761, 5
        %v1279 = vsel %vm1223, %v1277, %v1278
        %v1280 = vrot.slane %v1165, 5
        %v1281 = vrot.slane %v1280, 4
        %v1282 = vrot.slane %v739, 5
        %v1283 = vsel %vm1223, %v1281, %v1282
        %v1284 = vrot.slane %v1282, 4
        %v1285 = vrot.slane %v762, 5
        %v1286 = vsel %vm1223, %v1284, %v1285
        %v1287 = vrot.slane %v1166, 5
        %v1288 = vrot.slane %v1287, 4
        %v1289 = vrot.slane %v741, 5
        %v1290 = vsel %vm1223, %v1288, %v1289
        %v1291 = vrot.slane %v1289, 4
        %v1292 = vrot.slane %v763, 5
        %v1293 = vsel %vm1223, %v1291, %v1292
        %v1294 = vrot.slane %v1167, 5
        %v1295 = vrot.slane %v1294, 4
        %v1296 = vrot.slane %v743, 5
        %v1297 = vsel %vm1223, %v1295, %v1296
        %v1298 = vrot.slane %v1296, 4
        %v1299 = vrot.slane %v764, 5
        %v1300 = vsel %vm1223, %v1298, %v1299
        %v1301 = vrot.slane %v1168, 5
        %v1302 = vrot.slane %v1301, 4
        %v1303 = vrot.slane %v745, 5
        %v1304 = vsel %vm1223, %v1302, %v1303
        %v1305 = vrot.slane %v1303, 4
        %v1306 = vrot.slane %v765, 5
        %v1307 = vsel %vm1223, %v1305, %v1306
        %v1308 = vrot.slane %v1169, 5
        %v1309 = vrot.slane %v1308, 4
        %v1310 = vrot.slane %v747, 5
        %v1311 = vsel %vm1223, %v1309, %v1310
        %v1312 = vrot.slane %v1310, 4
        %v1313 = vrot.slane %v766, 5
        %v1314 = vsel %vm1223, %v1312, %v1313
        %v1315 = vrot.slane %v1170, 5
        %v1316 = vrot.slane %v1315, 4
        %v1317 = vrot.slane %v749, 5
        %v1318 = vsel %vm1223, %v1316, %v1317
        %v1319 = vrot.slane %v1317, 4
        %v1320 = vrot.slane %v767, 5
        %v1321 = vsel %vm1223, %v1319, %v1320
        %v1322 = vrot.slane %v1171, 5
        %v1323 = vrot.slane %v1322, 4
        %v1324 = vrot.slane %v751, 5
        %v1325 = vsel %vm1223, %v1323, %v1324
        %v1326 = vrot.slane %v1324, 4
        %v1327 = vrot.slane %v768, 5
        %v1328 = vsel %vm1223, %v1326, %v1327
        %v1329 = vrot.slane %v1172, 5
        %v1330 = vrot.slane %v1329, 4
        %v1331 = vrot.slane %v753, 5
        %v1332 = vsel %vm1223, %v1330, %v1331
        %v1333 = vrot.slane %v1331, 4
        %v1334 = vrot.slane %v769, 5
        %v1335 = vsel %vm1223, %v1333, %v1334
        %s1336 = sadd.s32 %s718, 1
        %s1337 = smul.u32 %s1336, 3
        %s1338 = smul.addr %s1337, 4
        %s1339 = scalar_lea.vmem [#allocation2], %s1338
        %v1340 = vld [vmem:[%s1339] sm:$0xf]
        %v1341 = vld [vmem:[%s1339 + $0x4] sm:$0xf]
        %v1342 = vld [vmem:[%s1339 + $0xc] sm:$0xf]
        %v1343 = vld [vmem:[%s1339 + $0x10] sm:$0xf]
        %v1344 = vld [vmem:[%s1339 + $0x18] sm:$0xf]
        %v1345 = vld [vmem:[%s1339 + $0x1c] sm:$0xf]
        %v1346 = vld [vmem:[%s1339 + $0x24] sm:$0xf]
        %v1347 = vld [vmem:[%s1339 + $0x28] sm:$0xf]
        %v1348 = vld [vmem:[%s1339 + $0x30] sm:$0xf]
        %v1349 = vld [vmem:[%s1339 + $0x34] sm:$0xf]
        %v1350 = vld [vmem:[%s1339 + $0x3c] sm:$0xf]
        %v1351 = vld [vmem:[%s1339 + $0x40] sm:$0xf]
        %v1352 = vld [vmem:[%s1339 + $0x48] sm:$0xf]
        %v1353 = vld [vmem:[%s1339 + $0x4c] sm:$0xf]
        %v1354 = vld [vmem:[%s1339 + $0x54] sm:$0xf]
        %v1355 = vld [vmem:[%s1339 + $0x58] sm:$0xf]
        %v1356 = vld [vmem:[%s1339 + $0x60] sm:$0xf]
        %v1357 = vld [vmem:[%s1339 + $0x64] sm:$0xf]
        %v1358 = vld [vmem:[%s1339 + $0x6c] sm:$0xf]
        %v1359 = vld [vmem:[%s1339 + $0x70] sm:$0xf]
        %v1360 = vld [vmem:[%s1339 + $0x78] sm:$0xf]
        %v1361 = vld [vmem:[%s1339 + $0x7c] sm:$0xf]
        %v1362 = vld [vmem:[%s1339 + $0x84] sm:$0xf]
        %v1363 = vld [vmem:[%s1339 + $0x88] sm:$0xf]
        %v1364 = vld [vmem:[%s1339 + $0x90] sm:$0xf]
        %v1365 = vld [vmem:[%s1339 + $0x94] sm:$0xf]
        %v1366 = vld [vmem:[%s1339 + $0x9c] sm:$0xf]
        %v1367 = vld [vmem:[%s1339 + $0xa0] sm:$0xf]
        %v1368 = vld [vmem:[%s1339 + $0xa8] sm:$0xf]
        %v1369 = vld [vmem:[%s1339 + $0xac] sm:$0xf]
        %v1370 = vld [vmem:[%s1339 + $0xb4] sm:$0xf]
        %v1371 = vld [vmem:[%s1339 + $0xb8] sm:$0xf]
        %v1372 = vld [vmem:[%s1339 + $0x8] sm:$0x1]
        %v1373 = vld [vmem:[%s1339 + $0x14] sm:$0x1]
        %v1374 = vld [vmem:[%s1339 + $0x20] sm:$0x1]
        %v1375 = vld [vmem:[%s1339 + $0x2c] sm:$0x1]
        %v1376 = vld [vmem:[%s1339 + $0x38] sm:$0x1]
        %v1377 = vld [vmem:[%s1339 + $0x44] sm:$0x1]
        %v1378 = vld [vmem:[%s1339 + $0x50] sm:$0x1]
        %v1379 = vld [vmem:[%s1339 + $0x5c] sm:$0x1]
        %v1380 = vld [vmem:[%s1339 + $0x68] sm:$0x1]
        %v1381 = vld [vmem:[%s1339 + $0x74] sm:$0x1]
        %v1382 = vld [vmem:[%s1339 + $0x80] sm:$0x1]
        %v1383 = vld [vmem:[%s1339 + $0x8c] sm:$0x1]
        %v1384 = vld [vmem:[%s1339 + $0x98] sm:$0x1]
        %v1385 = vld [vmem:[%s1339 + $0xa4] sm:$0x1]
        %v1386 = vld [vmem:[%s1339 + $0xb0] sm:$0x1]
        %v1387 = vld [vmem:[%s1339 + $0xbc] sm:$0x1]
        %v1389 = vshrl.u32 %v1340, 16
        %v1391 = vrot.slane %v1389, 4
        %v1392 = vshll.u32 %v1340, 16
        %v1394 = vrot.slane %v1392, 5
        %v1395 = vor.u32 %v1391, %v1394
        %v1396 = vrot.slane %v1395, 4
        %v1398 = vshll.u32 %v1341, 16
        %v1400 = vrot.slane %v1398, 5
        %v1401 = vsel %vm772, %v1396, %v1400
        %v1402 = vshrl.u32 %v1341, 16
        %v1404 = vrot.slane %v1402, 4
        %v1405 = vor.u32 %v1404, %v1400
        %v1406 = vrot.slane %v1405, 4
        %v1408 = vshll.u32 %v1372, 16
        %v1410 = vrot.slane %v1408, 5
        %v1411 = vsel %vm772, %v1406, %v1410
        %v1413 = vshrl.u32 %v1342, 16
        %v1415 = vrot.slane %v1413, 4
        %v1416 = vshll.u32 %v1342, 16
        %v1418 = vrot.slane %v1416, 5
        %v1419 = vor.u32 %v1415, %v1418
        %v1420 = vrot.slane %v1419, 4
        %v1422 = vshll.u32 %v1343, 16
        %v1424 = vrot.slane %v1422, 5
        %v1425 = vsel %vm772, %v1420, %v1424
        %v1426 = vshrl.u32 %v1343, 16
        %v1428 = vrot.slane %v1426, 4
        %v1429 = vor.u32 %v1428, %v1424
        %v1430 = vrot.slane %v1429, 4
        %v1432 = vshll.u32 %v1373, 16
        %v1434 = vrot.slane %v1432, 5
        %v1435 = vsel %vm772, %v1430, %v1434
        %v1437 = vshrl.u32 %v1344, 16
        %v1439 = vrot.slane %v1437, 4
        %v1440 = vshll.u32 %v1344, 16
        %v1442 = vrot.slane %v1440, 5
        %v1443 = vor.u32 %v1439, %v1442
        %v1444 = vrot.slane %v1443, 4
        %v1446 = vshll.u32 %v1345, 16
        %v1448 = vrot.slane %v1446, 5
        %v1449 = vsel %vm772, %v1444, %v1448
        %v1450 = vshrl.u32 %v1345, 16
        %v1452 = vrot.slane %v1450, 4
        %v1453 = vor.u32 %v1452, %v1448
        %v1454 = vrot.slane %v1453, 4
        %v1456 = vshll.u32 %v1374, 16
        %v1458 = vrot.slane %v1456, 5
        %v1459 = vsel %vm772, %v1454, %v1458
        %v1461 = vshrl.u32 %v1346, 16
        %v1463 = vrot.slane %v1461, 4
        %v1464 = vshll.u32 %v1346, 16
        %v1466 = vrot.slane %v1464, 5
        %v1467 = vor.u32 %v1463, %v1466
        %v1468 = vrot.slane %v1467, 4
        %v1470 = vshll.u32 %v1347, 16
        %v1472 = vrot.slane %v1470, 5
        %v1473 = vsel %vm772, %v1468, %v1472
        %v1474 = vshrl.u32 %v1347, 16
        %v1476 = vrot.slane %v1474, 4
        %v1477 = vor.u32 %v1476, %v1472
        %v1478 = vrot.slane %v1477, 4
        %v1480 = vshll.u32 %v1375, 16
        %v1482 = vrot.slane %v1480, 5
        %v1483 = vsel %vm772, %v1478, %v1482
        %v1485 = vshrl.u32 %v1348, 16
        %v1487 = vrot.slane %v1485, 4
        %v1488 = vshll.u32 %v1348, 16
        %v1490 = vrot.slane %v1488, 5
        %v1491 = vor.u32 %v1487, %v1490
        %v1492 = vrot.slane %v1491, 4
        %v1494 = vshll.u32 %v1349, 16
        %v1496 = vrot.slane %v1494, 5
        %v1497 = vsel %vm772, %v1492, %v1496
        %v1498 = vshrl.u32 %v1349, 16
        %v1500 = vrot.slane %v1498, 4
        %v1501 = vor.u32 %v1500, %v1496
        %v1502 = vrot.slane %v1501, 4
        %v1504 = vshll.u32 %v1376, 16
        %v1506 = vrot.slane %v1504, 5
        %v1507 = vsel %vm772, %v1502, %v1506
        %v1509 = vshrl.u32 %v1350, 16
        %v1511 = vrot.slane %v1509, 4
        %v1512 = vshll.u32 %v1350, 16
        %v1514 = vrot.slane %v1512, 5
        %v1515 = vor.u32 %v1511, %v1514
        %v1516 = vrot.slane %v1515, 4
        %v1518 = vshll.u32 %v1351, 16
        %v1520 = vrot.slane %v1518, 5
        %v1521 = vsel %vm772, %v1516, %v1520
        %v1522 = vshrl.u32 %v1351, 16
        %v1524 = vrot.slane %v1522, 4
        %v1525 = vor.u32 %v1524, %v1520
        %v1526 = vrot.slane %v1525, 4
        %v1528 = vshll.u32 %v1377, 16
        %v1530 = vrot.slane %v1528, 5
        %v1531 = vsel %vm772, %v1526, %v1530
        %v1533 = vshrl.u32 %v1352, 16
        %v1535 = vrot.slane %v1533, 4
        %v1536 = vshll.u32 %v1352, 16
        %v1538 = vrot.slane %v1536, 5
        %v1539 = vor.u32 %v1535, %v1538
        %v1540 = vrot.slane %v1539, 4
        %v1542 = vshll.u32 %v1353, 16
        %v1544 = vrot.slane %v1542, 5
        %v1545 = vsel %vm772, %v1540, %v1544
        %v1546 = vshrl.u32 %v1353, 16
        %v1548 = vrot.slane %v1546, 4
        %v1549 = vor.u32 %v1548, %v1544
        %v1550 = vrot.slane %v1549, 4
        %v1552 = vshll.u32 %v1378, 16
        %v1554 = vrot.slane %v1552, 5
        %v1555 = vsel %vm772, %v1550, %v1554
        %v1557 = vshrl.u32 %v1354, 16
        %v1559 = vrot.slane %v1557, 4
        %v1560 = vshll.u32 %v1354, 16
        %v1562 = vrot.slane %v1560, 5
        %v1563 = vor.u32 %v1559, %v1562
        %v1564 = vrot.slane %v1563, 4
        %v1566 = vshll.u32 %v1355, 16
        %v1568 = vrot.slane %v1566, 5
        %v1569 = vsel %vm772, %v1564, %v1568
        %v1570 = vshrl.u32 %v1355, 16
        %v1572 = vrot.slane %v1570, 4
        %v1573 = vor.u32 %v1572, %v1568
        %v1574 = vrot.slane %v1573, 4
        %v1576 = vshll.u32 %v1379, 16
        %v1578 = vrot.slane %v1576, 5
        %v1579 = vsel %vm772, %v1574, %v1578
        %v1581 = vshrl.u32 %v1356, 16
        %v1583 = vrot.slane %v1581, 4
        %v1584 = vshll.u32 %v1356, 16
        %v1586 = vrot.slane %v1584, 5
        %v1587 = vor.u32 %v1583, %v1586
        %v1588 = vrot.slane %v1587, 4
        %v1590 = vshll.u32 %v1357, 16
        %v1592 = vrot.slane %v1590, 5
        %v1593 = vsel %vm772, %v1588, %v1592
        %v1594 = vshrl.u32 %v1357, 16
        %v1596 = vrot.slane %v1594, 4
        %v1597 = vor.u32 %v1596, %v1592
        %v1598 = vrot.slane %v1597, 4
        %v1600 = vshll.u32 %v1380, 16
        %v1602 = vrot.slane %v1600, 5
        %v1603 = vsel %vm772, %v1598, %v1602
        %v1605 = vshrl.u32 %v1358, 16
        %v1607 = vrot.slane %v1605, 4
        %v1608 = vshll.u32 %v1358, 16
        %v1610 = vrot.slane %v1608, 5
        %v1611 = vor.u32 %v1607, %v1610
        %v1612 = vrot.slane %v1611, 4
        %v1614 = vshll.u32 %v1359, 16
        %v1616 = vrot.slane %v1614, 5
        %v1617 = vsel %vm772, %v1612, %v1616
        %v1618 = vshrl.u32 %v1359, 16
        %v1620 = vrot.slane %v1618, 4
        %v1621 = vor.u32 %v1620, %v1616
        %v1622 = vrot.slane %v1621, 4
        %v1624 = vshll.u32 %v1381, 16
        %v1626 = vrot.slane %v1624, 5
        %v1627 = vsel %vm772, %v1622, %v1626
        %v1629 = vshrl.u32 %v1360, 16
        %v1631 = vrot.slane %v1629, 4
        %v1632 = vshll.u32 %v1360, 16
        %v1634 = vrot.slane %v1632, 5
        %v1635 = vor.u32 %v1631, %v1634
        %v1636 = vrot.slane %v1635, 4
        %v1638 = vshll.u32 %v1361, 16
        %v1640 = vrot.slane %v1638, 5
        %v1641 = vsel %vm772, %v1636, %v1640
        %v1642 = vshrl.u32 %v1361, 16
        %v1644 = vrot.slane %v1642, 4
        %v1645 = vor.u32 %v1644, %v1640
        %v1646 = vrot.slane %v1645, 4
        %v1648 = vshll.u32 %v1382, 16
        %v1650 = vrot.slane %v1648, 5
        %v1651 = vsel %vm772, %v1646, %v1650
        %v1653 = vshrl.u32 %v1362, 16
        %v1655 = vrot.slane %v1653, 4
        %v1656 = vshll.u32 %v1362, 16
        %v1658 = vrot.slane %v1656, 5
        %v1659 = vor.u32 %v1655, %v1658
        %v1660 = vrot.slane %v1659, 4
        %v1662 = vshll.u32 %v1363, 16
        %v1664 = vrot.slane %v1662, 5
        %v1665 = vsel %vm772, %v1660, %v1664
        %v1666 = vshrl.u32 %v1363, 16
        %v1668 = vrot.slane %v1666, 4
        %v1669 = vor.u32 %v1668, %v1664
        %v1670 = vrot.slane %v1669, 4
        %v1672 = vshll.u32 %v1383, 16
        %v1674 = vrot.slane %v1672, 5
        %v1675 = vsel %vm772, %v1670, %v1674
        %v1677 = vshrl.u32 %v1364, 16
        %v1679 = vrot.slane %v1677, 4
        %v1680 = vshll.u32 %v1364, 16
        %v1682 = vrot.slane %v1680, 5
        %v1683 = vor.u32 %v1679, %v1682
        %v1684 = vrot.slane %v1683, 4
        %v1686 = vshll.u32 %v1365, 16
        %v1688 = vrot.slane %v1686, 5
        %v1689 = vsel %vm772, %v1684, %v1688
        %v1690 = vshrl.u32 %v1365, 16
        %v1692 = vrot.slane %v1690, 4
        %v1693 = vor.u32 %v1692, %v1688
        %v1694 = vrot.slane %v1693, 4
        %v1696 = vshll.u32 %v1384, 16
        %v1698 = vrot.slane %v1696, 5
        %v1699 = vsel %vm772, %v1694, %v1698
        %v1701 = vshrl.u32 %v1366, 16
        %v1703 = vrot.slane %v1701, 4
        %v1704 = vshll.u32 %v1366, 16
        %v1706 = vrot.slane %v1704, 5
        %v1707 = vor.u32 %v1703, %v1706
        %v1708 = vrot.slane %v1707, 4
        %v1710 = vshll.u32 %v1367, 16
        %v1712 = vrot.slane %v1710, 5
        %v1713 = vsel %vm772, %v1708, %v1712
        %v1714 = vshrl.u32 %v1367, 16
        %v1716 = vrot.slane %v1714, 4
        %v1717 = vor.u32 %v1716, %v1712
        %v1718 = vrot.slane %v1717, 4
        %v1720 = vshll.u32 %v1385, 16
        %v1722 = vrot.slane %v1720, 5
        %v1723 = vsel %vm772, %v1718, %v1722
        %v1725 = vshrl.u32 %v1368, 16
        %v1727 = vrot.slane %v1725, 4
        %v1728 = vshll.u32 %v1368, 16
        %v1730 = vrot.slane %v1728, 5
        %v1731 = vor.u32 %v1727, %v1730
        %v1732 = vrot.slane %v1731, 4
        %v1734 = vshll.u32 %v1369, 16
        %v1736 = vrot.slane %v1734, 5
        %v1737 = vsel %vm772, %v1732, %v1736
        %v1738 = vshrl.u32 %v1369, 16
        %v1740 = vrot.slane %v1738, 4
        %v1741 = vor.u32 %v1740, %v1736
        %v1742 = vrot.slane %v1741, 4
        %v1744 = vshll.u32 %v1386, 16
        %v1746 = vrot.slane %v1744, 5
        %v1747 = vsel %vm772, %v1742, %v1746
        %v1749 = vshrl.u32 %v1370, 16
        %v1751 = vrot.slane %v1749, 4
        %v1752 = vshll.u32 %v1370, 16
        %v1754 = vrot.slane %v1752, 5
        %v1755 = vor.u32 %v1751, %v1754
        %v1756 = vrot.slane %v1755, 4
        %v1758 = vshll.u32 %v1371, 16
        %v1760 = vrot.slane %v1758, 5
        %v1761 = vsel %vm772, %v1756, %v1760
        %v1762 = vshrl.u32 %v1371, 16
        %v1764 = vrot.slane %v1762, 4
        %v1765 = vor.u32 %v1764, %v1760
        %v1766 = vrot.slane %v1765, 4
        %v1768 = vshll.u32 %v1387, 16
        %v1770 = vrot.slane %v1768, 5
        %v1771 = vsel %vm772, %v1766, %v1770
        %v1772 = vld [vmem:[%s1339] sm:$0xe]
        %v1773 = vld [vmem:[%s1339 + $0xc] sm:$0xe]
        %v1774 = vld [vmem:[%s1339 + $0x18] sm:$0xe]
        %v1775 = vld [vmem:[%s1339 + $0x24] sm:$0xe]
        %v1776 = vld [vmem:[%s1339 + $0x30] sm:$0xe]
        %v1777 = vld [vmem:[%s1339 + $0x3c] sm:$0xe]
        %v1778 = vld [vmem:[%s1339 + $0x48] sm:$0xe]
        %v1779 = vld [vmem:[%s1339 + $0x54] sm:$0xe]
        %v1780 = vld [vmem:[%s1339 + $0x60] sm:$0xe]
        %v1781 = vld [vmem:[%s1339 + $0x6c] sm:$0xe]
        %v1782 = vld [vmem:[%s1339 + $0x78] sm:$0xe]
        %v1783 = vld [vmem:[%s1339 + $0x84] sm:$0xe]
        %v1784 = vld [vmem:[%s1339 + $0x90] sm:$0xe]
        %v1785 = vld [vmem:[%s1339 + $0x9c] sm:$0xe]
        %v1786 = vld [vmem:[%s1339 + $0xa8] sm:$0xe]
        %v1787 = vld [vmem:[%s1339 + $0xb4] sm:$0xe]
        %v1836 = vrot.slane %v1772, 5
        %v1837 = vrot.slane %v1836, 4
        %v1838 = vrot.slane %v1341, 5
        %v1839 = vsel %vm1223, %v1837, %v1838
        %v1840 = vrot.slane %v1838, 4
        %v1841 = vrot.slane %v1372, 5
        %v1842 = vsel %vm1223, %v1840, %v1841
        %v1843 = vrot.slane %v1773, 5
        %v1844 = vrot.slane %v1843, 4
        %v1845 = vrot.slane %v1343, 5
        %v1846 = vsel %vm1223, %v1844, %v1845
        %v1847 = vrot.slane %v1845, 4
        %v1848 = vrot.slane %v1373, 5
        %v1849 = vsel %vm1223, %v1847, %v1848
        %v1850 = vrot.slane %v1774, 5
        %v1851 = vrot.slane %v1850, 4
        %v1852 = vrot.slane %v1345, 5
        %v1853 = vsel %vm1223, %v1851, %v1852
        %v1854 = vrot.slane %v1852, 4
        %v1855 = vrot.slane %v1374, 5
        %v1856 = vsel %vm1223, %v1854, %v1855
        %v1857 = vrot.slane %v1775, 5
        %v1858 = vrot.slane %v1857, 4
        %v1859 = vrot.slane %v1347, 5
        %v1860 = vsel %vm1223, %v1858, %v1859
        %v1861 = vrot.slane %v1859, 4
        %v1862 = vrot.slane %v1375, 5
        %v1863 = vsel %vm1223, %v1861, %v1862
        %v1864 = vrot.slane %v1776, 5
        %v1865 = vrot.slane %v1864, 4
        %v1866 = vrot.slane %v1349, 5
        %v1867 = vsel %vm1223, %v1865, %v1866
        %v1868 = vrot.slane %v1866, 4
        %v1869 = vrot.slane %v1376, 5
        %v1870 = vsel %vm1223, %v1868, %v1869
        %v1871 = vrot.slane %v1777, 5
        %v1872 = vrot.slane %v1871, 4
        %v1873 = vrot.slane %v1351, 5
        %v1874 = vsel %vm1223, %v1872, %v1873
        %v1875 = vrot.slane %v1873, 4
        %v1876 = vrot.slane %v1377, 5
        %v1877 = vsel %vm1223, %v1875, %v1876
        %v1878 = vrot.slane %v1778, 5
        %v1879 = vrot.slane %v1878, 4
        %v1880 = vrot.slane %v1353, 5
        %v1881 = vsel %vm1223, %v1879, %v1880
        %v1882 = vrot.slane %v1880, 4
        %v1883 = vrot.slane %v1378, 5
        %v1884 = vsel %vm1223, %v1882, %v1883
        %v1885 = vrot.slane %v1779, 5
        %v1886 = vrot.slane %v1885, 4
        %v1887 = vrot.slane %v1355, 5
        %v1888 = vsel %vm1223, %v1886, %v1887
        %v1889 = vrot.slane %v1887, 4
        %v1890 = vrot.slane %v1379, 5
        %v1891 = vsel %vm1223, %v1889, %v1890
        %v1892 = vrot.slane %v1780, 5
        %v1893 = vrot.slane %v1892, 4
        %v1894 = vrot.slane %v1357, 5
        %v1895 = vsel %vm1223, %v1893, %v1894
        %v1896 = vrot.slane %v1894, 4
        %v1897 = vrot.slane %v1380, 5
        %v1898 = vsel %vm1223, %v1896, %v1897
        %v1899 = vrot.slane %v1781, 5
        %v1900 = vrot.slane %v1899, 4
        %v1901 = vrot.slane %v1359, 5
        %v1902 = vsel %vm1223, %v1900, %v1901
        %v1903 = vrot.slane %v1901, 4
        %v1904 = vrot.slane %v1381, 5
        %v1905 = vsel %vm1223, %v1903, %v1904
        %v1906 = vrot.slane %v1782, 5
        %v1907 = vrot.slane %v1906, 4
        %v1908 = vrot.slane %v1361, 5
        %v1909 = vsel %vm1223, %v1907, %v1908
        %v1910 = vrot.slane %v1908, 4
        %v1911 = vrot.slane %v1382, 5
        %v1912 = vsel %vm1223, %v1910, %v1911
        %v1913 = vrot.slane %v1783, 5
        %v1914 = vrot.slane %v1913, 4
        %v1915 = vrot.slane %v1363, 5
        %v1916 = vsel %vm1223, %v1914, %v1915
        %v1917 = vrot.slane %v1915, 4
        %v1918 = vrot.slane %v1383, 5
        %v1919 = vsel %vm1223, %v1917, %v1918
        %v1920 = vrot.slane %v1784, 5
        %v1921 = vrot.slane %v1920, 4
        %v1922 = vrot.slane %v1365, 5
        %v1923 = vsel %vm1223, %v1921, %v1922
        %v1924 = vrot.slane %v1922, 4
        %v1925 = vrot.slane %v1384, 5
        %v1926 = vsel %vm1223, %v1924, %v1925
        %v1927 = vrot.slane %v1785, 5
        %v1928 = vrot.slane %v1927, 4
        %v1929 = vrot.slane %v1367, 5
        %v1930 = vsel %vm1223, %v1928, %v1929
        %v1931 = vrot.slane %v1929, 4
        %v1932 = vrot.slane %v1385, 5
        %v1933 = vsel %vm1223, %v1931, %v1932
        %v1934 = vrot.slane %v1786, 5
        %v1935 = vrot.slane %v1934, 4
        %v1936 = vrot.slane %v1369, 5
        %v1937 = vsel %vm1223, %v1935, %v1936
        %v1938 = vrot.slane %v1936, 4
        %v1939 = vrot.slane %v1386, 5
        %v1940 = vsel %vm1223, %v1938, %v1939
        %v1941 = vrot.slane %v1787, 5
        %v1942 = vrot.slane %v1941, 4
        %v1943 = vrot.slane %v1371, 5
        %v1944 = vsel %vm1223, %v1942, %v1943
        %v1945 = vrot.slane %v1943, 4
        %v1946 = vrot.slane %v1387, 5
        %v1947 = vsel %vm1223, %v1945, %v1946
        %s1948 = sadd.s32 %s718, 2
        %s1949 = smul.u32 %s1948, 3
        %s1950 = smul.addr %s1949, 4
        %s1951 = scalar_lea.vmem [#allocation2], %s1950
        %v1952 = vld [vmem:[%s1951] sm:$0xf]
        %v1953 = vld [vmem:[%s1951 + $0x4] sm:$0xf]
        %v1954 = vld [vmem:[%s1951 + $0xc] sm:$0xf]
        %v1955 = vld [vmem:[%s1951 + $0x10] sm:$0xf]
        %v1956 = vld [vmem:[%s1951 + $0x18] sm:$0xf]
        %v1957 = vld [vmem:[%s1951 + $0x1c] sm:$0xf]
        %v1958 = vld [vmem:[%s1951 + $0x24] sm:$0xf]
        %v1959 = vld [vmem:[%s1951 + $0x28] sm:$0xf]
        %v1960 = vld [vmem:[%s1951 + $0x30] sm:$0xf]
        %v1961 = vld [vmem:[%s1951 + $0x34] sm:$0xf]
        %v1962 = vld [vmem:[%s1951 + $0x3c] sm:$0xf]
        %v1963 = vld [vmem:[%s1951 + $0x40] sm:$0xf]
        %v1964 = vld [vmem:[%s1951 + $0x48] sm:$0xf]
        %v1965 = vld [vmem:[%s1951 + $0x4c] sm:$0xf]
        %v1966 = vld [vmem:[%s1951 + $0x54] sm:$0xf]
        %v1967 = vld [vmem:[%s1951 + $0x58] sm:$0xf]
        %v1968 = vld [vmem:[%s1951 + $0x60] sm:$0xf]
        %v1969 = vld [vmem:[%s1951 + $0x64] sm:$0xf]
        %v1970 = vld [vmem:[%s1951 + $0x6c] sm:$0xf]
        %v1971 = vld [vmem:[%s1951 + $0x70] sm:$0xf]
        %v1972 = vld [vmem:[%s1951 + $0x78] sm:$0xf]
        %v1973 = vld [vmem:[%s1951 + $0x7c] sm:$0xf]
        %v1974 = vld [vmem:[%s1951 + $0x84] sm:$0xf]
        %v1975 = vld [vmem:[%s1951 + $0x88] sm:$0xf]
        %v1976 = vld [vmem:[%s1951 + $0x90] sm:$0xf]
        %v1977 = vld [vmem:[%s1951 + $0x94] sm:$0xf]
        %v1978 = vld [vmem:[%s1951 + $0x9c] sm:$0xf]
        %v1979 = vld [vmem:[%s1951 + $0xa0] sm:$0xf]
        %v1980 = vld [vmem:[%s1951 + $0xa8] sm:$0xf]
        %v1981 = vld [vmem:[%s1951 + $0xac] sm:$0xf]
        %v1982 = vld [vmem:[%s1951 + $0xb4] sm:$0xf]
        %v1983 = vld [vmem:[%s1951 + $0xb8] sm:$0xf]
        %v1984 = vld [vmem:[%s1951 + $0x8] sm:$0x1]
        %v1985 = vld [vmem:[%s1951 + $0x14] sm:$0x1]
        %v1986 = vld [vmem:[%s1951 + $0x20] sm:$0x1]
        %v1987 = vld [vmem:[%s1951 + $0x2c] sm:$0x1]
        %v1988 = vld [vmem:[%s1951 + $0x38] sm:$0x1]
        %v1989 = vld [vmem:[%s1951 + $0x44] sm:$0x1]
        %v1990 = vld [vmem:[%s1951 + $0x50] sm:$0x1]
        %v1991 = vld [vmem:[%s1951 + $0x5c] sm:$0x1]
        %v1992 = vld [vmem:[%s1951 + $0x68] sm:$0x1]
        %v1993 = vld [vmem:[%s1951 + $0x74] sm:$0x1]
        %v1994 = vld [vmem:[%s1951 + $0x80] sm:$0x1]
        %v1995 = vld [vmem:[%s1951 + $0x8c] sm:$0x1]
        %v1996 = vld [vmem:[%s1951 + $0x98] sm:$0x1]
        %v1997 = vld [vmem:[%s1951 + $0xa4] sm:$0x1]
        %v1998 = vld [vmem:[%s1951 + $0xb0] sm:$0x1]
        %v1999 = vld [vmem:[%s1951 + $0xbc] sm:$0x1]
        %v2001 = vshrl.u32 %v1952, 16
        %v2003 = vrot.slane %v2001, 4
        %v2004 = vshll.u32 %v1952, 16
        %v2006 = vrot.slane %v2004, 5
        %v2007 = vor.u32 %v2003, %v2006
        %v2008 = vrot.slane %v2007, 4
        %v2010 = vshll.u32 %v1953, 16
        %v2012 = vrot.slane %v2010, 5
        %v2013 = vsel %vm772, %v2008, %v2012
        %v2014 = vshrl.u32 %v1953, 16
        %v2016 = vrot.slane %v2014, 4
        %v2017 = vor.u32 %v2016, %v2012
        %v2018 = vrot.slane %v2017, 4
        %v2020 = vshll.u32 %v1984, 16
        %v2022 = vrot.slane %v2020, 5
        %v2023 = vsel %vm772, %v2018, %v2022
        %v2025 = vshrl.u32 %v1954, 16
        %v2027 = vrot.slane %v2025, 4
        %v2028 = vshll.u32 %v1954, 16
        %v2030 = vrot.slane %v2028, 5
        %v2031 = vor.u32 %v2027, %v2030
        %v2032 = vrot.slane %v2031, 4
        %v2034 = vshll.u32 %v1955, 16
        %v2036 = vrot.slane %v2034, 5
        %v2037 = vsel %vm772, %v2032, %v2036
        %v2038 = vshrl.u32 %v1955, 16
        %v2040 = vrot.slane %v2038, 4
        %v2041 = vor.u32 %v2040, %v2036
        %v2042 = vrot.slane %v2041, 4
        %v2044 = vshll.u32 %v1985, 16
        %v2046 = vrot.slane %v2044, 5
        %v2047 = vsel %vm772, %v2042, %v2046
        %v2049 = vshrl.u32 %v1956, 16
        %v2051 = vrot.slane %v2049, 4
        %v2052 = vshll.u32 %v1956, 16
        %v2054 = vrot.slane %v2052, 5
        %v2055 = vor.u32 %v2051, %v2054
        %v2056 = vrot.slane %v2055, 4
        %v2058 = vshll.u32 %v1957, 16
        %v2060 = vrot.slane %v2058, 5
        %v2061 = vsel %vm772, %v2056, %v2060
        %v2062 = vshrl.u32 %v1957, 16
        %v2064 = vrot.slane %v2062, 4
        %v2065 = vor.u32 %v2064, %v2060
        %v2066 = vrot.slane %v2065, 4
        %v2068 = vshll.u32 %v1986, 16
        %v2070 = vrot.slane %v2068, 5
        %v2071 = vsel %vm772, %v2066, %v2070
        %v2073 = vshrl.u32 %v1958, 16
        %v2075 = vrot.slane %v2073, 4
        %v2076 = vshll.u32 %v1958, 16
        %v2078 = vrot.slane %v2076, 5
        %v2079 = vor.u32 %v2075, %v2078
        %v2080 = vrot.slane %v2079, 4
        %v2082 = vshll.u32 %v1959, 16
        %v2084 = vrot.slane %v2082, 5
        %v2085 = vsel %vm772, %v2080, %v2084
        %v2086 = vshrl.u32 %v1959, 16
        %v2088 = vrot.slane %v2086, 4
        %v2089 = vor.u32 %v2088, %v2084
        %v2090 = vrot.slane %v2089, 4
        %v2092 = vshll.u32 %v1987, 16
        %v2094 = vrot.slane %v2092, 5
        %v2095 = vsel %vm772, %v2090, %v2094
        %v2097 = vshrl.u32 %v1960, 16
        %v2099 = vrot.slane %v2097, 4
        %v2100 = vshll.u32 %v1960, 16
        %v2102 = vrot.slane %v2100, 5
        %v2103 = vor.u32 %v2099, %v2102
        %v2104 = vrot.slane %v2103, 4
        %v2106 = vshll.u32 %v1961, 16
        %v2108 = vrot.slane %v2106, 5
        %v2109 = vsel %vm772, %v2104, %v2108
        %v2110 = vshrl.u32 %v1961, 16
        %v2112 = vrot.slane %v2110, 4
        %v2113 = vor.u32 %v2112, %v2108
        %v2114 = vrot.slane %v2113, 4
        %v2116 = vshll.u32 %v1988, 16
        %v2118 = vrot.slane %v2116, 5
        %v2119 = vsel %vm772, %v2114, %v2118
        %v2121 = vshrl.u32 %v1962, 16
        %v2123 = vrot.slane %v2121, 4
        %v2124 = vshll.u32 %v1962, 16
        %v2126 = vrot.slane %v2124, 5
        %v2127 = vor.u32 %v2123, %v2126
        %v2128 = vrot.slane %v2127, 4
        %v2130 = vshll.u32 %v1963, 16
        %v2132 = vrot.slane %v2130, 5
        %v2133 = vsel %vm772, %v2128, %v2132
        %v2134 = vshrl.u32 %v1963, 16
        %v2136 = vrot.slane %v2134, 4
        %v2137 = vor.u32 %v2136, %v2132
        %v2138 = vrot.slane %v2137, 4
        %v2140 = vshll.u32 %v1989, 16
        %v2142 = vrot.slane %v2140, 5
        %v2143 = vsel %vm772, %v2138, %v2142
        %v2145 = vshrl.u32 %v1964, 16
        %v2147 = vrot.slane %v2145, 4
        %v2148 = vshll.u32 %v1964, 16
        %v2150 = vrot.slane %v2148, 5
        %v2151 = vor.u32 %v2147, %v2150
        %v2152 = vrot.slane %v2151, 4
        %v2154 = vshll.u32 %v1965, 16
        %v2156 = vrot.slane %v2154, 5
        %v2157 = vsel %vm772, %v2152, %v2156
        %v2158 = vshrl.u32 %v1965, 16
        %v2160 = vrot.slane %v2158, 4
        %v2161 = vor.u32 %v2160, %v2156
        %v2162 = vrot.slane %v2161, 4
        %v2164 = vshll.u32 %v1990, 16
        %v2166 = vrot.slane %v2164, 5
        %v2167 = vsel %vm772, %v2162, %v2166
        %v2169 = vshrl.u32 %v1966, 16
        %v2171 = vrot.slane %v2169, 4
        %v2172 = vshll.u32 %v1966, 16
        %v2174 = vrot.slane %v2172, 5
        %v2175 = vor.u32 %v2171, %v2174
        %v2176 = vrot.slane %v2175, 4
        %v2178 = vshll.u32 %v1967, 16
        %v2180 = vrot.slane %v2178, 5
        %v2181 = vsel %vm772, %v2176, %v2180
        %v2182 = vshrl.u32 %v1967, 16
        %v2184 = vrot.slane %v2182, 4
        %v2185 = vor.u32 %v2184, %v2180
        %v2186 = vrot.slane %v2185, 4
        %v2188 = vshll.u32 %v1991, 16
        %v2190 = vrot.slane %v2188, 5
        %v2191 = vsel %vm772, %v2186, %v2190
        %v2193 = vshrl.u32 %v1968, 16
        %v2195 = vrot.slane %v2193, 4
        %v2196 = vshll.u32 %v1968, 16
        %v2198 = vrot.slane %v2196, 5
        %v2199 = vor.u32 %v2195, %v2198
        %v2200 = vrot.slane %v2199, 4
        %v2202 = vshll.u32 %v1969, 16
        %v2204 = vrot.slane %v2202, 5
        %v2205 = vsel %vm772, %v2200, %v2204
        %v2206 = vshrl.u32 %v1969, 16
        %v2208 = vrot.slane %v2206, 4
        %v2209 = vor.u32 %v2208, %v2204
        %v2210 = vrot.slane %v2209, 4
        %v2212 = vshll.u32 %v1992, 16
        %v2214 = vrot.slane %v2212, 5
        %v2215 = vsel %vm772, %v2210, %v2214
        %v2217 = vshrl.u32 %v1970, 16
        %v2219 = vrot.slane %v2217, 4
        %v2220 = vshll.u32 %v1970, 16
        %v2222 = vrot.slane %v2220, 5
        %v2223 = vor.u32 %v2219, %v2222
        %v2224 = vrot.slane %v2223, 4
        %v2226 = vshll.u32 %v1971, 16
        %v2228 = vrot.slane %v2226, 5
        %v2229 = vsel %vm772, %v2224, %v2228
        %v2230 = vshrl.u32 %v1971, 16
        %v2232 = vrot.slane %v2230, 4
        %v2233 = vor.u32 %v2232, %v2228
        %v2234 = vrot.slane %v2233, 4
        %v2236 = vshll.u32 %v1993, 16
        %v2238 = vrot.slane %v2236, 5
        %v2239 = vsel %vm772, %v2234, %v2238
        %v2241 = vshrl.u32 %v1972, 16
        %v2243 = vrot.slane %v2241, 4
        %v2244 = vshll.u32 %v1972, 16
        %v2246 = vrot.slane %v2244, 5
        %v2247 = vor.u32 %v2243, %v2246
        %v2248 = vrot.slane %v2247, 4
        %v2250 = vshll.u32 %v1973, 16
        %v2252 = vrot.slane %v2250, 5
        %v2253 = vsel %vm772, %v2248, %v2252
        %v2254 = vshrl.u32 %v1973, 16
        %v2256 = vrot.slane %v2254, 4
        %v2257 = vor.u32 %v2256, %v2252
        %v2258 = vrot.slane %v2257, 4
        %v2260 = vshll.u32 %v1994, 16
        %v2262 = vrot.slane %v2260, 5
        %v2263 = vsel %vm772, %v2258, %v2262
        %v2265 = vshrl.u32 %v1974, 16
        %v2267 = vrot.slane %v2265, 4
        %v2268 = vshll.u32 %v1974, 16
        %v2270 = vrot.slane %v2268, 5
        %v2271 = vor.u32 %v2267, %v2270
        %v2272 = vrot.slane %v2271, 4
        %v2274 = vshll.u32 %v1975, 16
        %v2276 = vrot.slane %v2274, 5
        %v2277 = vsel %vm772, %v2272, %v2276
        %v2278 = vshrl.u32 %v1975, 16
        %v2280 = vrot.slane %v2278, 4
        %v2281 = vor.u32 %v2280, %v2276
        %v2282 = vrot.slane %v2281, 4
        %v2284 = vshll.u32 %v1995, 16
        %v2286 = vrot.slane %v2284, 5
        %v2287 = vsel %vm772, %v2282, %v2286
        %v2289 = vshrl.u32 %v1976, 16
        %v2291 = vrot.slane %v2289, 4
        %v2292 = vshll.u32 %v1976, 16
        %v2294 = vrot.slane %v2292, 5
        %v2295 = vor.u32 %v2291, %v2294
        %v2296 = vrot.slane %v2295, 4
        %v2298 = vshll.u32 %v1977, 16
        %v2300 = vrot.slane %v2298, 5
        %v2301 = vsel %vm772, %v2296, %v2300
        %v2302 = vshrl.u32 %v1977, 16
        %v2304 = vrot.slane %v2302, 4
        %v2305 = vor.u32 %v2304, %v2300
        %v2306 = vrot.slane %v2305, 4
        %v2308 = vshll.u32 %v1996, 16
        %v2310 = vrot.slane %v2308, 5
        %v2311 = vsel %vm772, %v2306, %v2310
        %v2313 = vshrl.u32 %v1978, 16
        %v2315 = vrot.slane %v2313, 4
        %v2316 = vshll.u32 %v1978, 16
        %v2318 = vrot.slane %v2316, 5
        %v2319 = vor.u32 %v2315, %v2318
        %v2320 = vrot.slane %v2319, 4
        %v2322 = vshll.u32 %v1979, 16
        %v2324 = vrot.slane %v2322, 5
        %v2325 = vsel %vm772, %v2320, %v2324
        %v2326 = vshrl.u32 %v1979, 16
        %v2328 = vrot.slane %v2326, 4
        %v2329 = vor.u32 %v2328, %v2324
        %v2330 = vrot.slane %v2329, 4
        %v2332 = vshll.u32 %v1997, 16
        %v2334 = vrot.slane %v2332, 5
        %v2335 = vsel %vm772, %v2330, %v2334
        %v2337 = vshrl.u32 %v1980, 16
        %v2339 = vrot.slane %v2337, 4
        %v2340 = vshll.u32 %v1980, 16
        %v2342 = vrot.slane %v2340, 5
        %v2343 = vor.u32 %v2339, %v2342
        %v2344 = vrot.slane %v2343, 4
        %v2346 = vshll.u32 %v1981, 16
        %v2348 = vrot.slane %v2346, 5
        %v2349 = vsel %vm772, %v2344, %v2348
        %v2350 = vshrl.u32 %v1981, 16
        %v2352 = vrot.slane %v2350, 4
        %v2353 = vor.u32 %v2352, %v2348
        %v2354 = vrot.slane %v2353, 4
        %v2356 = vshll.u32 %v1998, 16
        %v2358 = vrot.slane %v2356, 5
        %v2359 = vsel %vm772, %v2354, %v2358
        %v2361 = vshrl.u32 %v1982, 16
        %v2363 = vrot.slane %v2361, 4
        %v2364 = vshll.u32 %v1982, 16
        %v2366 = vrot.slane %v2364, 5
        %v2367 = vor.u32 %v2363, %v2366
        %v2368 = vrot.slane %v2367, 4
        %v2370 = vshll.u32 %v1983, 16
        %v2372 = vrot.slane %v2370, 5
        %v2373 = vsel %vm772, %v2368, %v2372
        %v2374 = vshrl.u32 %v1983, 16
        %v2376 = vrot.slane %v2374, 4
        %v2377 = vor.u32 %v2376, %v2372
        %v2378 = vrot.slane %v2377, 4
        %v2380 = vshll.u32 %v1999, 16
        %v2382 = vrot.slane %v2380, 5
        %v2383 = vsel %vm772, %v2378, %v2382
        %v2384 = vld [vmem:[%s1951] sm:$0xe]
        %v2385 = vld [vmem:[%s1951 + $0xc] sm:$0xe]
        %v2386 = vld [vmem:[%s1951 + $0x18] sm:$0xe]
        %v2387 = vld [vmem:[%s1951 + $0x24] sm:$0xe]
        %v2388 = vld [vmem:[%s1951 + $0x30] sm:$0xe]
        %v2389 = vld [vmem:[%s1951 + $0x3c] sm:$0xe]
        %v2390 = vld [vmem:[%s1951 + $0x48] sm:$0xe]
        %v2391 = vld [vmem:[%s1951 + $0x54] sm:$0xe]
        %v2392 = vld [vmem:[%s1951 + $0x60] sm:$0xe]
        %v2393 = vld [vmem:[%s1951 + $0x6c] sm:$0xe]
        %v2394 = vld [vmem:[%s1951 + $0x78] sm:$0xe]
        %v2395 = vld [vmem:[%s1951 + $0x84] sm:$0xe]
        %v2396 = vld [vmem:[%s1951 + $0x90] sm:$0xe]
        %v2397 = vld [vmem:[%s1951 + $0x9c] sm:$0xe]
        %v2398 = vld [vmem:[%s1951 + $0xa8] sm:$0xe]
        %v2399 = vld [vmem:[%s1951 + $0xb4] sm:$0xe]
        %v2448 = vrot.slane %v2384, 5
        %v2449 = vrot.slane %v2448, 4
        %v2450 = vrot.slane %v1953, 5
        %v2451 = vsel %vm1223, %v2449, %v2450
        %v2452 = vrot.slane %v2450, 4
        %v2453 = vrot.slane %v1984, 5
        %v2454 = vsel %vm1223, %v2452, %v2453
        %v2455 = vrot.slane %v2385, 5
        %v2456 = vrot.slane %v2455, 4
        %v2457 = vrot.slane %v1955, 5
        %v2458 = vsel %vm1223, %v2456, %v2457
        %v2459 = vrot.slane %v2457, 4
        %v2460 = vrot.slane %v1985, 5
        %v2461 = vsel %vm1223, %v2459, %v2460
        %v2462 = vrot.slane %v2386, 5
        %v2463 = vrot.slane %v2462, 4
        %v2464 = vrot.slane %v1957, 5
        %v2465 = vsel %vm1223, %v2463, %v2464
        %v2466 = vrot.slane %v2464, 4
        %v2467 = vrot.slane %v1986, 5
        %v2468 = vsel %vm1223, %v2466, %v2467
        %v2469 = vrot.slane %v2387, 5
        %v2470 = vrot.slane %v2469, 4
        %v2471 = vrot.slane %v1959, 5
        %v2472 = vsel %vm1223, %v2470, %v2471
        %v2473 = vrot.slane %v2471, 4
        %v2474 = vrot.slane %v1987, 5
        %v2475 = vsel %vm1223, %v2473, %v2474
        %v2476 = vrot.slane %v2388, 5
        %v2477 = vrot.slane %v2476, 4
        %v2478 = vrot.slane %v1961, 5
        %v2479 = vsel %vm1223, %v2477, %v2478
        %v2480 = vrot.slane %v2478, 4
        %v2481 = vrot.slane %v1988, 5
        %v2482 = vsel %vm1223, %v2480, %v2481
        %v2483 = vrot.slane %v2389, 5
        %v2484 = vrot.slane %v2483, 4
        %v2485 = vrot.slane %v1963, 5
        %v2486 = vsel %vm1223, %v2484, %v2485
        %v2487 = vrot.slane %v2485, 4
        %v2488 = vrot.slane %v1989, 5
        %v2489 = vsel %vm1223, %v2487, %v2488
        %v2490 = vrot.slane %v2390, 5
        %v2491 = vrot.slane %v2490, 4
        %v2492 = vrot.slane %v1965, 5
        %v2493 = vsel %vm1223, %v2491, %v2492
        %v2494 = vrot.slane %v2492, 4
        %v2495 = vrot.slane %v1990, 5
        %v2496 = vsel %vm1223, %v2494, %v2495
        %v2497 = vrot.slane %v2391, 5
        %v2498 = vrot.slane %v2497, 4
        %v2499 = vrot.slane %v1967, 5
        %v2500 = vsel %vm1223, %v2498, %v2499
        %v2501 = vrot.slane %v2499, 4
        %v2502 = vrot.slane %v1991, 5
        %v2503 = vsel %vm1223, %v2501, %v2502
        %v2504 = vrot.slane %v2392, 5
        %v2505 = vrot.slane %v2504, 4
        %v2506 = vrot.slane %v1969, 5
        %v2507 = vsel %vm1223, %v2505, %v2506
        %v2508 = vrot.slane %v2506, 4
        %v2509 = vrot.slane %v1992, 5
        %v2510 = vsel %vm1223, %v2508, %v2509
        %v2511 = vrot.slane %v2393, 5
        %v2512 = vrot.slane %v2511, 4
        %v2513 = vrot.slane %v1971, 5
        %v2514 = vsel %vm1223, %v2512, %v2513
        %v2515 = vrot.slane %v2513, 4
        %v2516 = vrot.slane %v1993, 5
        %v2517 = vsel %vm1223, %v2515, %v2516
        %v2518 = vrot.slane %v2394, 5
        %v2519 = vrot.slane %v2518, 4
        %v2520 = vrot.slane %v1973, 5
        %v2521 = vsel %vm1223, %v2519, %v2520
        %v2522 = vrot.slane %v2520, 4
        %v2523 = vrot.slane %v1994, 5
        %v2524 = vsel %vm1223, %v2522, %v2523
        %v2525 = vrot.slane %v2395, 5
        %v2526 = vrot.slane %v2525, 4
        %v2527 = vrot.slane %v1975, 5
        %v2528 = vsel %vm1223, %v2526, %v2527
        %v2529 = vrot.slane %v2527, 4
        %v2530 = vrot.slane %v1995, 5
        %v2531 = vsel %vm1223, %v2529, %v2530
        %v2532 = vrot.slane %v2396, 5
        %v2533 = vrot.slane %v2532, 4
        %v2534 = vrot.slane %v1977, 5
        %v2535 = vsel %vm1223, %v2533, %v2534
        %v2536 = vrot.slane %v2534, 4
        %v2537 = vrot.slane %v1996, 5
        %v2538 = vsel %vm1223, %v2536, %v2537
        %v2539 = vrot.slane %v2397, 5
        %v2540 = vrot.slane %v2539, 4
        %v2541 = vrot.slane %v1979, 5
        %v2542 = vsel %vm1223, %v2540, %v2541
        %v2543 = vrot.slane %v2541, 4
        %v2544 = vrot.slane %v1997, 5
        %v2545 = vsel %vm1223, %v2543, %v2544
        %v2546 = vrot.slane %v2398, 5
        %v2547 = vrot.slane %v2546, 4
        %v2548 = vrot.slane %v1981, 5
        %v2549 = vsel %vm1223, %v2547, %v2548
        %v2550 = vrot.slane %v2548, 4
        %v2551 = vrot.slane %v1998, 5
        %v2552 = vsel %vm1223, %v2550, %v2551
        %v2553 = vrot.slane %v2399, 5
        %v2554 = vrot.slane %v2553, 4
        %v2555 = vrot.slane %v1983, 5
        %v2556 = vsel %vm1223, %v2554, %v2555
        %v2557 = vrot.slane %v2555, 4
        %v2558 = vrot.slane %v1999, 5
        %v2559 = vsel %vm1223, %v2557, %v2558
        %v2576 = vunpack.c.l.b16 %v722
        %v2577 = vunpack.c.l.b16 %v723
        %v2578 = vunpack.c.l.b16 %v724
        %v2579 = vunpack.c.l.b16 %v725
        %v2580 = vunpack.c.l.b16 %v726
        %v2581 = vunpack.c.l.b16 %v727
        %v2582 = vunpack.c.l.b16 %v728
        %v2583 = vunpack.c.l.b16 %v729
        %v2584 = vunpack.c.l.b16 %v730
        %v2585 = vunpack.c.l.b16 %v731
        %v2586 = vunpack.c.l.b16 %v732
        %v2587 = vunpack.c.l.b16 %v733
        %v2588 = vunpack.c.l.b16 %v734
        %v2589 = vunpack.c.l.b16 %v735
        %v2590 = vunpack.c.l.b16 %v736
        %v2591 = vunpack.c.l.b16 %v737
        %v2592 = vunpack.c.l.b16 %v738
        %v2593 = vunpack.c.l.b16 %v739
        %v2594 = vunpack.c.l.b16 %v740
        %v2595 = vunpack.c.l.b16 %v741
        %v2596 = vunpack.c.l.b16 %v742
        %v2597 = vunpack.c.l.b16 %v743
        %v2598 = vunpack.c.l.b16 %v744
        %v2599 = vunpack.c.l.b16 %v745
        %v2600 = vunpack.c.l.b16 %v746
        %v2601 = vunpack.c.l.b16 %v747
        %v2602 = vunpack.c.l.b16 %v748
        %v2603 = vunpack.c.l.b16 %v749
        %v2604 = vunpack.c.l.b16 %v750
        %v2605 = vunpack.c.l.b16 %v751
        %v2606 = vunpack.c.l.b16 %v752
        %v2607 = vunpack.c.l.b16 %v753
        %v2608 = vpack.c.b16 %v2577, %v2576
        %v2609 = vpack.c.b16 %v2579, %v2578
        %v2610 = vpack.c.b16 %v2581, %v2580
        %v2611 = vpack.c.b16 %v2583, %v2582
        %v2612 = vpack.c.b16 %v2585, %v2584
        %v2613 = vpack.c.b16 %v2587, %v2586
        %v2614 = vpack.c.b16 %v2589, %v2588
        %v2615 = vpack.c.b16 %v2591, %v2590
        %v2616 = vpack.c.b16 %v2593, %v2592
        %v2617 = vpack.c.b16 %v2595, %v2594
        %v2618 = vpack.c.b16 %v2597, %v2596
        %v2619 = vpack.c.b16 %v2599, %v2598
        %v2620 = vpack.c.b16 %v2601, %v2600
        %v2621 = vpack.c.b16 %v2603, %v2602
        %v2622 = vpack.c.b16 %v2605, %v2604
        %v2623 = vpack.c.b16 %v2607, %v2606
        %v2624 = vunpack.c.l.b16 %v786
        %v2625 = vunpack.c.l.b16 %v796
        %v2626 = vunpack.c.l.b16 %v810
        %v2627 = vunpack.c.l.b16 %v820
        %v2628 = vunpack.c.l.b16 %v834
        %v2629 = vunpack.c.l.b16 %v844
        %v2630 = vunpack.c.l.b16 %v858
        %v2631 = vunpack.c.l.b16 %v868
        %v2632 = vunpack.c.l.b16 %v882
        %v2633 = vunpack.c.l.b16 %v892
        %v2634 = vunpack.c.l.b16 %v906
        %v2635 = vunpack.c.l.b16 %v916
        %v2636 = vunpack.c.l.b16 %v930
        %v2637 = vunpack.c.l.b16 %v940
        %v2638 = vunpack.c.l.b16 %v954
        %v2639 = vunpack.c.l.b16 %v964
        %v2640 = vunpack.c.l.b16 %v978
        %v2641 = vunpack.c.l.b16 %v988
        %v2642 = vunpack.c.l.b16 %v1002
        %v2643 = vunpack.c.l.b16 %v1012
        %v2644 = vunpack.c.l.b16 %v1026
        %v2645 = vunpack.c.l.b16 %v1036
        %v2646 = vunpack.c.l.b16 %v1050
        %v2647 = vunpack.c.l.b16 %v1060
        %v2648 = vunpack.c.l.b16 %v1074
        %v2649 = vunpack.c.l.b16 %v1084
        %v2650 = vunpack.c.l.b16 %v1098
        %v2651 = vunpack.c.l.b16 %v1108
        %v2652 = vunpack.c.l.b16 %v1122
        %v2653 = vunpack.c.l.b16 %v1132
        %v2654 = vunpack.c.l.b16 %v1146
        %v2655 = vunpack.c.l.b16 %v1156
        %v2656 = vpack.c.b16 %v2625, %v2624
        %v2657 = vpack.c.b16 %v2627, %v2626
        %v2658 = vpack.c.b16 %v2629, %v2628
        %v2659 = vpack.c.b16 %v2631, %v2630
        %v2660 = vpack.c.b16 %v2633, %v2632
        %v2661 = vpack.c.b16 %v2635, %v2634
        %v2662 = vpack.c.b16 %v2637, %v2636
        %v2663 = vpack.c.b16 %v2639, %v2638
        %v2664 = vpack.c.b16 %v2641, %v2640
        %v2665 = vpack.c.b16 %v2643, %v2642
        %v2666 = vpack.c.b16 %v2645, %v2644
        %v2667 = vpack.c.b16 %v2647, %v2646
        %v2668 = vpack.c.b16 %v2649, %v2648
        %v2669 = vpack.c.b16 %v2651, %v2650
        %v2670 = vpack.c.b16 %v2653, %v2652
        %v2671 = vpack.c.b16 %v2655, %v2654
        %2672 = vrot.lane.b32.xlu0 %v2656, 4
        %v2673 = vpop.permute.xlu0 %2672
        %2674 = vrot.lane.b32.xlu0 %v2657, 4
        %v2675 = vpop.permute.xlu0 %2674
        %2676 = vrot.lane.b32.xlu0 %v2658, 4
        %v2677 = vpop.permute.xlu0 %2676
        %2678 = vrot.lane.b32.xlu0 %v2659, 4
        %v2679 = vpop.permute.xlu0 %2678
        %2680 = vrot.lane.b32.xlu0 %v2660, 4
        %v2681 = vpop.permute.xlu0 %2680
        %2682 = vrot.lane.b32.xlu0 %v2661, 4
        %v2683 = vpop.permute.xlu0 %2682
        %2684 = vrot.lane.b32.xlu0 %v2662, 4
        %v2685 = vpop.permute.xlu0 %2684
        %2686 = vrot.lane.b32.xlu0 %v2663, 4
        %v2687 = vpop.permute.xlu0 %2686
        %2688 = vrot.lane.b32.xlu0 %v2664, 4
        %v2689 = vpop.permute.xlu0 %2688
        %2690 = vrot.lane.b32.xlu0 %v2665, 4
        %v2691 = vpop.permute.xlu0 %2690
        %2692 = vrot.lane.b32.xlu0 %v2666, 4
        %v2693 = vpop.permute.xlu0 %2692
        %2694 = vrot.lane.b32.xlu0 %v2667, 4
        %v2695 = vpop.permute.xlu0 %2694
        %2696 = vrot.lane.b32.xlu0 %v2668, 4
        %v2697 = vpop.permute.xlu0 %2696
        %2698 = vrot.lane.b32.xlu0 %v2669, 4
        %v2699 = vpop.permute.xlu0 %2698
        %2700 = vrot.lane.b32.xlu0 %v2670, 4
        %v2701 = vpop.permute.xlu0 %2700
        %2702 = vrot.lane.b32.xlu0 %v2671, 4
        %v2703 = vpop.permute.xlu0 %2702
        %v2704 = vunpack.c.l.b16 %v1227
        %v2705 = vunpack.c.l.b16 %v1230
        %v2706 = vunpack.c.l.b16 %v1234
        %v2707 = vunpack.c.l.b16 %v1237
        %v2708 = vunpack.c.l.b16 %v1241
        %v2709 = vunpack.c.l.b16 %v1244
        %v2710 = vunpack.c.l.b16 %v1248
        %v2711 = vunpack.c.l.b16 %v1251
        %v2712 = vunpack.c.l.b16 %v1255
        %v2713 = vunpack.c.l.b16 %v1258
        %v2714 = vunpack.c.l.b16 %v1262
        %v2715 = vunpack.c.l.b16 %v1265
        %v2716 = vunpack.c.l.b16 %v1269
        %v2717 = vunpack.c.l.b16 %v1272
        %v2718 = vunpack.c.l.b16 %v1276
        %v2719 = vunpack.c.l.b16 %v1279
        %v2720 = vunpack.c.l.b16 %v1283
        %v2721 = vunpack.c.l.b16 %v1286
        %v2722 = vunpack.c.l.b16 %v1290
        %v2723 = vunpack.c.l.b16 %v1293
        %v2724 = vunpack.c.l.b16 %v1297
        %v2725 = vunpack.c.l.b16 %v1300
        %v2726 = vunpack.c.l.b16 %v1304
        %v2727 = vunpack.c.l.b16 %v1307
        %v2728 = vunpack.c.l.b16 %v1311
        %v2729 = vunpack.c.l.b16 %v1314
        %v2730 = vunpack.c.l.b16 %v1318
        %v2731 = vunpack.c.l.b16 %v1321
        %v2732 = vunpack.c.l.b16 %v1325
        %v2733 = vunpack.c.l.b16 %v1328
        %v2734 = vunpack.c.l.b16 %v1332
        %v2735 = vunpack.c.l.b16 %v1335
        %v2736 = vpack.c.b16 %v2705, %v2704
        %v2737 = vpack.c.b16 %v2707, %v2706
        %v2738 = vpack.c.b16 %v2709, %v2708
        %v2739 = vpack.c.b16 %v2711, %v2710
        %v2740 = vpack.c.b16 %v2713, %v2712
        %v2741 = vpack.c.b16 %v2715, %v2714
        %v2742 = vpack.c.b16 %v2717, %v2716
        %v2743 = vpack.c.b16 %v2719, %v2718
        %v2744 = vpack.c.b16 %v2721, %v2720
        %v2745 = vpack.c.b16 %v2723, %v2722
        %v2746 = vpack.c.b16 %v2725, %v2724
        %v2747 = vpack.c.b16 %v2727, %v2726
        %v2748 = vpack.c.b16 %v2729, %v2728
        %v2749 = vpack.c.b16 %v2731, %v2730
        %v2750 = vpack.c.b16 %v2733, %v2732
        %v2751 = vpack.c.b16 %v2735, %v2734
        %2752 = vrot.lane.b32.xlu0 %v2736, 8
        %v2753 = vpop.permute.xlu0 %2752
        %2754 = vrot.lane.b32.xlu0 %v2737, 8
        %v2755 = vpop.permute.xlu0 %2754
        %2756 = vrot.lane.b32.xlu0 %v2738, 8
        %v2757 = vpop.permute.xlu0 %2756
        %2758 = vrot.lane.b32.xlu0 %v2739, 8
        %v2759 = vpop.permute.xlu0 %2758
        %2760 = vrot.lane.b32.xlu0 %v2740, 8
        %v2761 = vpop.permute.xlu0 %2760
        %2762 = vrot.lane.b32.xlu0 %v2741, 8
        %v2763 = vpop.permute.xlu0 %2762
        %2764 = vrot.lane.b32.xlu0 %v2742, 8
        %v2765 = vpop.permute.xlu0 %2764
        %2766 = vrot.lane.b32.xlu0 %v2743, 8
        %v2767 = vpop.permute.xlu0 %2766
        %2768 = vrot.lane.b32.xlu0 %v2744, 8
        %v2769 = vpop.permute.xlu0 %2768
        %2770 = vrot.lane.b32.xlu0 %v2745, 8
        %v2771 = vpop.permute.xlu0 %2770
        %2772 = vrot.lane.b32.xlu0 %v2746, 8
        %v2773 = vpop.permute.xlu0 %2772
        %2774 = vrot.lane.b32.xlu0 %v2747, 8
        %v2775 = vpop.permute.xlu0 %2774
        %2776 = vrot.lane.b32.xlu0 %v2748, 8
        %v2777 = vpop.permute.xlu0 %2776
        %2778 = vrot.lane.b32.xlu0 %v2749, 8
        %v2779 = vpop.permute.xlu0 %2778
        %2780 = vrot.lane.b32.xlu0 %v2750, 8
        %v2781 = vpop.permute.xlu0 %2780
        %2782 = vrot.lane.b32.xlu0 %v2751, 8
        %v2783 = vpop.permute.xlu0 %2782
        %v2800 = vunpack.c.l.b16 %v1340
        %v2801 = vunpack.c.l.b16 %v1341
        %v2802 = vunpack.c.l.b16 %v1342
        %v2803 = vunpack.c.l.b16 %v1343
        %v2804 = vunpack.c.l.b16 %v1344
        %v2805 = vunpack.c.l.b16 %v1345
        %v2806 = vunpack.c.l.b16 %v1346
        %v2807 = vunpack.c.l.b16 %v1347
        %v2808 = vunpack.c.l.b16 %v1348
        %v2809 = vunpack.c.l.b16 %v1349
        %v2810 = vunpack.c.l.b16 %v1350
        %v2811 = vunpack.c.l.b16 %v1351
        %v2812 = vunpack.c.l.b16 %v1352
        %v2813 = vunpack.c.l.b16 %v1353
        %v2814 = vunpack.c.l.b16 %v1354
        %v2815 = vunpack.c.l.b16 %v1355
        %v2816 = vunpack.c.l.b16 %v1356
        %v2817 = vunpack.c.l.b16 %v1357
        %v2818 = vunpack.c.l.b16 %v1358
        %v2819 = vunpack.c.l.b16 %v1359
        %v2820 = vunpack.c.l.b16 %v1360
        %v2821 = vunpack.c.l.b16 %v1361
        %v2822 = vunpack.c.l.b16 %v1362
        %v2823 = vunpack.c.l.b16 %v1363
        %v2824 = vunpack.c.l.b16 %v1364
        %v2825 = vunpack.c.l.b16 %v1365
        %v2826 = vunpack.c.l.b16 %v1366
        %v2827 = vunpack.c.l.b16 %v1367
        %v2828 = vunpack.c.l.b16 %v1368
        %v2829 = vunpack.c.l.b16 %v1369
        %v2830 = vunpack.c.l.b16 %v1370
        %v2831 = vunpack.c.l.b16 %v1371
        %v2832 = vpack.c.b16 %v2801, %v2800
        %v2833 = vpack.c.b16 %v2803, %v2802
        %v2834 = vpack.c.b16 %v2805, %v2804
        %v2835 = vpack.c.b16 %v2807, %v2806
        %v2836 = vpack.c.b16 %v2809, %v2808
        %v2837 = vpack.c.b16 %v2811, %v2810
        %v2838 = vpack.c.b16 %v2813, %v2812
        %v2839 = vpack.c.b16 %v2815, %v2814
        %v2840 = vpack.c.b16 %v2817, %v2816
        %v2841 = vpack.c.b16 %v2819, %v2818
        %v2842 = vpack.c.b16 %v2821, %v2820
        %v2843 = vpack.c.b16 %v2823, %v2822
        %v2844 = vpack.c.b16 %v2825, %v2824
        %v2845 = vpack.c.b16 %v2827, %v2826
        %v2846 = vpack.c.b16 %v2829, %v2828
        %v2847 = vpack.c.b16 %v2831, %v2830
        %2848 = vrot.lane.b32.xlu0 %v2832, 12
        %v2849 = vpop.permute.xlu0 %2848
        %2850 = vrot.lane.b32.xlu0 %v2833, 12
        %v2851 = vpop.permute.xlu0 %2850
        %2852 = vrot.lane.b32.xlu0 %v2834, 12
        %v2853 = vpop.permute.xlu0 %2852
        %2854 = vrot.lane.b32.xlu0 %v2835, 12
        %v2855 = vpop.permute.xlu0 %2854
        %2856 = vrot.lane.b32.xlu0 %v2836, 12
        %v2857 = vpop.permute.xlu0 %2856
        %2858 = vrot.lane.b32.xlu0 %v2837, 12
        %v2859 = vpop.permute.xlu0 %2858
        %2860 = vrot.lane.b32.xlu0 %v2838, 12
        %v2861 = vpop.permute.xlu0 %2860
        %2862 = vrot.lane.b32.xlu0 %v2839, 12
        %v2863 = vpop.permute.xlu0 %2862
        %2864 = vrot.lane.b32.xlu0 %v2840, 12
        %v2865 = vpop.permute.xlu0 %2864
        %2866 = vrot.lane.b32.xlu0 %v2841, 12
        %v2867 = vpop.permute.xlu0 %2866
        %2868 = vrot.lane.b32.xlu0 %v2842, 12
        %v2869 = vpop.permute.xlu0 %2868
        %2870 = vrot.lane.b32.xlu0 %v2843, 12
        %v2871 = vpop.permute.xlu0 %2870
        %2872 = vrot.lane.b32.xlu0 %v2844, 12
        %v2873 = vpop.permute.xlu0 %2872
        %2874 = vrot.lane.b32.xlu0 %v2845, 12
        %v2875 = vpop.permute.xlu0 %2874
        %2876 = vrot.lane.b32.xlu0 %v2846, 12
        %v2877 = vpop.permute.xlu0 %2876
        %2878 = vrot.lane.b32.xlu0 %v2847, 12
        %v2879 = vpop.permute.xlu0 %2878
        %v2880 = vunpack.c.l.b16 %v1401
        %v2881 = vunpack.c.l.b16 %v1411
        %v2882 = vunpack.c.l.b16 %v1425
        %v2883 = vunpack.c.l.b16 %v1435
        %v2884 = vunpack.c.l.b16 %v1449
        %v2885 = vunpack.c.l.b16 %v1459
        %v2886 = vunpack.c.l.b16 %v1473
        %v2887 = vunpack.c.l.b16 %v1483
        %v2888 = vunpack.c.l.b16 %v1497
        %v2889 = vunpack.c.l.b16 %v1507
        %v2890 = vunpack.c.l.b16 %v1521
        %v2891 = vunpack.c.l.b16 %v1531
        %v2892 = vunpack.c.l.b16 %v1545
        %v2893 = vunpack.c.l.b16 %v1555
        %v2894 = vunpack.c.l.b16 %v1569
        %v2895 = vunpack.c.l.b16 %v1579
        %v2896 = vunpack.c.l.b16 %v1593
        %v2897 = vunpack.c.l.b16 %v1603
        %v2898 = vunpack.c.l.b16 %v1617
        %v2899 = vunpack.c.l.b16 %v1627
        %v2900 = vunpack.c.l.b16 %v1641
        %v2901 = vunpack.c.l.b16 %v1651
        %v2902 = vunpack.c.l.b16 %v1665
        %v2903 = vunpack.c.l.b16 %v1675
        %v2904 = vunpack.c.l.b16 %v1689
        %v2905 = vunpack.c.l.b16 %v1699
        %v2906 = vunpack.c.l.b16 %v1713
        %v2907 = vunpack.c.l.b16 %v1723
        %v2908 = vunpack.c.l.b16 %v1737
        %v2909 = vunpack.c.l.b16 %v1747
        %v2910 = vunpack.c.l.b16 %v1761
        %v2911 = vunpack.c.l.b16 %v1771
        %v2912 = vpack.c.b16 %v2881, %v2880
        %v2913 = vpack.c.b16 %v2883, %v2882
        %v2914 = vpack.c.b16 %v2885, %v2884
        %v2915 = vpack.c.b16 %v2887, %v2886
        %v2916 = vpack.c.b16 %v2889, %v2888
        %v2917 = vpack.c.b16 %v2891, %v2890
        %v2918 = vpack.c.b16 %v2893, %v2892
        %v2919 = vpack.c.b16 %v2895, %v2894
        %v2920 = vpack.c.b16 %v2897, %v2896
        %v2921 = vpack.c.b16 %v2899, %v2898
        %v2922 = vpack.c.b16 %v2901, %v2900
        %v2923 = vpack.c.b16 %v2903, %v2902
        %v2924 = vpack.c.b16 %v2905, %v2904
        %v2925 = vpack.c.b16 %v2907, %v2906
        %v2926 = vpack.c.b16 %v2909, %v2908
        %v2927 = vpack.c.b16 %v2911, %v2910
        %2928 = vrot.lane.b32.xlu0 %v2912, 16
        %v2929 = vpop.permute.xlu0 %2928
        %2930 = vrot.lane.b32.xlu0 %v2913, 16
        %v2931 = vpop.permute.xlu0 %2930
        %2932 = vrot.lane.b32.xlu0 %v2914, 16
        %v2933 = vpop.permute.xlu0 %2932
        %2934 = vrot.lane.b32.xlu0 %v2915, 16
        %v2935 = vpop.permute.xlu0 %2934
        %2936 = vrot.lane.b32.xlu0 %v2916, 16
        %v2937 = vpop.permute.xlu0 %2936
        %2938 = vrot.lane.b32.xlu0 %v2917, 16
        %v2939 = vpop.permute.xlu0 %2938
        %2940 = vrot.lane.b32.xlu0 %v2918, 16
        %v2941 = vpop.permute.xlu0 %2940
        %2942 = vrot.lane.b32.xlu0 %v2919, 16
        %v2943 = vpop.permute.xlu0 %2942
        %2944 = vrot.lane.b32.xlu0 %v2920, 16
        %v2945 = vpop.permute.xlu0 %2944
        %2946 = vrot.lane.b32.xlu0 %v2921, 16
        %v2947 = vpop.permute.xlu0 %2946
        %2948 = vrot.lane.b32.xlu0 %v2922, 16
        %v2949 = vpop.permute.xlu0 %2948
        %2950 = vrot.lane.b32.xlu0 %v2923, 16
        %v2951 = vpop.permute.xlu0 %2950
        %2952 = vrot.lane.b32.xlu0 %v2924, 16
        %v2953 = vpop.permute.xlu0 %2952
        %2954 = vrot.lane.b32.xlu0 %v2925, 16
        %v2955 = vpop.permute.xlu0 %2954
        %2956 = vrot.lane.b32.xlu0 %v2926, 16
        %v2957 = vpop.permute.xlu0 %2956
        %2958 = vrot.lane.b32.xlu0 %v2927, 16
        %v2959 = vpop.permute.xlu0 %2958
        %v2960 = vunpack.c.l.b16 %v1839
        %v2961 = vunpack.c.l.b16 %v1842
        %v2962 = vunpack.c.l.b16 %v1846
        %v2963 = vunpack.c.l.b16 %v1849
        %v2964 = vunpack.c.l.b16 %v1853
        %v2965 = vunpack.c.l.b16 %v1856
        %v2966 = vunpack.c.l.b16 %v1860
        %v2967 = vunpack.c.l.b16 %v1863
        %v2968 = vunpack.c.l.b16 %v1867
        %v2969 = vunpack.c.l.b16 %v1870
        %v2970 = vunpack.c.l.b16 %v1874
        %v2971 = vunpack.c.l.b16 %v1877
        %v2972 = vunpack.c.l.b16 %v1881
        %v2973 = vunpack.c.l.b16 %v1884
        %v2974 = vunpack.c.l.b16 %v1888
        %v2975 = vunpack.c.l.b16 %v1891
        %v2976 = vunpack.c.l.b16 %v1895
        %v2977 = vunpack.c.l.b16 %v1898
        %v2978 = vunpack.c.l.b16 %v1902
        %v2979 = vunpack.c.l.b16 %v1905
        %v2980 = vunpack.c.l.b16 %v1909
        %v2981 = vunpack.c.l.b16 %v1912
        %v2982 = vunpack.c.l.b16 %v1916
        %v2983 = vunpack.c.l.b16 %v1919
        %v2984 = vunpack.c.l.b16 %v1923
        %v2985 = vunpack.c.l.b16 %v1926
        %v2986 = vunpack.c.l.b16 %v1930
        %v2987 = vunpack.c.l.b16 %v1933
        %v2988 = vunpack.c.l.b16 %v1937
        %v2989 = vunpack.c.l.b16 %v1940
        %v2990 = vunpack.c.l.b16 %v1944
        %v2991 = vunpack.c.l.b16 %v1947
        %v2992 = vpack.c.b16 %v2961, %v2960
        %v2993 = vpack.c.b16 %v2963, %v2962
        %v2994 = vpack.c.b16 %v2965, %v2964
        %v2995 = vpack.c.b16 %v2967, %v2966
        %v2996 = vpack.c.b16 %v2969, %v2968
        %v2997 = vpack.c.b16 %v2971, %v2970
        %v2998 = vpack.c.b16 %v2973, %v2972
        %v2999 = vpack.c.b16 %v2975, %v2974
        %v3000 = vpack.c.b16 %v2977, %v2976
        %v3001 = vpack.c.b16 %v2979, %v2978
        %v3002 = vpack.c.b16 %v2981, %v2980
        %v3003 = vpack.c.b16 %v2983, %v2982
        %v3004 = vpack.c.b16 %v2985, %v2984
        %v3005 = vpack.c.b16 %v2987, %v2986
        %v3006 = vpack.c.b16 %v2989, %v2988
        %v3007 = vpack.c.b16 %v2991, %v2990
        %3008 = vrot.lane.b32.xlu0 %v2992, 20
        %v3009 = vpop.permute.xlu0 %3008
        %3010 = vrot.lane.b32.xlu0 %v2993, 20
        %v3011 = vpop.permute.xlu0 %3010
        %3012 = vrot.lane.b32.xlu0 %v2994, 20
        %v3013 = vpop.permute.xlu0 %3012
        %3014 = vrot.lane.b32.xlu0 %v2995, 20
        %v3015 = vpop.permute.xlu0 %3014
        %3016 = vrot.lane.b32.xlu0 %v2996, 20
        %v3017 = vpop.permute.xlu0 %3016
        %3018 = vrot.lane.b32.xlu0 %v2997, 20
        %v3019 = vpop.permute.xlu0 %3018
        %3020 = vrot.lane.b32.xlu0 %v2998, 20
        %v3021 = vpop.permute.xlu0 %3020
        %3022 = vrot.lane.b32.xlu0 %v2999, 20
        %v3023 = vpop.permute.xlu0 %3022
        %3024 = vrot.lane.b32.xlu0 %v3000, 20
        %v3025 = vpop.permute.xlu0 %3024
        %3026 = vrot.lane.b32.xlu0 %v3001, 20
        %v3027 = vpop.permute.xlu0 %3026
        %3028 = vrot.lane.b32.xlu0 %v3002, 20
        %v3029 = vpop.permute.xlu0 %3028
        %3030 = vrot.lane.b32.xlu0 %v3003, 20
        %v3031 = vpop.permute.xlu0 %3030
        %3032 = vrot.lane.b32.xlu0 %v3004, 20
        %v3033 = vpop.permute.xlu0 %3032
        %3034 = vrot.lane.b32.xlu0 %v3005, 20
        %v3035 = vpop.permute.xlu0 %3034
        %3036 = vrot.lane.b32.xlu0 %v3006, 20
        %v3037 = vpop.permute.xlu0 %3036
        %3038 = vrot.lane.b32.xlu0 %v3007, 20
        %v3039 = vpop.permute.xlu0 %3038
        %v3056 = vunpack.c.l.b16 %v1952
        %v3057 = vunpack.c.l.b16 %v1953
        %v3058 = vunpack.c.l.b16 %v1954
        %v3059 = vunpack.c.l.b16 %v1955
        %v3060 = vunpack.c.l.b16 %v1956
        %v3061 = vunpack.c.l.b16 %v1957
        %v3062 = vunpack.c.l.b16 %v1958
        %v3063 = vunpack.c.l.b16 %v1959
        %v3064 = vunpack.c.l.b16 %v1960
        %v3065 = vunpack.c.l.b16 %v1961
        %v3066 = vunpack.c.l.b16 %v1962
        %v3067 = vunpack.c.l.b16 %v1963
        %v3068 = vunpack.c.l.b16 %v1964
        %v3069 = vunpack.c.l.b16 %v1965
        %v3070 = vunpack.c.l.b16 %v1966
        %v3071 = vunpack.c.l.b16 %v1967
        %v3072 = vunpack.c.l.b16 %v1968
        %v3073 = vunpack.c.l.b16 %v1969
        %v3074 = vunpack.c.l.b16 %v1970
        %v3075 = vunpack.c.l.b16 %v1971
        %v3076 = vunpack.c.l.b16 %v1972
        %v3077 = vunpack.c.l.b16 %v1973
        %v3078 = vunpack.c.l.b16 %v1974
        %v3079 = vunpack.c.l.b16 %v1975
        %v3080 = vunpack.c.l.b16 %v1976
        %v3081 = vunpack.c.l.b16 %v1977
        %v3082 = vunpack.c.l.b16 %v1978
        %v3083 = vunpack.c.l.b16 %v1979
        %v3084 = vunpack.c.l.b16 %v1980
        %v3085 = vunpack.c.l.b16 %v1981
        %v3086 = vunpack.c.l.b16 %v1982
        %v3087 = vunpack.c.l.b16 %v1983
        %v3088 = vpack.c.b16 %v3057, %v3056
        %v3089 = vpack.c.b16 %v3059, %v3058
        %v3090 = vpack.c.b16 %v3061, %v3060
        %v3091 = vpack.c.b16 %v3063, %v3062
        %v3092 = vpack.c.b16 %v3065, %v3064
        %v3093 = vpack.c.b16 %v3067, %v3066
        %v3094 = vpack.c.b16 %v3069, %v3068
        %v3095 = vpack.c.b16 %v3071, %v3070
        %v3096 = vpack.c.b16 %v3073, %v3072
        %v3097 = vpack.c.b16 %v3075, %v3074
        %v3098 = vpack.c.b16 %v3077, %v3076
        %v3099 = vpack.c.b16 %v3079, %v3078
        %v3100 = vpack.c.b16 %v3081, %v3080
        %v3101 = vpack.c.b16 %v3083, %v3082
        %v3102 = vpack.c.b16 %v3085, %v3084
        %v3103 = vpack.c.b16 %v3087, %v3086
        %3104 = vrot.lane.b32.xlu0 %v3088, 24
        %v3105 = vpop.permute.xlu0 %3104
        %3106 = vrot.lane.b32.xlu0 %v3089, 24
        %v3107 = vpop.permute.xlu0 %3106
        %3108 = vrot.lane.b32.xlu0 %v3090, 24
        %v3109 = vpop.permute.xlu0 %3108
        %3110 = vrot.lane.b32.xlu0 %v3091, 24
        %v3111 = vpop.permute.xlu0 %3110
        %3112 = vrot.lane.b32.xlu0 %v3092, 24
        %v3113 = vpop.permute.xlu0 %3112
        %3114 = vrot.lane.b32.xlu0 %v3093, 24
        %v3115 = vpop.permute.xlu0 %3114
        %3116 = vrot.lane.b32.xlu0 %v3094, 24
        %v3117 = vpop.permute.xlu0 %3116
        %3118 = vrot.lane.b32.xlu0 %v3095, 24
        %v3119 = vpop.permute.xlu0 %3118
        %3120 = vrot.lane.b32.xlu0 %v3096, 24
        %v3121 = vpop.permute.xlu0 %3120
        %3122 = vrot.lane.b32.xlu0 %v3097, 24
        %v3123 = vpop.permute.xlu0 %3122
        %3124 = vrot.lane.b32.xlu0 %v3098, 24
        %v3125 = vpop.permute.xlu0 %3124
        %3126 = vrot.lane.b32.xlu0 %v3099, 24
        %v3127 = vpop.permute.xlu0 %3126
        %3128 = vrot.lane.b32.xlu0 %v3100, 24
        %v3129 = vpop.permute.xlu0 %3128
        %3130 = vrot.lane.b32.xlu0 %v3101, 24
        %v3131 = vpop.permute.xlu0 %3130
        %3132 = vrot.lane.b32.xlu0 %v3102, 24
        %v3133 = vpop.permute.xlu0 %3132
        %3134 = vrot.lane.b32.xlu0 %v3103, 24
        %v3135 = vpop.permute.xlu0 %3134
        %v3136 = vunpack.c.l.b16 %v2013
        %v3137 = vunpack.c.l.b16 %v2023
        %v3138 = vunpack.c.l.b16 %v2037
        %v3139 = vunpack.c.l.b16 %v2047
        %v3140 = vunpack.c.l.b16 %v2061
        %v3141 = vunpack.c.l.b16 %v2071
        %v3142 = vunpack.c.l.b16 %v2085
        %v3143 = vunpack.c.l.b16 %v2095
        %v3144 = vunpack.c.l.b16 %v2109
        %v3145 = vunpack.c.l.b16 %v2119
        %v3146 = vunpack.c.l.b16 %v2133
        %v3147 = vunpack.c.l.b16 %v2143
        %v3148 = vunpack.c.l.b16 %v2157
        %v3149 = vunpack.c.l.b16 %v2167
        %v3150 = vunpack.c.l.b16 %v2181
        %v3151 = vunpack.c.l.b16 %v2191
        %v3152 = vunpack.c.l.b16 %v2205
        %v3153 = vunpack.c.l.b16 %v2215
        %v3154 = vunpack.c.l.b16 %v2229
        %v3155 = vunpack.c.l.b16 %v2239
        %v3156 = vunpack.c.l.b16 %v2253
        %v3157 = vunpack.c.l.b16 %v2263
        %v3158 = vunpack.c.l.b16 %v2277
        %v3159 = vunpack.c.l.b16 %v2287
        %v3160 = vunpack.c.l.b16 %v2301
        %v3161 = vunpack.c.l.b16 %v2311
        %v3162 = vunpack.c.l.b16 %v2325
        %v3163 = vunpack.c.l.b16 %v2335
        %v3164 = vunpack.c.l.b16 %v2349
        %v3165 = vunpack.c.l.b16 %v2359
        %v3166 = vunpack.c.l.b16 %v2373
        %v3167 = vunpack.c.l.b16 %v2383
        %v3168 = vpack.c.b16 %v3137, %v3136
        %v3169 = vpack.c.b16 %v3139, %v3138
        %v3170 = vpack.c.b16 %v3141, %v3140
        %v3171 = vpack.c.b16 %v3143, %v3142
        %v3172 = vpack.c.b16 %v3145, %v3144
        %v3173 = vpack.c.b16 %v3147, %v3146
        %v3174 = vpack.c.b16 %v3149, %v3148
        %v3175 = vpack.c.b16 %v3151, %v3150
        %v3176 = vpack.c.b16 %v3153, %v3152
        %v3177 = vpack.c.b16 %v3155, %v3154
        %v3178 = vpack.c.b16 %v3157, %v3156
        %v3179 = vpack.c.b16 %v3159, %v3158
        %v3180 = vpack.c.b16 %v3161, %v3160
        %v3181 = vpack.c.b16 %v3163, %v3162
        %v3182 = vpack.c.b16 %v3165, %v3164
        %v3183 = vpack.c.b16 %v3167, %v3166
        %3184 = vrot.lane.b32.xlu0 %v3168, 28
        %v3185 = vpop.permute.xlu0 %3184
        %3186 = vrot.lane.b32.xlu0 %v3169, 28
        %v3187 = vpop.permute.xlu0 %3186
        %3188 = vrot.lane.b32.xlu0 %v3170, 28
        %v3189 = vpop.permute.xlu0 %3188
        %3190 = vrot.lane.b32.xlu0 %v3171, 28
        %v3191 = vpop.permute.xlu0 %3190
        %3192 = vrot.lane.b32.xlu0 %v3172, 28
        %v3193 = vpop.permute.xlu0 %3192
        %3194 = vrot.lane.b32.xlu0 %v3173, 28
        %v3195 = vpop.permute.xlu0 %3194
        %3196 = vrot.lane.b32.xlu0 %v3174, 28
        %v3197 = vpop.permute.xlu0 %3196
        %3198 = vrot.lane.b32.xlu0 %v3175, 28
        %v3199 = vpop.permute.xlu0 %3198
        %3200 = vrot.lane.b32.xlu0 %v3176, 28
        %v3201 = vpop.permute.xlu0 %3200
        %3202 = vrot.lane.b32.xlu0 %v3177, 28
        %v3203 = vpop.permute.xlu0 %3202
        %3204 = vrot.lane.b32.xlu0 %v3178, 28
        %v3205 = vpop.permute.xlu0 %3204
        %3206 = vrot.lane.b32.xlu0 %v3179, 28
        %v3207 = vpop.permute.xlu0 %3206
        %3208 = vrot.lane.b32.xlu0 %v3180, 28
        %v3209 = vpop.permute.xlu0 %3208
        %3210 = vrot.lane.b32.xlu0 %v3181, 28
        %v3211 = vpop.permute.xlu0 %3210
        %3212 = vrot.lane.b32.xlu0 %v3182, 28
        %v3213 = vpop.permute.xlu0 %3212
        %3214 = vrot.lane.b32.xlu0 %v3183, 28
        %v3215 = vpop.permute.xlu0 %3214
        %v3216 = vunpack.c.l.b16 %v2451
        %v3217 = vunpack.c.l.b16 %v2454
        %v3218 = vunpack.c.l.b16 %v2458
        %v3219 = vunpack.c.l.b16 %v2461
        %v3220 = vunpack.c.l.b16 %v2465
        %v3221 = vunpack.c.l.b16 %v2468
        %v3222 = vunpack.c.l.b16 %v2472
        %v3223 = vunpack.c.l.b16 %v2475
        %v3224 = vunpack.c.l.b16 %v2479
        %v3225 = vunpack.c.l.b16 %v2482
        %v3226 = vunpack.c.l.b16 %v2486
        %v3227 = vunpack.c.l.b16 %v2489
        %v3228 = vunpack.c.l.b16 %v2493
        %v3229 = vunpack.c.l.b16 %v2496
        %v3230 = vunpack.c.l.b16 %v2500
        %v3231 = vunpack.c.l.b16 %v2503
        %v3232 = vunpack.c.l.b16 %v2507
        %v3233 = vunpack.c.l.b16 %v2510
        %v3234 = vunpack.c.l.b16 %v2514
        %v3235 = vunpack.c.l.b16 %v2517
        %v3236 = vunpack.c.l.b16 %v2521
        %v3237 = vunpack.c.l.b16 %v2524
        %v3238 = vunpack.c.l.b16 %v2528
        %v3239 = vunpack.c.l.b16 %v2531
        %v3240 = vunpack.c.l.b16 %v2535
        %v3241 = vunpack.c.l.b16 %v2538
        %v3242 = vunpack.c.l.b16 %v2542
        %v3243 = vunpack.c.l.b16 %v2545
        %v3244 = vunpack.c.l.b16 %v2549
        %v3245 = vunpack.c.l.b16 %v2552
        %v3246 = vunpack.c.l.b16 %v2556
        %v3247 = vunpack.c.l.b16 %v2559
        %v3248 = vpack.c.b16 %v3217, %v3216
        %v3249 = vpack.c.b16 %v3219, %v3218
        %v3250 = vpack.c.b16 %v3221, %v3220
        %v3251 = vpack.c.b16 %v3223, %v3222
        %v3252 = vpack.c.b16 %v3225, %v3224
        %v3253 = vpack.c.b16 %v3227, %v3226
        %v3254 = vpack.c.b16 %v3229, %v3228
        %v3255 = vpack.c.b16 %v3231, %v3230
        %v3256 = vpack.c.b16 %v3233, %v3232
        %v3257 = vpack.c.b16 %v3235, %v3234
        %v3258 = vpack.c.b16 %v3237, %v3236
        %v3259 = vpack.c.b16 %v3239, %v3238
        %v3260 = vpack.c.b16 %v3241, %v3240
        %v3261 = vpack.c.b16 %v3243, %v3242
        %v3262 = vpack.c.b16 %v3245, %v3244
        %v3263 = vpack.c.b16 %v3247, %v3246
        %3264 = vrot.lane.b32.xlu0 %v3248, 32
        %v3265 = vpop.permute.xlu0 %3264
        %3266 = vrot.lane.b32.xlu0 %v3249, 32
        %v3267 = vpop.permute.xlu0 %3266
        %3268 = vrot.lane.b32.xlu0 %v3250, 32
        %v3269 = vpop.permute.xlu0 %3268
        %3270 = vrot.lane.b32.xlu0 %v3251, 32
        %v3271 = vpop.permute.xlu0 %3270
        %3272 = vrot.lane.b32.xlu0 %v3252, 32
        %v3273 = vpop.permute.xlu0 %3272
        %3274 = vrot.lane.b32.xlu0 %v3253, 32
        %v3275 = vpop.permute.xlu0 %3274
        %3276 = vrot.lane.b32.xlu0 %v3254, 32
        %v3277 = vpop.permute.xlu0 %3276
        %3278 = vrot.lane.b32.xlu0 %v3255, 32
        %v3279 = vpop.permute.xlu0 %3278
        %3280 = vrot.lane.b32.xlu0 %v3256, 32
        %v3281 = vpop.permute.xlu0 %3280
        %3282 = vrot.lane.b32.xlu0 %v3257, 32
        %v3283 = vpop.permute.xlu0 %3282
        %3284 = vrot.lane.b32.xlu0 %v3258, 32
        %v3285 = vpop.permute.xlu0 %3284
        %3286 = vrot.lane.b32.xlu0 %v3259, 32
        %v3287 = vpop.permute.xlu0 %3286
        %3288 = vrot.lane.b32.xlu0 %v3260, 32
        %v3289 = vpop.permute.xlu0 %3288
        %3290 = vrot.lane.b32.xlu0 %v3261, 32
        %v3291 = vpop.permute.xlu0 %3290
        %3292 = vrot.lane.b32.xlu0 %v3262, 32
        %v3293 = vpop.permute.xlu0 %3292
        %3294 = vrot.lane.b32.xlu0 %v3263, 32
        %v3295 = vpop.permute.xlu0 %3294
        %vm3296 = vcmask 31744
        %v3299 = vsel %vm3296, %v2608, %v2673
        %v3302 = vsel %vm3296, %v2609, %v2675
        %v3305 = vsel %vm3296, %v2610, %v2677
        %v3308 = vsel %vm3296, %v2611, %v2679
        %v3311 = vsel %vm3296, %v2612, %v2681
        %v3314 = vsel %vm3296, %v2613, %v2683
        %v3317 = vsel %vm3296, %v2614, %v2685
        %v3320 = vsel %vm3296, %v2615, %v2687
        %v3323 = vsel %vm3296, %v2616, %v2689
        %v3326 = vsel %vm3296, %v2617, %v2691
        %v3329 = vsel %vm3296, %v2618, %v2693
        %v3332 = vsel %vm3296, %v2619, %v2695
        %v3335 = vsel %vm3296, %v2620, %v2697
        %v3338 = vsel %vm3296, %v2621, %v2699
        %v3341 = vsel %vm3296, %v2622, %v2701
        %v3344 = vsel %vm3296, %v2623, %v2703
        %vm3345 = vcmask 64512
        %v3347 = vsel %vm3345, %v3299, %v2753
        %v3349 = vsel %vm3345, %v3302, %v2755
        %v3351 = vsel %vm3345, %v3305, %v2757
        %v3353 = vsel %vm3345, %v3308, %v2759
        %v3355 = vsel %vm3345, %v3311, %v2761
        %v3357 = vsel %vm3345, %v3314, %v2763
        %v3359 = vsel %vm3345, %v3317, %v2765
        %v3361 = vsel %vm3345, %v3320, %v2767
        %v3363 = vsel %vm3345, %v3323, %v2769
        %v3365 = vsel %vm3345, %v3326, %v2771
        %v3367 = vsel %vm3345, %v3329, %v2773
        %v3369 = vsel %vm3345, %v3332, %v2775
        %v3371 = vsel %vm3345, %v3335, %v2777
        %v3373 = vsel %vm3345, %v3338, %v2779
        %v3375 = vsel %vm3345, %v3341, %v2781
        %v3377 = vsel %vm3345, %v3344, %v2783
        %vm3378 = vcmask 97280
        %v3380 = vsel %vm3378, %v3347, %v2849
        %v3382 = vsel %vm3378, %v3349, %v2851
        %v3384 = vsel %vm3378, %v3351, %v2853
        %v3386 = vsel %vm3378, %v3353, %v2855
        %v3388 = vsel %vm3378, %v3355, %v2857
        %v3390 = vsel %vm3378, %v3357, %v2859
        %v3392 = vsel %vm3378, %v3359, %v2861
        %v3394 = vsel %vm3378, %v3361, %v2863
        %v3396 = vsel %vm3378, %v3363, %v2865
        %v3398 = vsel %vm3378, %v3365, %v2867
        %v3400 = vsel %vm3378, %v3367, %v2869
        %v3402 = vsel %vm3378, %v3369, %v2871
        %v3404 = vsel %vm3378, %v3371, %v2873
        %v3406 = vsel %vm3378, %v3373, %v2875
        %v3408 = vsel %vm3378, %v3375, %v2877
        %v3410 = vsel %vm3378, %v3377, %v2879
        %vm3411 = vcmask 130048
        %v3413 = vsel %vm3411, %v3380, %v2929
        %v3415 = vsel %vm3411, %v3382, %v2931
        %v3417 = vsel %vm3411, %v3384, %v2933
        %v3419 = vsel %vm3411, %v3386, %v2935
        %v3421 = vsel %vm3411, %v3388, %v2937
        %v3423 = vsel %vm3411, %v3390, %v2939
        %v3425 = vsel %vm3411, %v3392, %v2941
        %v3427 = vsel %vm3411, %v3394, %v2943
        %v3429 = vsel %vm3411, %v3396, %v2945
        %v3431 = vsel %vm3411, %v3398, %v2947
        %v3433 = vsel %vm3411, %v3400, %v2949
        %v3435 = vsel %vm3411, %v3402, %v2951
        %v3437 = vsel %vm3411, %v3404, %v2953
        %v3439 = vsel %vm3411, %v3406, %v2955
        %v3441 = vsel %vm3411, %v3408, %v2957
        %v3443 = vsel %vm3411, %v3410, %v2959
        %vm3444 = vcmask 162816
        %v3446 = vsel %vm3444, %v3413, %v3009
        %v3448 = vsel %vm3444, %v3415, %v3011
        %v3450 = vsel %vm3444, %v3417, %v3013
        %v3452 = vsel %vm3444, %v3419, %v3015
        %v3454 = vsel %vm3444, %v3421, %v3017
        %v3456 = vsel %vm3444, %v3423, %v3019
        %v3458 = vsel %vm3444, %v3425, %v3021
        %v3460 = vsel %vm3444, %v3427, %v3023
        %v3462 = vsel %vm3444, %v3429, %v3025
        %v3464 = vsel %vm3444, %v3431, %v3027
        %v3466 = vsel %vm3444, %v3433, %v3029
        %v3468 = vsel %vm3444, %v3435, %v3031
        %v3470 = vsel %vm3444, %v3437, %v3033
        %v3472 = vsel %vm3444, %v3439, %v3035
        %v3474 = vsel %vm3444, %v3441, %v3037
        %v3476 = vsel %vm3444, %v3443, %v3039
        %vm3477 = vcmask 195584
        %v3479 = vsel %vm3477, %v3446, %v3105
        %v3481 = vsel %vm3477, %v3448, %v3107
        %v3483 = vsel %vm3477, %v3450, %v3109
        %v3485 = vsel %vm3477, %v3452, %v3111
        %v3487 = vsel %vm3477, %v3454, %v3113
        %v3489 = vsel %vm3477, %v3456, %v3115
        %v3491 = vsel %vm3477, %v3458, %v3117
        %v3493 = vsel %vm3477, %v3460, %v3119
        %v3495 = vsel %vm3477, %v3462, %v3121
        %v3497 = vsel %vm3477, %v3464, %v3123
        %v3499 = vsel %vm3477, %v3466, %v3125
        %v3501 = vsel %vm3477, %v3468, %v3127
        %v3503 = vsel %vm3477, %v3470, %v3129
        %v3505 = vsel %vm3477, %v3472, %v3131
        %v3507 = vsel %vm3477, %v3474, %v3133
        %v3509 = vsel %vm3477, %v3476, %v3135
        %vm3510 = vcmask 228352
        %v3512 = vsel %vm3510, %v3479, %v3185
        %v3514 = vsel %vm3510, %v3481, %v3187
        %v3516 = vsel %vm3510, %v3483, %v3189
        %v3518 = vsel %vm3510, %v3485, %v3191
        %v3520 = vsel %vm3510, %v3487, %v3193
        %v3522 = vsel %vm3510, %v3489, %v3195
        %v3524 = vsel %vm3510, %v3491, %v3197
        %v3526 = vsel %vm3510, %v3493, %v3199
        %v3528 = vsel %vm3510, %v3495, %v3201
        %v3530 = vsel %vm3510, %v3497, %v3203
        %v3532 = vsel %vm3510, %v3499, %v3205
        %v3534 = vsel %vm3510, %v3501, %v3207
        %v3536 = vsel %vm3510, %v3503, %v3209
        %v3538 = vsel %vm3510, %v3505, %v3211
        %v3540 = vsel %vm3510, %v3507, %v3213
        %v3542 = vsel %vm3510, %v3509, %v3215
        %vm3543 = vcmask 261120
        %v3545 = vsel %vm3543, %v3512, %v3265
        %v3547 = vsel %vm3543, %v3514, %v3267
        %v3549 = vsel %vm3543, %v3516, %v3269
        %v3551 = vsel %vm3543, %v3518, %v3271
        %v3553 = vsel %vm3543, %v3520, %v3273
        %v3555 = vsel %vm3543, %v3522, %v3275
        %v3557 = vsel %vm3543, %v3524, %v3277
        %v3559 = vsel %vm3543, %v3526, %v3279
        %v3561 = vsel %vm3543, %v3528, %v3281
        %v3563 = vsel %vm3543, %v3530, %v3283
        %v3565 = vsel %vm3543, %v3532, %v3285
        %v3567 = vsel %vm3543, %v3534, %v3287
        %v3569 = vsel %vm3543, %v3536, %v3289
        %v3571 = vsel %vm3543, %v3538, %v3291
        %v3573 = vsel %vm3543, %v3540, %v3293
        %v3575 = vsel %vm3543, %v3542, %v3295
        %v3576 = vld [vmem:[%s1] sm:$0xf]
        %v3577 = vld [vmem:[%s1 + $0x4] sm:$0xf]
        %v3578 = vld [vmem:[%s1 + $0x8] sm:$0xf]
        %v3579 = vld [vmem:[%s1 + $0xc] sm:$0xf]
        %v3580 = vld [vmem:[%s1 + $0x10] sm:$0x3]
        %v3581 = vld [vmem:[%s2] sm:$0x1]
        %v3583 = vperm.slane %v3581, 0
        %v3590 = vunpack.c.l.b16 %v3576
        %v3591 = vunpack.c.l.b16 %v3577
        %v3592 = vunpack.c.l.b16 %v3578
        %v3593 = vunpack.c.l.b16 %v3579
        %v3594 = vunpack.c.l.b16 %v3580
        %v3595 = vpack.c.b16 %v3591, %v3590
        %v3596 = vpack.c.b16 %v3593, %v3592
        %v3597 = vpack.c.b16 %v3594, %v3594
        %vm3600 = vcmask 293888
        %v3601 = vsel %vm3600, %v3545, 0
        %v3603 = vsel %vm3600, %v3547, 0
        %v3605 = vsel %vm3600, %v3549, 0
        %v3607 = vsel %vm3600, %v3551, 0
        %v3609 = vsel %vm3600, %v3553, 0
        %v3611 = vsel %vm3600, %v3555, 0
        %v3613 = vsel %vm3600, %v3557, 0
        %v3615 = vsel %vm3600, %v3559, 0
        %v3617 = vsel %vm3600, %v3561, 0
        %v3619 = vsel %vm3600, %v3563, 0
        %v3621 = vsel %vm3600, %v3565, 0
        %v3623 = vsel %vm3600, %v3567, 0
        %v3625 = vsel %vm3600, %v3569, 0
        %v3627 = vsel %vm3600, %v3571, 0
        %v3629 = vsel %vm3600, %v3573, 0
        %v3631 = vsel %vm3600, %v3575, 0
        %vm3633 = vcmask 1041408
        %v3635 = vsel %vm3633, %v3597, 0
        %3637 = vmatpush.bf16.msra.mxu0 0
        %3638 = vmatpush.bf16.msra.mxu0 0
        %3639 = vmatpush.bf16.msra.mxu0 0
        %3640 = vmatpush.bf16.msra.mxu0 0
        %3641 = vmatpush.bf16.msra.mxu0 0
        %3642 = vmatpush.bf16.msra.mxu0 %v3635
        %3643 = vmatpush.bf16.msra.mxu0 %v3596
        %3644 = vmatpush.bf16.msra.mxu0 %v3595
        %3645 = vmatmul.bf16.gmra.mxu0 %v3601
        %v3646 = vpop.f32.mrf.mxu0
        %v3647 = vadd.f32 %v3583, %v3646
        %v3648 = vpop.f32.mrf.mxu0
        %v3649 = vadd.f32 %v3583, %v3648
        %3650 = vmatmul.bf16.gmra.mxu0 %v3603
        %v3651 = vpop.f32.mrf.mxu0
        %v3652 = vadd.f32 %v3583, %v3651
        %v3653 = vpop.f32.mrf.mxu0
        %v3654 = vadd.f32 %v3583, %v3653
        %3655 = vmatmul.bf16.gmra.mxu0 %v3605
        %v3656 = vpop.f32.mrf.mxu0
        %v3657 = vadd.f32 %v3583, %v3656
        %v3658 = vpop.f32.mrf.mxu0
        %v3659 = vadd.f32 %v3583, %v3658
        %3660 = vmatmul.bf16.gmra.mxu0 %v3607
        %v3661 = vpop.f32.mrf.mxu0
        %v3662 = vadd.f32 %v3583, %v3661
        %v3663 = vpop.f32.mrf.mxu0
        %v3664 = vadd.f32 %v3583, %v3663
        %3665 = vmatmul.bf16.gmra.mxu0 %v3609
        %v3666 = vpop.f32.mrf.mxu0
        %v3667 = vadd.f32 %v3583, %v3666
        %v3668 = vpop.f32.mrf.mxu0
        %v3669 = vadd.f32 %v3583, %v3668
        %3670 = vmatmul.bf16.gmra.mxu0 %v3611
        %v3671 = vpop.f32.mrf.mxu0
        %v3672 = vadd.f32 %v3583, %v3671
        %v3673 = vpop.f32.mrf.mxu0
        %v3674 = vadd.f32 %v3583, %v3673
        %3675 = vmatmul.bf16.gmra.mxu0 %v3613
        %v3676 = vpop.f32.mrf.mxu0
        %v3677 = vadd.f32 %v3583, %v3676
        %v3678 = vpop.f32.mrf.mxu0
        %v3679 = vadd.f32 %v3583, %v3678
        %3680 = vmatmul.bf16.gmra.mxu0 %v3615
        %v3681 = vpop.f32.mrf.mxu0
        %v3682 = vadd.f32 %v3583, %v3681
        %v3683 = vpop.f32.mrf.mxu0
        %v3684 = vadd.f32 %v3583, %v3683
        %3685 = vmatmul.bf16.gmra.mxu0 %v3617
        %v3686 = vpop.f32.mrf.mxu0
        %v3687 = vadd.f32 %v3583, %v3686
        %v3688 = vpop.f32.mrf.mxu0
        %v3689 = vadd.f32 %v3583, %v3688
        %3690 = vmatmul.bf16.gmra.mxu0 %v3619
        %v3691 = vpop.f32.mrf.mxu0
        %v3692 = vadd.f32 %v3583, %v3691
        %v3693 = vpop.f32.mrf.mxu0
        %v3694 = vadd.f32 %v3583, %v3693
        %3695 = vmatmul.bf16.gmra.mxu0 %v3621
        %v3696 = vpop.f32.mrf.mxu0
        %v3697 = vadd.f32 %v3583, %v3696
        %v3698 = vpop.f32.mrf.mxu0
        %v3699 = vadd.f32 %v3583, %v3698
        %3700 = vmatmul.bf16.gmra.mxu0 %v3623
        %v3701 = vpop.f32.mrf.mxu0
        %v3702 = vadd.f32 %v3583, %v3701
        %v3703 = vpop.f32.mrf.mxu0
        %v3704 = vadd.f32 %v3583, %v3703
        %3705 = vmatmul.bf16.gmra.mxu0 %v3625
        %v3706 = vpop.f32.mrf.mxu0
        %v3707 = vadd.f32 %v3583, %v3706
        %v3708 = vpop.f32.mrf.mxu0
        %v3709 = vadd.f32 %v3583, %v3708
        %3710 = vmatmul.bf16.gmra.mxu0 %v3627
        %v3711 = vpop.f32.mrf.mxu0
        %v3712 = vadd.f32 %v3583, %v3711
        %v3713 = vpop.f32.mrf.mxu0
        %v3714 = vadd.f32 %v3583, %v3713
        %3715 = vmatmul.bf16.gmra.mxu0 %v3629
        %v3716 = vpop.f32.mrf.mxu0
        %v3717 = vadd.f32 %v3583, %v3716
        %v3718 = vpop.f32.mrf.mxu0
        %v3719 = vadd.f32 %v3583, %v3718
        %3720 = vmatmul.bf16.gmra.mxu0 %v3631
        %v3721 = vpop.f32.mrf.mxu0
        %v3722 = vadd.f32 %v3583, %v3721
        %v3723 = vpop.f32.mrf.mxu0
        %v3724 = vadd.f32 %v3583, %v3723
        %3725 = vdwg.mxu0
        %v3726 = vmax.f32 %v3647, 0.0
        %v3727 = vmax.f32 %v3649, 0.0
        %v3728 = vmax.f32 %v3652, 0.0
        %v3729 = vmax.f32 %v3654, 0.0
        %v3730 = vmax.f32 %v3657, 0.0
        %v3731 = vmax.f32 %v3659, 0.0
        %v3732 = vmax.f32 %v3662, 0.0
        %v3733 = vmax.f32 %v3664, 0.0
        %v3734 = vmax.f32 %v3667, 0.0
        %v3735 = vmax.f32 %v3669, 0.0
        %v3736 = vmax.f32 %v3672, 0.0
        %v3737 = vmax.f32 %v3674, 0.0
        %v3738 = vmax.f32 %v3677, 0.0
        %v3739 = vmax.f32 %v3679, 0.0
        %v3740 = vmax.f32 %v3682, 0.0
        %v3741 = vmax.f32 %v3684, 0.0
        %v3742 = vmax.f32 %v3687, 0.0
        %v3743 = vmax.f32 %v3689, 0.0
        %v3744 = vmax.f32 %v3692, 0.0
        %v3745 = vmax.f32 %v3694, 0.0
        %v3746 = vmax.f32 %v3697, 0.0
        %v3747 = vmax.f32 %v3699, 0.0
        %v3748 = vmax.f32 %v3702, 0.0
        %v3749 = vmax.f32 %v3704, 0.0
        %v3750 = vmax.f32 %v3707, 0.0
        %v3751 = vmax.f32 %v3709, 0.0
        %v3752 = vmax.f32 %v3712, 0.0
        %v3753 = vmax.f32 %v3714, 0.0
        %v3754 = vmax.f32 %v3717, 0.0
        %v3755 = vmax.f32 %v3719, 0.0
        %v3756 = vmax.f32 %v3722, 0.0
        %v3757 = vmax.f32 %v3724, 0.0
        %v3758 = vmax.f32 %v3726, %v3728
        %v3759 = vmax.f32 %v3758, %v3730
        %v3760 = vmax.f32 %v3759, %v3732
        %v3761 = vmax.f32 %v3727, %v3729
        %v3762 = vmax.f32 %v3761, %v3731
        %v3763 = vmax.f32 %v3762, %v3733
        %v3764 = vmax.f32 %v3734, %v3736
        %v3765 = vmax.f32 %v3764, %v3738
        %v3766 = vmax.f32 %v3765, %v3740
        %v3767 = vmax.f32 %v3735, %v3737
        %v3768 = vmax.f32 %v3767, %v3739
        %v3769 = vmax.f32 %v3768, %v3741
        %v3770 = vmax.f32 %v3742, %v3744
        %v3771 = vmax.f32 %v3770, %v3746
        %v3772 = vmax.f32 %v3771, %v3748
        %v3773 = vmax.f32 %v3743, %v3745
        %v3774 = vmax.f32 %v3773, %v3747
        %v3775 = vmax.f32 %v3774, %v3749
        %v3776 = vmax.f32 %v3750, %v3752
        %v3777 = vmax.f32 %v3776, %v3754
        %v3778 = vmax.f32 %v3777, %v3756
        %v3779 = vmax.f32 %v3751, %v3753
        %v3780 = vmax.f32 %v3779, %v3755
        %v3781 = vmax.f32 %v3780, %v3757
        %v3790 = vrot.slane %v3760, 4
        %v3791 = vrot.slane %v3763, 4
        %v3792 = vrot.slane %v3766, 4
        %v3793 = vrot.slane %v3769, 4
        %v3794 = vrot.slane %v3772, 4
        %v3795 = vrot.slane %v3775, 4
        %v3796 = vrot.slane %v3778, 4
        %v3797 = vrot.slane %v3781, 4
        %vm3806 = vcmask 1043456
        %v3807 = vsel %vm3806, %v3760, -inf
        %v3808 = vrot.slane %v3807, 4
        %v3809 = vmax.f32 %v3807, %v3808
        %v3810 = vrot.slane %v3809, 2
        %v3811 = vmax.f32 %v3809, %v3810
        %v3812 = vrot.slane %v3811, 1
        %v3813 = vmax.f32 %v3811, %v3812
        %v3814 = vsel %vm3806, %v3790, -inf
        %v3815 = vrot.slane %v3814, 4
        %v3816 = vmax.f32 %v3814, %v3815
        %v3817 = vrot.slane %v3816, 2
        %v3818 = vmax.f32 %v3816, %v3817
        %v3819 = vrot.slane %v3818, 1
        %v3820 = vmax.f32 %v3818, %v3819
        %v3821 = vsel %vm3806, %v3763, -inf
        %v3822 = vrot.slane %v3821, 4
        %v3823 = vmax.f32 %v3821, %v3822
        %v3824 = vrot.slane %v3823, 2
        %v3825 = vmax.f32 %v3823, %v3824
        %v3826 = vrot.slane %v3825, 1
        %v3827 = vmax.f32 %v3825, %v3826
        %v3828 = vsel %vm3806, %v3791, -inf
        %v3829 = vrot.slane %v3828, 4
        %v3830 = vmax.f32 %v3828, %v3829
        %v3831 = vrot.slane %v3830, 2
        %v3832 = vmax.f32 %v3830, %v3831
        %v3833 = vrot.slane %v3832, 1
        %v3834 = vmax.f32 %v3832, %v3833
        %v3835 = vsel %vm3806, %v3766, -inf
        %v3836 = vrot.slane %v3835, 4
        %v3837 = vmax.f32 %v3835, %v3836
        %v3838 = vrot.slane %v3837, 2
        %v3839 = vmax.f32 %v3837, %v3838
        %v3840 = vrot.slane %v3839, 1
        %v3841 = vmax.f32 %v3839, %v3840
        %v3842 = vsel %vm3806, %v3792, -inf
        %v3843 = vrot.slane %v3842, 4
        %v3844 = vmax.f32 %v3842, %v3843
        %v3845 = vrot.slane %v3844, 2
        %v3846 = vmax.f32 %v3844, %v3845
        %v3847 = vrot.slane %v3846, 1
        %v3848 = vmax.f32 %v3846, %v3847
        %v3849 = vsel %vm3806, %v3769, -inf
        %v3850 = vrot.slane %v3849, 4
        %v3851 = vmax.f32 %v3849, %v3850
        %v3852 = vrot.slane %v3851, 2
        %v3853 = vmax.f32 %v3851, %v3852
        %v3854 = vrot.slane %v3853, 1
        %v3855 = vmax.f32 %v3853, %v3854
        %v3856 = vsel %vm3806, %v3793, -inf
        %v3857 = vrot.slane %v3856, 4
        %v3858 = vmax.f32 %v3856, %v3857
        %v3859 = vrot.slane %v3858, 2
        %v3860 = vmax.f32 %v3858, %v3859
        %v3861 = vrot.slane %v3860, 1
        %v3862 = vmax.f32 %v3860, %v3861
        %v3863 = vsel %vm3806, %v3772, -inf
        %v3864 = vrot.slane %v3863, 4
        %v3865 = vmax.f32 %v3863, %v3864
        %v3866 = vrot.slane %v3865, 2
        %v3867 = vmax.f32 %v3865, %v3866
        %v3868 = vrot.slane %v3867, 1
        %v3869 = vmax.f32 %v3867, %v3868
        %v3870 = vsel %vm3806, %v3794, -inf
        %v3871 = vrot.slane %v3870, 4
        %v3872 = vmax.f32 %v3870, %v3871
        %v3873 = vrot.slane %v3872, 2
        %v3874 = vmax.f32 %v3872, %v3873
        %v3875 = vrot.slane %v3874, 1
        %v3876 = vmax.f32 %v3874, %v3875
        %v3877 = vsel %vm3806, %v3775, -inf
        %v3878 = vrot.slane %v3877, 4
        %v3879 = vmax.f32 %v3877, %v3878
        %v3880 = vrot.slane %v3879, 2
        %v3881 = vmax.f32 %v3879, %v3880
        %v3882 = vrot.slane %v3881, 1
        %v3883 = vmax.f32 %v3881, %v3882
        %v3884 = vsel %vm3806, %v3795, -inf
        %v3885 = vrot.slane %v3884, 4
        %v3886 = vmax.f32 %v3884, %v3885
        %v3887 = vrot.slane %v3886, 2
        %v3888 = vmax.f32 %v3886, %v3887
        %v3889 = vrot.slane %v3888, 1
        %v3890 = vmax.f32 %v3888, %v3889
        %v3891 = vsel %vm3806, %v3778, -inf
        %v3892 = vrot.slane %v3891, 4
        %v3893 = vmax.f32 %v3891, %v3892
        %v3894 = vrot.slane %v3893, 2
        %v3895 = vmax.f32 %v3893, %v3894
        %v3896 = vrot.slane %v3895, 1
        %v3897 = vmax.f32 %v3895, %v3896
        %v3898 = vsel %vm3806, %v3796, -inf
        %v3899 = vrot.slane %v3898, 4
        %v3900 = vmax.f32 %v3898, %v3899
        %v3901 = vrot.slane %v3900, 2
        %v3902 = vmax.f32 %v3900, %v3901
        %v3903 = vrot.slane %v3902, 1
        %v3904 = vmax.f32 %v3902, %v3903
        %v3905 = vsel %vm3806, %v3781, -inf
        %v3906 = vrot.slane %v3905, 4
        %v3907 = vmax.f32 %v3905, %v3906
        %v3908 = vrot.slane %v3907, 2
        %v3909 = vmax.f32 %v3907, %v3908
        %v3910 = vrot.slane %v3909, 1
        %v3911 = vmax.f32 %v3909, %v3910
        %v3912 = vsel %vm3806, %v3797, -inf
        %v3913 = vrot.slane %v3912, 4
        %v3914 = vmax.f32 %v3912, %v3913
        %v3915 = vrot.slane %v3914, 2
        %v3916 = vmax.f32 %v3914, %v3915
        %v3917 = vrot.slane %v3916, 1
        %v3918 = vmax.f32 %v3916, %v3917
        %v3919 = vpack.c.bf16 %v3813, %v3813
        %v3920 = vpack.c.bf16 %v3820, %v3820
        %v3921 = vpack.c.bf16 %v3827, %v3827
        %v3922 = vpack.c.bf16 %v3834, %v3834
        %v3923 = vpack.c.bf16 %v3841, %v3841
        %v3924 = vpack.c.bf16 %v3848, %v3848
        %v3925 = vpack.c.bf16 %v3855, %v3855
        %v3926 = vpack.c.bf16 %v3862, %v3862
        %v3927 = vpack.c.bf16 %v3869, %v3869
        %v3928 = vpack.c.bf16 %v3876, %v3876
        %v3929 = vpack.c.bf16 %v3883, %v3883
        %v3930 = vpack.c.bf16 %v3890, %v3890
        %v3931 = vpack.c.bf16 %v3897, %v3897
        %v3932 = vpack.c.bf16 %v3904, %v3904
        %v3933 = vpack.c.bf16 %v3911, %v3911
        %v3934 = vpack.c.bf16 %v3918, %v3918
        %v3951 = vrot.slane %v3919, 2
        %v3952 = vrot.slane %v3920, 2
        %v3953 = vrot.slane %v3921, 2
        %v3954 = vrot.slane %v3922, 2
        %v3955 = vrot.slane %v3923, 2
        %v3956 = vrot.slane %v3924, 2
        %v3957 = vrot.slane %v3925, 2
        %v3958 = vrot.slane %v3926, 2
        %v3959 = vrot.slane %v3927, 2
        %v3960 = vrot.slane %v3928, 2
        %v3961 = vrot.slane %v3929, 2
        %v3962 = vrot.slane %v3930, 2
        %v3963 = vrot.slane %v3931, 2
        %v3964 = vrot.slane %v3932, 2
        %v3965 = vrot.slane %v3933, 2
        %v3966 = vrot.slane %v3934, 2
        %v3969 = vsel %vm3633, %v3919, %v3951
        %v3972 = vsel %vm3633, %v3920, %v3952
        %v3975 = vsel %vm3633, %v3921, %v3953
        %v3978 = vsel %vm3633, %v3922, %v3954
        %v3981 = vsel %vm3633, %v3923, %v3955
        %v3984 = vsel %vm3633, %v3924, %v3956
        %v3987 = vsel %vm3633, %v3925, %v3957
        %v3990 = vsel %vm3633, %v3926, %v3958
        %v3993 = vsel %vm3633, %v3927, %v3959
        %v3996 = vsel %vm3633, %v3928, %v3960
        %v3999 = vsel %vm3633, %v3929, %v3961
        %v4002 = vsel %vm3633, %v3930, %v3962
        %v4005 = vsel %vm3633, %v3931, %v3963
        %v4008 = vsel %vm3633, %v3932, %v3964
        %v4011 = vsel %vm3633, %v3933, %v3965
        %v4014 = vsel %vm3633, %v3934, %v3966
        %4015 = vst [vmem:[#allocation1] ss:$2 sm:$0xff] %v3969
        %v4016 = vld.sshfl [vmem:[#allocation1] sm:$0xff pattern:$0x75643120]
        %s4018 = scalar_lea.vmem [#allocation1], 16
        %4019 = vst [vmem:[%s4018] ss:$2 sm:$0xff] %v3972
        %v4020 = vld.sshfl [vmem:[#allocation1 + $0x10] sm:$0xff pattern:$0x75643120]
        %s4022 = scalar_lea.vmem [#allocation1], 32
        %4023 = vst [vmem:[%s4022] ss:$2 sm:$0xff] %v3975
        %v4024 = vld.sshfl [vmem:[#allocation1 + $0x20] sm:$0xff pattern:$0x75643120]
        %s4026 = scalar_lea.vmem [#allocation1], 48
        %4027 = vst [vmem:[%s4026] ss:$2 sm:$0xff] %v3978
        %v4028 = vld.sshfl [vmem:[#allocation1 + $0x30] sm:$0xff pattern:$0x75643120]
        %4030 = vst [vmem:[#allocation1] ss:$2 sm:$0xff] %v3981
        %v4031 = vld.sshfl [vmem:[#allocation1] sm:$0xff pattern:$0x75643120]
        %4033 = vst [vmem:[%s4018] ss:$2 sm:$0xff] %v3984
        %v4034 = vld.sshfl [vmem:[#allocation1 + $0x10] sm:$0xff pattern:$0x75643120]
        %4036 = vst [vmem:[%s4022] ss:$2 sm:$0xff] %v3987
        %v4037 = vld.sshfl [vmem:[#allocation1 + $0x20] sm:$0xff pattern:$0x75643120]
        %4039 = vst [vmem:[%s4026] ss:$2 sm:$0xff] %v3990
        %v4040 = vld.sshfl [vmem:[#allocation1 + $0x30] sm:$0xff pattern:$0x75643120]
        %4042 = vst [vmem:[#allocation1] ss:$2 sm:$0xff] %v3993
        %v4043 = vld.sshfl [vmem:[#allocation1] sm:$0xff pattern:$0x75643120]
        %4045 = vst [vmem:[%s4018] ss:$2 sm:$0xff] %v3996
        %v4046 = vld.sshfl [vmem:[#allocation1 + $0x10] sm:$0xff pattern:$0x75643120]
        %4048 = vst [vmem:[%s4022] ss:$2 sm:$0xff] %v3999
        %v4049 = vld.sshfl [vmem:[#allocation1 + $0x20] sm:$0xff pattern:$0x75643120]
        %4051 = vst [vmem:[%s4026] ss:$2 sm:$0xff] %v4002
        %v4052 = vld.sshfl [vmem:[#allocation1 + $0x30] sm:$0xff pattern:$0x75643120]
        %4054 = vst [vmem:[#allocation1] ss:$2 sm:$0xff] %v4005
        %v4055 = vld.sshfl [vmem:[#allocation1] sm:$0xff pattern:$0x75643120]
        %4057 = vst [vmem:[%s4018] ss:$2 sm:$0xff] %v4008
        %v4058 = vld.sshfl [vmem:[#allocation1 + $0x10] sm:$0xff pattern:$0x75643120]
        %4060 = vst [vmem:[%s4022] ss:$2 sm:$0xff] %v4011
        %v4061 = vld.sshfl [vmem:[#allocation1 + $0x20] sm:$0xff pattern:$0x75643120]
        %4063 = vst [vmem:[%s4026] ss:$2 sm:$0xff] %v4014
        %v4064 = vld.sshfl [vmem:[#allocation1 + $0x30] sm:$0xff pattern:$0x75643120]
        %v4066 = vunpack.c.l.b16 %v4016
        %v4067 = vunpack.c.l.b16 %v4020
        %v4068 = vunpack.c.l.b16 %v4024
        %v4069 = vunpack.c.l.b16 %v4028
        %v4070 = vunpack.c.l.b16 %v4031
        %v4071 = vunpack.c.l.b16 %v4034
        %v4072 = vunpack.c.l.b16 %v4037
        %v4073 = vunpack.c.l.b16 %v4040
        %v4074 = vunpack.c.l.b16 %v4043
        %v4075 = vunpack.c.l.b16 %v4046
        %v4076 = vunpack.c.l.b16 %v4049
        %v4077 = vunpack.c.l.b16 %v4052
        %v4078 = vunpack.c.l.b16 %v4055
        %v4079 = vunpack.c.l.b16 %v4058
        %v4080 = vunpack.c.l.b16 %v4061
        %v4081 = vunpack.c.l.b16 %v4064
        %v4082 = vrot.slane %v4067, 7
        %vm4083 = vcmask 1041409
        %v4084 = vsel %vm4083, %v4082, %v4066
        %v4085 = vrot.slane %v4068, 6
        %vm4086 = vcmask 1042434
        %v4087 = vsel %vm4086, %v4085, %v4084
        %v4088 = vrot.slane %v4069, 5
        %vm4089 = vcmask 1043459
        %v4090 = vsel %vm4089, %v4088, %v4087
        %v4091 = vrot.slane %v4071, 7
        %v4092 = vsel %vm4083, %v4091, %v4070
        %v4093 = vrot.slane %v4072, 6
        %v4094 = vsel %vm4086, %v4093, %v4092
        %v4095 = vrot.slane %v4073, 5
        %v4096 = vsel %vm4089, %v4095, %v4094
        %v4097 = vrot.slane %v4075, 7
        %v4098 = vsel %vm4083, %v4097, %v4074
        %v4099 = vrot.slane %v4076, 6
        %v4100 = vsel %vm4086, %v4099, %v4098
        %v4101 = vrot.slane %v4077, 5
        %v4102 = vsel %vm4089, %v4101, %v4100
        %v4103 = vrot.slane %v4079, 7
        %v4104 = vsel %vm4083, %v4103, %v4078
        %v4105 = vrot.slane %v4080, 6
        %v4106 = vsel %vm4086, %v4105, %v4104
        %v4107 = vrot.slane %v4081, 5
        %v4108 = vsel %vm4089, %v4107, %v4106
        %v4109 = vpack.c.b16 %v4090, %v4090
        %v4110 = vpack.c.b16 %v4096, %v4096
        %v4111 = vpack.c.b16 %v4102, %v4102
        %v4112 = vpack.c.b16 %v4108, %v4108
        %v4113 = vrot.slane %v4109, 2
        %v4114 = vrot.slane %v4110, 2
        %v4115 = vrot.slane %v4111, 2
        %v4116 = vrot.slane %v4112, 2
        %v4119 = vsel %vm3633, %v4109, %v4113
        %v4122 = vsel %vm3633, %v4110, %v4114
        %v4125 = vsel %vm3633, %v4111, %v4115
        %v4128 = vsel %vm3633, %v4112, %v4116
        %4133 = vst [vmem:[%s177] sm:$0x3] %v4119
        %4134 = vst [vmem:[%s177 + $0x2] sm:$0x3] %v4122
        %4135 = vst [vmem:[%s177 + $0x4] sm:$0x3] %v4125
        %4136 = vst [vmem:[%s177 + $0x6] sm:$0x3] %v4128
        %s4137 = sand.u32 %s107, 1
        %s4138 = scalar_lea.sflag [#allocation4], %s4137
        %s4139 = sand.u32 %s107, 1
        %s4140 = smul.addr %s4139, 8
        %s4141 = scalar_lea.vmem [#allocation3], %s4140
        // Predicated region
        $region37: #{tpu_custom_call.1} parent=31 // pred_check
          %p4142 = pneg %p117
        $region38: #{tpu_custom_call.1} parent=31 // pred_check_branch
          %4144 = sbr.rel (%p4142) target = $region40
        $region39: #{tpu_custom_call.1} parent=31 // pred_region
          %s4145 = smul.u32 4, %s22
          %4147 = vsyncadd %s4138, 0
          %s4148 = smul.addr %s21, 4
          %s4149 = sadd.s32 %s4145, %s4148
          %s4150 = smul.addr %s4149, 2
          %s4151 = scalar_lea.hbm %s3, %s4150
          %s4152 = sshll.u32 %s4141, 4
          %s4153 = int_to_ptr.vmem [resolvable:$true] %s4152
          %s4154 = sshll.u32 %s4151, 4
          %s4155 = int_to_ptr.hbm [resolvable:$true] %s4154
          %4160 = dma.vmem_to_hbm [thread:$0]  %s4153, 128, %s4155, %s4138, 32, 32, 2
        $region40: #{tpu_custom_call.1} parent=31 // pred_fallthru
          _
      $region32: #{tpu_custom_call.1} parent=5 // pred_fallthru
        _
      %p4161 = scmp.le.s32.totalorder 2, %s12
      // Predicated region
      $region41: #{tpu_custom_call.1} parent=5 // pred_check
        %p4162 = pneg %p4161
      $region42: #{tpu_custom_call.1} parent=5 // pred_check_branch
        %4164 = sbr.rel (%p4162) target = $region44
      $region43: #{tpu_custom_call.1} parent=5 // pred_region
        %s4165 = ssub.s32 %s12, 2
        // Predicated region
        $region45: #{tpu_custom_call.1} parent=43 // pred_check
          %p4166 = pneg %p123
        $region46: #{tpu_custom_call.1} parent=43 // pred_check_branch
          %4168 = sbr.rel (%p4166) target = $region48
        $region47: #{tpu_custom_call.1} parent=43 // pred_region
          %s4169 = sand.u32 %s108, 1
          %s4170 = scalar_lea.sflag [#allocation4], %s4169
          %s4171 = sand.u32 %s108, 1
          %s4172 = smul.addr %s4171, 8
          %s4173 = scalar_lea.vmem [#allocation3], %s4172
          %4175 = dma.done %s4170, 128
        $region48: #{tpu_custom_call.1} parent=43 // pred_fallthru
          _
      $region44: #{tpu_custom_call.1} parent=5 // pred_fallthru
        _
    $region6: #{tpu_custom_call.1} parent=1 // loop_footer
      %s16 = sadd.s32 1, %s12
    $region7: #{tpu_custom_call.1} parent=1 // loop_footer_branch
      %11 = sbr.rel target = $region3
    $region8: #{tpu_custom_call.1} parent=1 // loop_exit
      _
    %4176 = vsyncpa [#allocation4], 1
    %s4177 = scalar_lea.sflag [#allocation4], 1
    %4178 = vsyncpa %s4177, 1

</llo_original>
